<compile_context>
chip_gen: v5e
topology: v5e:2x2
jax: 0.10.0
libtpu: 0.0.40
codegen_flags: <defaults>
</compile_context>

<pallas_src>
import numpy as np
import jax
import jax.numpy as jnp
from jax.experimental import pallas as pl
from jax.experimental.pallas import tpu as pltpu


def _make_kernel(has_noise):
    """Kernel factory: one variant with the noise FMA, one without."""

    def kernel(x_re_ref, x_im_ref,
               f_re_ref, f_im_ref, f_s_ref,
               g_re_ref, g_im_ref, g_s_ref,
               bf_re_ref, bf_im_ref, bf_s_ref,
               bg_re_ref, bg_im_ref, bg_s_ref,
               k12_re_ref, k12_im_ref, k1_re_ref, k1_im_ref,
               mod_re_ref, mod_im_ref,
               *rest):
        if has_noise:
            pn_ref, wn_ref, int_ref = rest
        else:
            (int_ref,) = rest

        fr, fi, fs = f_re_ref[...], f_im_ref[...], f_s_ref[...]
        gr, gi, gs = g_re_ref[...], g_im_ref[...], g_s_ref[...]
        bfr, bfi, bfs = bf_re_ref[...], bf_im_ref[...], bf_s_ref[...]
        bgr, bgi, bgs = bg_re_ref[...], bg_im_ref[...], bg_s_ref[...]

        def cgauss_left(cr, ci, cs, xr, xi):
            # (C) @ (X),  C = cr + i*ci, cs = cr + ci.  Gauss 3-mult, f32 accumulate.
            xs = xr + xi
            t1 = jnp.dot(cr, xr, preferred_element_type=jnp.float32)
            t2 = jnp.dot(ci, xi, preferred_element_type=jnp.float32)
            t3 = jnp.dot(cs, xs, preferred_element_type=jnp.float32)
            return t1 - t2, t3 - t1 - t2

        def cgauss_right(xr, xi, cr, ci, cs):
            # (X) @ (C),  C = cr + i*ci (block-diagonal DFT matrix).
            xs = xr + xi
            t1 = jnp.dot(xr, cr, preferred_element_type=jnp.float32)
            t2 = jnp.dot(xi, ci, preferred_element_type=jnp.float32)
            t3 = jnp.dot(xs, cs, preferred_element_type=jnp.float32)
            return t1 - t2, t3 - t1 - t2

        def fconv(xr, xi, kr, ki):
            # fft2 on the lane-packed field:
            #   left DFT  : F @ X_packed           (one (P,P)@(P,L) matmul, per-image)
            #   right DFT : . @ blockdiag(F)       (one (P,L)@(L,L) matmul)
            tr, ti = cgauss_left(fr, fi, fs, xr, xi)
            tr, ti = cgauss_right(tr, ti, bfr, bfi, bfs)
            # Fourier-domain pointwise kernel (1/P^2 ifft normalisation pre-folded)
            zr = tr * kr - ti * ki
            zi = tr * ki + ti * kr
            # ifft2 (unnormalised) = conj(F) @ Z @ blockdiag(conj(F))
            tr, ti = cgauss_left(gr, gi, gs, zr, zi)
            return cgauss_right(tr, ti, bgr, bgi, bgs)

        xr = x_re_ref[...]
        xi = x_im_ref[...]

        # fourier_conv(x, fk) followed by fourier_conv(., fk_sub), fused into one
        # round trip: ifft2(fft2(x) * fk * fk_sub)
        xr, xi = fconv(xr, xi, k12_re_ref[...], k12_im_ref[...])

        # optical_layer (exp(i*phase)) and aperture, fused into one complex modulator
        mr = mod_re_ref[...]
        mi = mod_im_ref[...]
        xr, xi = xr * mr - xi * mi, xr * mi + xi * mr

        # final propagation: fourier_conv(x, fk)
        xr, xi = fconv(xr, xi, k1_re_ref[...], k1_im_ref[...])

        # |.|^2 and (optional) noise model; lane-dense store
        inten = xr * xr + xi * xi
        if has_noise:
            inten = inten * (1.0 + pn_ref[...]) + wn_ref[...]
        int_ref[...] = inten

    return kernel


def _tensorcores_per_device():
    """Generation-aware core count (perf heuristic only; never affects correctness)."""
    try:
        kind = jax.devices()[0].device_kind.lower()
    except Exception:
        return 1
    if "lite" in kind or "v5e" in kind or "v6e" in kind:
        return 1
    if "v7" in kind or "v4" in kind or "v5p" in kind:
        return 2
    return 1


def _choose_tb(B, P, n_cores, max_lanes=512):
    """Batch-tile size for the lane-packed layout.

    Constraints: TB divides B; TB*P <= max_lanes (caps the block-diag DFT matrix
    at (512,512) f32 = 1 MiB per component); TB == B or TB*P a multiple of 128
    (block validity + lane alignment).  On multi-core chips keep >= 2 grid steps
    when possible so both TensorCores get work; on 1-core chips use TB = B.
    """
    def ok(tb):
        lanes = tb * P
        if lanes > max_lanes:
            return False
        if tb != B and lanes % 128 != 0:
            return False
        return True

    candidates = [tb for tb in range(1, B + 1) if B % tb == 0 and ok(tb)]
    if not candidates:
        return B
    if n_cores >= 2 and B >= 2:
        two_step = [tb for tb in candidates if B // tb >= 2]
        if two_step:
            return max(two_step)
    return max(candidates)


def optical_model_forward(signal, noise, params, batch_tile=None):
    """signal: complex64 (B, 1, P, P); noise: None or (prop, white) float32 (B, 1, P, P)."""
    fk = params["fk"]                       # complex64 (1, 1, P, P)
    fk_sub = params.get("fk_sub", None)     # complex64 (1, 1, P, P) or None
    aperture = params.get("aperture", None) # float32  (1, 1, P, P) or None
    phase = params["phase"]                 # float32  (1, 1, P, P)
    mask = params["mask"]                   # float32  (1, NC, P, P)

    B, C, P, _ = signal.shape
    assert C == 1, "optical model signal has a single channel"
    NC = mask.shape[1]
    # TODO(synk): fourier_conv's spatial zero-padding branch (f_kernel larger than
    # the signal) is not implemented; phase/aperture/mask all share plane_size so
    # padding == 0 is the only self-consistent configuration of the module.
    assert fk.shape[-1] == P

    TB = batch_tile or _choose_tb(B, P, _tensorcores_per_device())
    assert B % TB == 0
    n_tiles = B // TB
    L = TB * P

    # ---- batch-constant precomputation, hoisted out of the kernel -------------
    idx = np.arange(P)
    ang = (-2.0 * np.pi / P) * np.outer(idx, idx)
    F_re = np.cos(ang).astype(np.float32)          # DFT matrix (symmetric); symmetry
    F_im = np.sin(ang).astype(np.float32)          # is required by the packed right-DFT
    G_re, G_im = F_re, -F_im                       # conj(F) for the inverse DFT
    eye = np.eye(TB, dtype=np.float32)
    BF_re, BF_im = np.kron(eye, F_re), np.kron(eye, F_im)    # block-diagonal DFT
    BG_re, BG_im = np.kron(eye, G_re), np.kron(eye, G_im)

    f_re, f_im, f_s = map(jnp.asarray, (F_re, F_im, F_re + F_im))
    g_re, g_im, g_s = map(jnp.asarray, (G_re, G_im, G_re + G_im))
    bf_re, bf_im, bf_s = map(jnp.asarray, (BF_re, BF_im, BF_re + BF_im))
    bg_re, bg_im, bg_s = map(jnp.asarray, (BG_re, BG_im, BG_re + BG_im))

    inv_p2 = 1.0 / float(P * P)                    # ifft2 normalisation, folded into kernels
    fk2 = jnp.asarray(fk).reshape(P, P)
    k1 = fk2 * inv_p2
    if fk_sub is not None:
        k12 = fk2 * jnp.asarray(fk_sub).reshape(P, P) * inv_p2   # fused fk * fk_sub
    else:
        k12 = k1

    def lane_tile(a2d):                            # (P,P) -> (P, L), tiled along lanes
        return jnp.tile(a2d.astype(jnp.float32), (1, TB))

    k12_re, k12_im = lane_tile(jnp.real(k12)), lane_tile(jnp.imag(k12))
    k1_re, k1_im = lane_tile(jnp.real(k1)), lane_tile(jnp.imag(k1))

    ph = jnp.asarray(phase, dtype=jnp.float32).reshape(P, P)
    ap = (jnp.asarray(aperture, dtype=jnp.float32).reshape(P, P)
          if aperture is not None else jnp.ones((P, P), jnp.float32))
    mod_re = lane_tile(jnp.cos(ph) * ap)           # aperture * exp(i * phase)
    mod_im = lane_tile(jnp.sin(ph) * ap)

    def pack(a_bpp):                               # (B,P,P) -> (P, B*P), images along lanes
        return a_bpp.transpose(1, 0, 2).reshape(P, B * P)

    x_re = pack(jnp.real(signal).astype(jnp.float32).reshape(B, P, P))
    x_im = pack(jnp.imag(signal).astype(jnp.float32).reshape(B, P, P))

    has_noise = noise is not None
    noise_args = []
    if has_noise:
        pn = pack(jnp.asarray(noise[0], dtype=jnp.float32).reshape(B, P, P))
        wn = pack(jnp.asarray(noise[1], dtype=jnp.float32).reshape(B, P, P))
        noise_args = [pn, wn]

    per_tile = pl.BlockSpec((P, L), lambda t: (0, t))      # packed field / noise / output
    c_small = pl.BlockSpec((P, P), lambda t: (0, 0))       # F, conj(F) (re, im, re+im)
    c_block = pl.BlockSpec((L, L), lambda t: (0, 0))       # block-diagonal DFT matrices
    c_pack = pl.BlockSpec((P, L), lambda t: (0, 0))        # lane-tiled kernels / modulator

    in_specs = ([per_tile, per_tile]
                + [c_small] * 6
                + [c_block] * 6
                + [c_pack] * 6
                + ([per_tile, per_tile] if has_noise else []))

    out_packed = pl.pallas_call(
        _make_kernel(has_noise),
        out_shape=jax.ShapeDtypeStruct((P, B * P), jnp.float32),
        grid_spec=pltpu.PrefetchScalarGridSpec(
            num_scalar_prefetch=0,
            grid=(n_tiles,),
            in_specs=in_specs,
            out_specs=per_tile,
        ),
        compiler_params=pltpu.CompilerParams(
            dimension_semantics=("parallel",),
            vmem_limit_bytes=32 * 1024 * 1024,
        ),
    )(x_re, x_im,
      f_re, f_im, f_s, g_re, g_im, g_s,
      bf_re, bf_im, bf_s, bg_re, bg_im, bg_s,
      k12_re, k12_im, k1_re, k1_im, mod_re, mod_im,
      *noise_args)

    # unpack (P, B*P) -> (B, P, P)
    inten = out_packed.reshape(P, B, P).transpose(1, 0, 2)

    # Detector reduction hoisted out of the kernel (per perf review): one dense
    # contraction over the already-materialised intensity; extra HBM re-read is tiny.
    mask3 = jnp.asarray(mask, dtype=jnp.float32).reshape(NC, P, P)
    det = jnp.einsum('bhw,chw->bc', inten, mask3) * inv_p2

    return inten.reshape(B, 1, P, P), det


def _ref_forward(signal, noise, params):
    """Pure-JAX reference mirroring the PyTorch forward (padding == 0 case)."""
    def fconv(s, k):
        return jnp.fft.ifftn(jnp.fft.fftn(s, axes=(-2, -1)) * k, axes=(-2, -1))

    s = fconv(signal, params["fk"])
    if params.get("fk_sub") is not None:
        s = fconv(s, params["fk_sub"])
    s = s * (jnp.cos(params["phase"]) + 1j * jnp.sin(params["phase"]))
    if params.get("aperture") is not None:
        s = s * params["aperture"]
    s = fconv(s, params["fk"])
    s = jnp.abs(s) ** 2
    if noise is not None:
        s = s * (1.0 + noise[0]) + noise[1]
    det = jnp.mean(s * params["mask"], axis=(2, 3))
    return s, det


if __name__ == "__main__":
    B, P, NC = 8, 32, 8

    key = jax.random.PRNGKey(0)
    kk1, kk2, kk3, kk4, kk5, kk6 = jax.random.split(key, 6)

    # Input complex field and noise
    sig_re = jax.random.normal(kk1, (B, 1, P, P), dtype=jnp.float32)
    sig_im = jax.random.normal(kk2, (B, 1, P, P), dtype=jnp.float32)
    signal = (sig_re + 1j * sig_im).astype(jnp.complex64)
    prop_noise = 0.05 * jax.random.normal(kk3, (B, 1, P, P), dtype=jnp.float32)
    white_noise = 0.01 * jax.random.normal(kk4, (B, 1, P, P), dtype=jnp.float32)
    noise = (prop_noise, white_noise)

    # Deterministic "parameters" / buffers (synthetic; shapes from __init__)
    phase = jax.random.uniform(kk5, (1, 1, P, P), dtype=jnp.float32,
                               minval=0.0, maxval=2.0 * np.pi)
    mask = jax.random.uniform(kk6, (1, NC, P, P), dtype=jnp.float32)

    fy = np.fft.fftfreq(P)
    FY, FX = np.meshgrid(fy, fy, indexing="ij")
    fk_np = np.exp(-1j * np.pi * 50.0 * (FX ** 2 + FY ** 2))       # angular-spectrum-like
    fk_sub_np = np.exp(-1j * np.pi * 20.0 * (FX ** 2 + FY ** 2))
    yy, xx = np.meshgrid(np.arange(P) - P // 2, np.arange(P) - P // 2, indexing="ij")
    aper_np = ((xx ** 2 + yy ** 2) <= (0.4 * P) ** 2).astype(np.float32)

    params = {
        "fk": jnp.asarray(fk_np.astype(np.complex64)).reshape(1, 1, P, P),
        "fk_sub": jnp.asarray(fk_sub_np.astype(np.complex64)).reshape(1, 1, P, P),
        "aperture": jnp.asarray(aper_np).reshape(1, 1, P, P),
        "phase": phase,
        "mask": mask,
    }

    # Noisy path (exercises the full noise FMA branch)
    out_signal, out_det = optical_model_forward(signal, noise, params)
    out_signal = jax.block_until_ready(out_signal)
    out_det = jax.block_until_ready(out_det)

    ref_signal, ref_det = _ref_forward(signal, noise, params)
    np.testing.assert_allclose(np.asarray(out_signal), np.asarray(ref_signal),
                               rtol=2e-2, atol=1e-3)
    np.testing.assert_allclose(np.asarray(out_det), np.asarray(ref_det),
                               rtol=2e-2, atol=1e-4)

    # No-noise fast path (no zero-array DMAs, no noise FMA in the kernel)
    out_signal_nn, out_det_nn = optical_model_forward(signal, None, params)
    out_signal_nn = jax.block_until_ready(out_signal_nn)
    ref_signal_nn, ref_det_nn = _ref_forward(signal, None, params)
    np.testing.assert_allclose(np.asarray(out_signal_nn), np.asarray(ref_signal_nn),
                               rtol=2e-2, atol=1e-3)
    np.testing.assert_allclose(np.asarray(out_det_nn), np.asarray(ref_det_nn),
                               rtol=2e-2, atol=1e-4)

    print("KERNEL_OK")
</pallas_src>

<mosaic_0001>
module attributes {stable_mosaic.version = 11 : i64} {
  func.func @kernel(%arg0: i32, %arg1: memref<32x256xf32, #tpu.memory_space<vmem>>, %arg2: memref<32x256xf32, #tpu.memory_space<vmem>>, %arg3: memref<32x32xf32, #tpu.memory_space<vmem>>, %arg4: memref<32x32xf32, #tpu.memory_space<vmem>>, %arg5: memref<32x32xf32, #tpu.memory_space<vmem>>, %arg6: memref<32x32xf32, #tpu.memory_space<vmem>>, %arg7: memref<32x32xf32, #tpu.memory_space<vmem>>, %arg8: memref<32x32xf32, #tpu.memory_space<vmem>>, %arg9: memref<256x256xf32, #tpu.memory_space<vmem>>, %arg10: memref<256x256xf32, #tpu.memory_space<vmem>>, %arg11: memref<256x256xf32, #tpu.memory_space<vmem>>, %arg12: memref<256x256xf32, #tpu.memory_space<vmem>>, %arg13: memref<256x256xf32, #tpu.memory_space<vmem>>, %arg14: memref<256x256xf32, #tpu.memory_space<vmem>>, %arg15: memref<32x256xf32, #tpu.memory_space<vmem>>, %arg16: memref<32x256xf32, #tpu.memory_space<vmem>>, %arg17: memref<32x256xf32, #tpu.memory_space<vmem>>, %arg18: memref<32x256xf32, #tpu.memory_space<vmem>>, %arg19: memref<32x256xf32, #tpu.memory_space<vmem>>, %arg20: memref<32x256xf32, #tpu.memory_space<vmem>>, %arg21: memref<32x256xf32, #tpu.memory_space<vmem>>, %arg22: memref<32x256xf32, #tpu.memory_space<vmem>>, %arg23: memref<32x256xf32, #tpu.memory_space<vmem>>) attributes {dimension_semantics = [#tpu.dimension_semantics<parallel>], iteration_bounds = array<i64: 1>, scalar_prefetch = 0 : i64, scratch_operands = 0 : i64, tpu.core_type = #tpu.core_type<tc>, window_params = [{transform_indices = @transform_0, window_bounds = array<i64: 32, 256>}, {transform_indices = @transform_1, window_bounds = array<i64: 32, 256>}, {pipeline_mode = #tpu.pipeline_mode<synchronous>, transform_indices = @transform_2, window_bounds = array<i64: 32, 32>}, {pipeline_mode = #tpu.pipeline_mode<synchronous>, transform_indices = @transform_3, window_bounds = array<i64: 32, 32>}, {pipeline_mode = #tpu.pipeline_mode<synchronous>, transform_indices = @transform_4, window_bounds = array<i64: 32, 32>}, {pipeline_mode = #tpu.pipeline_mode<synchronous>, transform_indices = @transform_5, window_bounds = array<i64: 32, 32>}, {pipeline_mode = #tpu.pipeline_mode<synchronous>, transform_indices = @transform_6, window_bounds = array<i64: 32, 32>}, {pipeline_mode = #tpu.pipeline_mode<synchronous>, transform_indices = @transform_7, window_bounds = array<i64: 32, 32>}, {pipeline_mode = #tpu.pipeline_mode<synchronous>, transform_indices = @transform_8, window_bounds = array<i64: 256, 256>}, {pipeline_mode = #tpu.pipeline_mode<synchronous>, transform_indices = @transform_9, window_bounds = array<i64: 256, 256>}, {pipeline_mode = #tpu.pipeline_mode<synchronous>, transform_indices = @transform_10, window_bounds = array<i64: 256, 256>}, {pipeline_mode = #tpu.pipeline_mode<synchronous>, transform_indices = @transform_11, window_bounds = array<i64: 256, 256>}, {pipeline_mode = #tpu.pipeline_mode<synchronous>, transform_indices = @transform_12, window_bounds = array<i64: 256, 256>}, {pipeline_mode = #tpu.pipeline_mode<synchronous>, transform_indices = @transform_13, window_bounds = array<i64: 256, 256>}, {pipeline_mode = #tpu.pipeline_mode<synchronous>, transform_indices = @transform_14, window_bounds = array<i64: 32, 256>}, {pipeline_mode = #tpu.pipeline_mode<synchronous>, transform_indices = @transform_15, window_bounds = array<i64: 32, 256>}, {pipeline_mode = #tpu.pipeline_mode<synchronous>, transform_indices = @transform_16, window_bounds = array<i64: 32, 256>}, {pipeline_mode = #tpu.pipeline_mode<synchronous>, transform_indices = @transform_17, window_bounds = array<i64: 32, 256>}, {pipeline_mode = #tpu.pipeline_mode<synchronous>, transform_indices = @transform_18, window_bounds = array<i64: 32, 256>}, {pipeline_mode = #tpu.pipeline_mode<synchronous>, transform_indices = @transform_19, window_bounds = array<i64: 32, 256>}, {transform_indices = @transform_20, window_bounds = array<i64: 32, 256>}, {transform_indices = @transform_21, window_bounds = array<i64: 32, 256>}, {transform_indices = @transform_22, window_bounds = array<i64: 32, 256>}]} {
    %c0 = arith.constant 0 : index
    %c0_0 = arith.constant 0 : index
    %0 = vector.load %arg3[%c0, %c0_0] : memref<32x32xf32, #tpu.memory_space<vmem>>, vector<32x32xf32>
    %c0_1 = arith.constant 0 : index
    %c0_2 = arith.constant 0 : index
    %1 = vector.load %arg4[%c0_1, %c0_2] : memref<32x32xf32, #tpu.memory_space<vmem>>, vector<32x32xf32>
    %c0_3 = arith.constant 0 : index
    %c0_4 = arith.constant 0 : index
    %2 = vector.load %arg5[%c0_3, %c0_4] : memref<32x32xf32, #tpu.memory_space<vmem>>, vector<32x32xf32>
    %c0_5 = arith.constant 0 : index
    %c0_6 = arith.constant 0 : index
    %3 = vector.load %arg6[%c0_5, %c0_6] : memref<32x32xf32, #tpu.memory_space<vmem>>, vector<32x32xf32>
    %c0_7 = arith.constant 0 : index
    %c0_8 = arith.constant 0 : index
    %4 = vector.load %arg7[%c0_7, %c0_8] : memref<32x32xf32, #tpu.memory_space<vmem>>, vector<32x32xf32>
    %c0_9 = arith.constant 0 : index
    %c0_10 = arith.constant 0 : index
    %5 = vector.load %arg8[%c0_9, %c0_10] : memref<32x32xf32, #tpu.memory_space<vmem>>, vector<32x32xf32>
    %c0_11 = arith.constant 0 : index
    %c0_12 = arith.constant 0 : index
    %6 = vector.load %arg9[%c0_11, %c0_12] : memref<256x256xf32, #tpu.memory_space<vmem>>, vector<256x256xf32>
    %c0_13 = arith.constant 0 : index
    %c0_14 = arith.constant 0 : index
    %7 = vector.load %arg10[%c0_13, %c0_14] : memref<256x256xf32, #tpu.memory_space<vmem>>, vector<256x256xf32>
    %c0_15 = arith.constant 0 : index
    %c0_16 = arith.constant 0 : index
    %8 = vector.load %arg11[%c0_15, %c0_16] : memref<256x256xf32, #tpu.memory_space<vmem>>, vector<256x256xf32>
    %c0_17 = arith.constant 0 : index
    %c0_18 = arith.constant 0 : index
    %9 = vector.load %arg12[%c0_17, %c0_18] : memref<256x256xf32, #tpu.memory_space<vmem>>, vector<256x256xf32>
    %c0_19 = arith.constant 0 : index
    %c0_20 = arith.constant 0 : index
    %10 = vector.load %arg13[%c0_19, %c0_20] : memref<256x256xf32, #tpu.memory_space<vmem>>, vector<256x256xf32>
    %c0_21 = arith.constant 0 : index
    %c0_22 = arith.constant 0 : index
    %11 = vector.load %arg14[%c0_21, %c0_22] : memref<256x256xf32, #tpu.memory_space<vmem>>, vector<256x256xf32>
    %c0_23 = arith.constant 0 : index
    %c0_24 = arith.constant 0 : index
    %12 = vector.load %arg1[%c0_23, %c0_24] : memref<32x256xf32, #tpu.memory_space<vmem>>, vector<32x256xf32>
    %c0_25 = arith.constant 0 : index
    %c0_26 = arith.constant 0 : index
    %13 = vector.load %arg2[%c0_25, %c0_26] : memref<32x256xf32, #tpu.memory_space<vmem>>, vector<32x256xf32>
    %c0_27 = arith.constant 0 : index
    %c0_28 = arith.constant 0 : index
    %14 = vector.load %arg15[%c0_27, %c0_28] : memref<32x256xf32, #tpu.memory_space<vmem>>, vector<32x256xf32>
    %c0_29 = arith.constant 0 : index
    %c0_30 = arith.constant 0 : index
    %15 = vector.load %arg16[%c0_29, %c0_30] : memref<32x256xf32, #tpu.memory_space<vmem>>, vector<32x256xf32>
    %16 = arith.addf %12, %13 : vector<32x256xf32>
    %cst = arith.constant dense<0.000000e+00> : vector<32x256xf32>
    %17 = tpu.matmul %0, %12, %cst {dimension_numbers = #tpu.dot_dimension_numbers<[1], [0], [0], [1], [0, 0, 1, 1], [], []>} : vector<32x32xf32>, vector<32x256xf32>, vector<32x256xf32> -> vector<32x256xf32>
    %cst_31 = arith.constant dense<0.000000e+00> : vector<32x256xf32>
    %18 = tpu.matmul %1, %13, %cst_31 {dimension_numbers = #tpu.dot_dimension_numbers<[1], [0], [0], [1], [0, 0, 1, 1], [], []>} : vector<32x32xf32>, vector<32x256xf32>, vector<32x256xf32> -> vector<32x256xf32>
    %cst_32 = arith.constant dense<0.000000e+00> : vector<32x256xf32>
    %19 = tpu.matmul %2, %16, %cst_32 {dimension_numbers = #tpu.dot_dimension_numbers<[1], [0], [0], [1], [0, 0, 1, 1], [], []>} : vector<32x32xf32>, vector<32x256xf32>, vector<32x256xf32> -> vector<32x256xf32>
    %20 = arith.subf %17, %18 : vector<32x256xf32>
    %21 = arith.subf %19, %17 : vector<32x256xf32>
    %22 = arith.subf %21, %18 : vector<32x256xf32>
    %23 = arith.addf %20, %22 : vector<32x256xf32>
    %cst_33 = arith.constant dense<0.000000e+00> : vector<32x256xf32>
    %24 = tpu.matmul %20, %6, %cst_33 {dimension_numbers = #tpu.dot_dimension_numbers<[1], [0], [0], [1], [0, 0, 1, 1], [], []>} : vector<32x256xf32>, vector<256x256xf32>, vector<32x256xf32> -> vector<32x256xf32>
    %cst_34 = arith.constant dense<0.000000e+00> : vector<32x256xf32>
    %25 = tpu.matmul %22, %7, %cst_34 {dimension_numbers = #tpu.dot_dimension_numbers<[1], [0], [0], [1], [0, 0, 1, 1], [], []>} : vector<32x256xf32>, vector<256x256xf32>, vector<32x256xf32> -> vector<32x256xf32>
    %cst_35 = arith.constant dense<0.000000e+00> : vector<32x256xf32>
    %26 = tpu.matmul %23, %8, %cst_35 {dimension_numbers = #tpu.dot_dimension_numbers<[1], [0], [0], [1], [0, 0, 1, 1], [], []>} : vector<32x256xf32>, vector<256x256xf32>, vector<32x256xf32> -> vector<32x256xf32>
    %27 = arith.subf %24, %25 : vector<32x256xf32>
    %28 = arith.subf %26, %24 : vector<32x256xf32>
    %29 = arith.subf %28, %25 : vector<32x256xf32>
    %30 = arith.mulf %27, %14 : vector<32x256xf32>
    %31 = arith.mulf %29, %15 : vector<32x256xf32>
    %32 = arith.subf %30, %31 : vector<32x256xf32>
    %33 = arith.mulf %27, %15 : vector<32x256xf32>
    %34 = arith.mulf %29, %14 : vector<32x256xf32>
    %35 = arith.addf %33, %34 : vector<32x256xf32>
    %36 = arith.addf %32, %35 : vector<32x256xf32>
    %cst_36 = arith.constant dense<0.000000e+00> : vector<32x256xf32>
    %37 = tpu.matmul %3, %32, %cst_36 {dimension_numbers = #tpu.dot_dimension_numbers<[1], [0], [0], [1], [0, 0, 1, 1], [], []>} : vector<32x32xf32>, vector<32x256xf32>, vector<32x256xf32> -> vector<32x256xf32>
    %cst_37 = arith.constant dense<0.000000e+00> : vector<32x256xf32>
    %38 = tpu.matmul %4, %35, %cst_37 {dimension_numbers = #tpu.dot_dimension_numbers<[1], [0], [0], [1], [0, 0, 1, 1], [], []>} : vector<32x32xf32>, vector<32x256xf32>, vector<32x256xf32> -> vector<32x256xf32>
    %cst_38 = arith.constant dense<0.000000e+00> : vector<32x256xf32>
    %39 = tpu.matmul %5, %36, %cst_38 {dimension_numbers = #tpu.dot_dimension_numbers<[1], [0], [0], [1], [0, 0, 1, 1], [], []>} : vector<32x32xf32>, vector<32x256xf32>, vector<32x256xf32> -> vector<32x256xf32>
    %40 = arith.subf %37, %38 : vector<32x256xf32>
    %41 = arith.subf %39, %37 : vector<32x256xf32>
    %42 = arith.subf %41, %38 : vector<32x256xf32>
    %43 = arith.addf %40, %42 : vector<32x256xf32>
    %cst_39 = arith.constant dense<0.000000e+00> : vector<32x256xf32>
    %44 = tpu.matmul %40, %9, %cst_39 {dimension_numbers = #tpu.dot_dimension_numbers<[1], [0], [0], [1], [0, 0, 1, 1], [], []>} : vector<32x256xf32>, vector<256x256xf32>, vector<32x256xf32> -> vector<32x256xf32>
    %cst_40 = arith.constant dense<0.000000e+00> : vector<32x256xf32>
    %45 = tpu.matmul %42, %10, %cst_40 {dimension_numbers = #tpu.dot_dimension_numbers<[1], [0], [0], [1], [0, 0, 1, 1], [], []>} : vector<32x256xf32>, vector<256x256xf32>, vector<32x256xf32> -> vector<32x256xf32>
    %cst_41 = arith.constant dense<0.000000e+00> : vector<32x256xf32>
    %46 = tpu.matmul %43, %11, %cst_41 {dimension_numbers = #tpu.dot_dimension_numbers<[1], [0], [0], [1], [0, 0, 1, 1], [], []>} : vector<32x256xf32>, vector<256x256xf32>, vector<32x256xf32> -> vector<32x256xf32>
    %47 = arith.subf %44, %45 : vector<32x256xf32>
    %48 = arith.subf %46, %44 : vector<32x256xf32>
    %49 = arith.subf %48, %45 : vector<32x256xf32>
    %c0_42 = arith.constant 0 : index
    %c0_43 = arith.constant 0 : index
    %50 = vector.load %arg19[%c0_42, %c0_43] : memref<32x256xf32, #tpu.memory_space<vmem>>, vector<32x256xf32>
    %c0_44 = arith.constant 0 : index
    %c0_45 = arith.constant 0 : index
    %51 = vector.load %arg20[%c0_44, %c0_45] : memref<32x256xf32, #tpu.memory_space<vmem>>, vector<32x256xf32>
    %52 = arith.mulf %47, %50 : vector<32x256xf32>
    %53 = arith.mulf %49, %51 : vector<32x256xf32>
    %54 = arith.subf %52, %53 : vector<32x256xf32>
    %55 = arith.mulf %47, %51 : vector<32x256xf32>
    %56 = arith.mulf %49, %50 : vector<32x256xf32>
    %57 = arith.addf %55, %56 : vector<32x256xf32>
    %c0_46 = arith.constant 0 : index
    %c0_47 = arith.constant 0 : index
    %58 = vector.load %arg17[%c0_46, %c0_47] : memref<32x256xf32, #tpu.memory_space<vmem>>, vector<32x256xf32>
    %c0_48 = arith.constant 0 : index
    %c0_49 = arith.constant 0 : index
    %59 = vector.load %arg18[%c0_48, %c0_49] : memref<32x256xf32, #tpu.memory_space<vmem>>, vector<32x256xf32>
    %60 = arith.addf %54, %57 : vector<32x256xf32>
    %cst_50 = arith.constant dense<0.000000e+00> : vector<32x256xf32>
    %61 = tpu.matmul %0, %54, %cst_50 {dimension_numbers = #tpu.dot_dimension_numbers<[1], [0], [0], [1], [0, 0, 1, 1], [], []>} : vector<32x32xf32>, vector<32x256xf32>, vector<32x256xf32> -> vector<32x256xf32>
    %cst_51 = arith.constant dense<0.000000e+00> : vector<32x256xf32>
    %62 = tpu.matmul %1, %57, %cst_51 {dimension_numbers = #tpu.dot_dimension_numbers<[1], [0], [0], [1], [0, 0, 1, 1], [], []>} : vector<32x32xf32>, vector<32x256xf32>, vector<32x256xf32> -> vector<32x256xf32>
    %cst_52 = arith.constant dense<0.000000e+00> : vector<32x256xf32>
    %63 = tpu.matmul %2, %60, %cst_52 {dimension_numbers = #tpu.dot_dimension_numbers<[1], [0], [0], [1], [0, 0, 1, 1], [], []>} : vector<32x32xf32>, vector<32x256xf32>, vector<32x256xf32> -> vector<32x256xf32>
    %64 = arith.subf %61, %62 : vector<32x256xf32>
    %65 = arith.subf %63, %61 : vector<32x256xf32>
    %66 = arith.subf %65, %62 : vector<32x256xf32>
    %67 = arith.addf %64, %66 : vector<32x256xf32>
    %cst_53 = arith.constant dense<0.000000e+00> : vector<32x256xf32>
    %68 = tpu.matmul %64, %6, %cst_53 {dimension_numbers = #tpu.dot_dimension_numbers<[1], [0], [0], [1], [0, 0, 1, 1], [], []>} : vector<32x256xf32>, vector<256x256xf32>, vector<32x256xf32> -> vector<32x256xf32>
    %cst_54 = arith.constant dense<0.000000e+00> : vector<32x256xf32>
    %69 = tpu.matmul %66, %7, %cst_54 {dimension_numbers = #tpu.dot_dimension_numbers<[1], [0], [0], [1], [0, 0, 1, 1], [], []>} : vector<32x256xf32>, vector<256x256xf32>, vector<32x256xf32> -> vector<32x256xf32>
    %cst_55 = arith.constant dense<0.000000e+00> : vector<32x256xf32>
    %70 = tpu.matmul %67, %8, %cst_55 {dimension_numbers = #tpu.dot_dimension_numbers<[1], [0], [0], [1], [0, 0, 1, 1], [], []>} : vector<32x256xf32>, vector<256x256xf32>, vector<32x256xf32> -> vector<32x256xf32>
    %71 = arith.subf %68, %69 : vector<32x256xf32>
    %72 = arith.subf %70, %68 : vector<32x256xf32>
    %73 = arith.subf %72, %69 : vector<32x256xf32>
    %74 = arith.mulf %71, %58 : vector<32x256xf32>
    %75 = arith.mulf %73, %59 : vector<32x256xf32>
    %76 = arith.subf %74, %75 : vector<32x256xf32>
    %77 = arith.mulf %71, %59 : vector<32x256xf32>
    %78 = arith.mulf %73, %58 : vector<32x256xf32>
    %79 = arith.addf %77, %78 : vector<32x256xf32>
    %80 = arith.addf %76, %79 : vector<32x256xf32>
    %cst_56 = arith.constant dense<0.000000e+00> : vector<32x256xf32>
    %81 = tpu.matmul %3, %76, %cst_56 {dimension_numbers = #tpu.dot_dimension_numbers<[1], [0], [0], [1], [0, 0, 1, 1], [], []>} : vector<32x32xf32>, vector<32x256xf32>, vector<32x256xf32> -> vector<32x256xf32>
    %cst_57 = arith.constant dense<0.000000e+00> : vector<32x256xf32>
    %82 = tpu.matmul %4, %79, %cst_57 {dimension_numbers = #tpu.dot_dimension_numbers<[1], [0], [0], [1], [0, 0, 1, 1], [], []>} : vector<32x32xf32>, vector<32x256xf32>, vector<32x256xf32> -> vector<32x256xf32>
    %cst_58 = arith.constant dense<0.000000e+00> : vector<32x256xf32>
    %83 = tpu.matmul %5, %80, %cst_58 {dimension_numbers = #tpu.dot_dimension_numbers<[1], [0], [0], [1], [0, 0, 1, 1], [], []>} : vector<32x32xf32>, vector<32x256xf32>, vector<32x256xf32> -> vector<32x256xf32>
    %84 = arith.subf %81, %82 : vector<32x256xf32>
    %85 = arith.subf %83, %81 : vector<32x256xf32>
    %86 = arith.subf %85, %82 : vector<32x256xf32>
    %87 = arith.addf %84, %86 : vector<32x256xf32>
    %cst_59 = arith.constant dense<0.000000e+00> : vector<32x256xf32>
    %88 = tpu.matmul %84, %9, %cst_59 {dimension_numbers = #tpu.dot_dimension_numbers<[1], [0], [0], [1], [0, 0, 1, 1], [], []>} : vector<32x256xf32>, vector<256x256xf32>, vector<32x256xf32> -> vector<32x256xf32>
    %cst_60 = arith.constant dense<0.000000e+00> : vector<32x256xf32>
    %89 = tpu.matmul %86, %10, %cst_60 {dimension_numbers = #tpu.dot_dimension_numbers<[1], [0], [0], [1], [0, 0, 1, 1], [], []>} : vector<32x256xf32>, vector<256x256xf32>, vector<32x256xf32> -> vector<32x256xf32>
    %cst_61 = arith.constant dense<0.000000e+00> : vector<32x256xf32>
    %90 = tpu.matmul %87, %11, %cst_61 {dimension_numbers = #tpu.dot_dimension_numbers<[1], [0], [0], [1], [0, 0, 1, 1], [], []>} : vector<32x256xf32>, vector<256x256xf32>, vector<32x256xf32> -> vector<32x256xf32>
    %91 = arith.subf %88, %89 : vector<32x256xf32>
    %92 = arith.subf %90, %88 : vector<32x256xf32>
    %93 = arith.subf %92, %89 : vector<32x256xf32>
    %94 = arith.mulf %91, %91 : vector<32x256xf32>
    %95 = arith.mulf %93, %93 : vector<32x256xf32>
    %96 = arith.addf %94, %95 : vector<32x256xf32>
    %c0_62 = arith.constant 0 : index
    %c0_63 = arith.constant 0 : index
    %97 = vector.load %arg21[%c0_62, %c0_63] : memref<32x256xf32, #tpu.memory_space<vmem>>, vector<32x256xf32>
    %cst_64 = arith.constant 1.000000e+00 : f32
    %98 = vector.broadcast %cst_64 : f32 to vector<32x256xf32>
    %99 = arith.addf %98, %97 : vector<32x256xf32>
    %100 = arith.mulf %96, %99 : vector<32x256xf32>
    %c0_65 = arith.constant 0 : index
    %c0_66 = arith.constant 0 : index
    %101 = vector.load %arg22[%c0_65, %c0_66] : memref<32x256xf32, #tpu.memory_space<vmem>>, vector<32x256xf32>
    %102 = arith.addf %100, %101 : vector<32x256xf32>
    %c0_67 = arith.constant 0 : index
    %c0_68 = arith.constant 0 : index
    %103 = vector.load %arg23[%c0_67, %c0_68] : memref<32x256xf32, #tpu.memory_space<vmem>>, vector<32x256xf32>
    tpu.vector_store %arg23[%c0_67, %c0_68], %102 {strides = array<i32>} : memref<32x256xf32, #tpu.memory_space<vmem>>, vector<32x256xf32>,
    return
  }
  func.func @transform_0(%arg0: i32) -> (i32, i32) {
    %c0_i32 = arith.constant 0 : i32
    %c0_i32_0 = arith.constant 0 : i32
    return %c0_i32, %arg0 : i32, i32
  }
  func.func @transform_1(%arg0: i32) -> (i32, i32) {
    %c0_i32 = arith.constant 0 : i32
    %c0_i32_0 = arith.constant 0 : i32
    return %c0_i32, %arg0 : i32, i32
  }
  func.func @transform_2(%arg0: i32) -> (i32, i32) {
    %c0_i32 = arith.constant 0 : i32
    %c0_i32_0 = arith.constant 0 : i32
    %c0_i32_1 = arith.constant 0 : i32
    return %c0_i32, %c0_i32_0 : i32, i32
  }
  func.func @transform_3(%arg0: i32) -> (i32, i32) {
    %c0_i32 = arith.constant 0 : i32
    %c0_i32_0 = arith.constant 0 : i32
    %c0_i32_1 = arith.constant 0 : i32
    return %c0_i32, %c0_i32_0 : i32, i32
  }
  func.func @transform_4(%arg0: i32) -> (i32, i32) {
    %c0_i32 = arith.constant 0 : i32
    %c0_i32_0 = arith.constant 0 : i32
    %c0_i32_1 = arith.constant 0 : i32
    return %c0_i32, %c0_i32_0 : i32, i32
  }
  func.func @transform_5(%arg0: i32) -> (i32, i32) {
    %c0_i32 = arith.constant 0 : i32
    %c0_i32_0 = arith.constant 0 : i32
    %c0_i32_1 = arith.constant 0 : i32
    return %c0_i32, %c0_i32_0 : i32, i32
  }
  func.func @transform_6(%arg0: i32) -> (i32, i32) {
    %c0_i32 = arith.constant 0 : i32
    %c0_i32_0 = arith.constant 0 : i32
    %c0_i32_1 = arith.constant 0 : i32
    return %c0_i32, %c0_i32_0 : i32, i32
  }
  func.func @transform_7(%arg0: i32) -> (i32, i32) {
    %c0_i32 = arith.constant 0 : i32
    %c0_i32_0 = arith.constant 0 : i32
    %c0_i32_1 = arith.constant 0 : i32
    return %c0_i32, %c0_i32_0 : i32, i32
  }
  func.func @transform_8(%arg0: i32) -> (i32, i32) {
    %c0_i32 = arith.constant 0 : i32
    %c0_i32_0 = arith.constant 0 : i32
    %c0_i32_1 = arith.constant 0 : i32
    return %c0_i32, %c0_i32_0 : i32, i32
  }
  func.func @transform_9(%arg0: i32) -> (i32, i32) {
    %c0_i32 = arith.constant 0 : i32
    %c0_i32_0 = arith.constant 0 : i32
    %c0_i32_1 = arith.constant 0 : i32
    return %c0_i32, %c0_i32_0 : i32, i32
  }
  func.func @transform_10(%arg0: i32) -> (i32, i32) {
    %c0_i32 = arith.constant 0 : i32
    %c0_i32_0 = arith.constant 0 : i32
    %c0_i32_1 = arith.constant 0 : i32
    return %c0_i32, %c0_i32_0 : i32, i32
  }
  func.func @transform_11(%arg0: i32) -> (i32, i32) {
    %c0_i32 = arith.constant 0 : i32
    %c0_i32_0 = arith.constant 0 : i32
    %c0_i32_1 = arith.constant 0 : i32
    return %c0_i32, %c0_i32_0 : i32, i32
  }
  func.func @transform_12(%arg0: i32) -> (i32, i32) {
    %c0_i32 = arith.constant 0 : i32
    %c0_i32_0 = arith.constant 0 : i32
    %c0_i32_1 = arith.constant 0 : i32
    return %c0_i32, %c0_i32_0 : i32, i32
  }
  func.func @transform_13(%arg0: i32) -> (i32, i32) {
    %c0_i32 = arith.constant 0 : i32
    %c0_i32_0 = arith.constant 0 : i32
    %c0_i32_1 = arith.constant 0 : i32
    return %c0_i32, %c0_i32_0 : i32, i32
  }
  func.func @transform_14(%arg0: i32) -> (i32, i32) {
    %c0_i32 = arith.constant 0 : i32
    %c0_i32_0 = arith.constant 0 : i32
    %c0_i32_1 = arith.constant 0 : i32
    return %c0_i32, %c0_i32_0 : i32, i32
  }
  func.func @transform_15(%arg0: i32) -> (i32, i32) {
    %c0_i32 = arith.constant 0 : i32
    %c0_i32_0 = arith.constant 0 : i32
    %c0_i32_1 = arith.constant 0 : i32
    return %c0_i32, %c0_i32_0 : i32, i32
  }
  func.func @transform_16(%arg0: i32) -> (i32, i32) {
    %c0_i32 = arith.constant 0 : i32
    %c0_i32_0 = arith.constant 0 : i32
    %c0_i32_1 = arith.constant 0 : i32
    return %c0_i32, %c0_i32_0 : i32, i32
  }
  func.func @transform_17(%arg0: i32) -> (i32, i32) {
    %c0_i32 = arith.constant 0 : i32
    %c0_i32_0 = arith.constant 0 : i32
    %c0_i32_1 = arith.constant 0 : i32
    return %c0_i32, %c0_i32_0 : i32, i32
  }
  func.func @transform_18(%arg0: i32) -> (i32, i32) {
    %c0_i32 = arith.constant 0 : i32
    %c0_i32_0 = arith.constant 0 : i32
    %c0_i32_1 = arith.constant 0 : i32
    return %c0_i32, %c0_i32_0 : i32, i32
  }
  func.func @transform_19(%arg0: i32) -> (i32, i32) {
    %c0_i32 = arith.constant 0 : i32
    %c0_i32_0 = arith.constant 0 : i32
    %c0_i32_1 = arith.constant 0 : i32
    return %c0_i32, %c0_i32_0 : i32, i32
  }
  func.func @transform_20(%arg0: i32) -> (i32, i32) {
    %c0_i32 = arith.constant 0 : i32
    %c0_i32_0 = arith.constant 0 : i32
    return %c0_i32, %arg0 : i32, i32
  }
  func.func @transform_21(%arg0: i32) -> (i32, i32) {
    %c0_i32 = arith.constant 0 : i32
    %c0_i32_0 = arith.constant 0 : i32
    return %c0_i32, %arg0 : i32, i32
  }
  func.func @transform_22(%arg0: i32) -> (i32, i32) {
    %c0_i32 = arith.constant 0 : i32
    %c0_i32_0 = arith.constant 0 : i32
    return %c0_i32, %arg0 : i32, i32
  }
}

</mosaic_0001>

<llo_original>
// kernel: tpu_custom_call.1
$region0: #{tpu_custom_call.1}
  #allocation0 [shape = 'u32[]', space=smem, size = 0x4, offset = 0x4, fixed_abs, tag = 'smem constant byte address 0x4 - core index']
  #allocation1 [shape = 'u32[72,128]{1,0:T(1,128)}', space=vmem, size = 0x9000, scoped, tag = 'internal scratch']
  %s0 = inlined_call_operand.hbm [shape: f32[32,256], index: 0, kind: input, shape index: {}]
  %s1 = inlined_call_operand.hbm [shape: f32[32,256], index: 1, kind: input, shape index: {}]
  %s2 = inlined_call_operand.hbm [shape: f32[32,32], index: 2, kind: input, shape index: {}]
  %s3 = inlined_call_operand.hbm [shape: f32[32,32], index: 3, kind: input, shape index: {}]
  %s4 = inlined_call_operand.hbm [shape: f32[32,32], index: 4, kind: input, shape index: {}]
  %s5 = inlined_call_operand.hbm [shape: f32[32,32], index: 5, kind: input, shape index: {}]
  %s6 = inlined_call_operand.hbm [shape: f32[32,32], index: 6, kind: input, shape index: {}]
  %s7 = inlined_call_operand.hbm [shape: f32[32,32], index: 7, kind: input, shape index: {}]
  %s8 = inlined_call_operand.hbm [shape: f32[256,256], index: 8, kind: input, shape index: {}]
  %s9 = inlined_call_operand.hbm [shape: f32[256,256], index: 9, kind: input, shape index: {}]
  %s10 = inlined_call_operand.hbm [shape: f32[256,256], index: 10, kind: input, shape index: {}]
  %s11 = inlined_call_operand.hbm [shape: f32[256,256], index: 11, kind: input, shape index: {}]
  %s12 = inlined_call_operand.hbm [shape: f32[256,256], index: 12, kind: input, shape index: {}]
  %s13 = inlined_call_operand.hbm [shape: f32[256,256], index: 13, kind: input, shape index: {}]
  %s14 = inlined_call_operand.hbm [shape: f32[32,256], index: 14, kind: input, shape index: {}]
  %s15 = inlined_call_operand.hbm [shape: f32[32,256], index: 15, kind: input, shape index: {}]
  %s16 = inlined_call_operand.hbm [shape: f32[32,256], index: 16, kind: input, shape index: {}]
  %s17 = inlined_call_operand.hbm [shape: f32[32,256], index: 17, kind: input, shape index: {}]
  %s18 = inlined_call_operand.hbm [shape: f32[32,256], index: 18, kind: input, shape index: {}]
  %s19 = inlined_call_operand.hbm [shape: f32[32,256], index: 19, kind: input, shape index: {}]
  %s20 = inlined_call_operand.hbm [shape: f32[32,256], index: 20, kind: input, shape index: {}]
  %s21 = inlined_call_operand.hbm [shape: f32[32,256], index: 21, kind: input, shape index: {}]
  %s22 = inlined_call_operand.hbm [shape: f32[32,256], index: 22, kind: output, shape index: {}]
  %s23 = sld [smem:[#allocation0]]
  $region186: #{tpu_custom_call.1} parent=0
    _
  %s25 = ssub.s32 1, %s23
  %s26 = scalar_select 0, %s25, %s23
  $region1: #{tpu_custom_call.1} parent=0
    #allocation2 [shape = 'u8[32768]{0}', space=vmem, size = 0x8000, scoped, tag = 'input window, operand 0, single buffered']
    #allocation3 [shape = 's32[1]{0}', space=sflag, size = 0x4, scoped, tag = 'scoped memory for tpu_custom_call.1']
    #allocation4 [shape = 's32[1]{0}', space=sflag, size = 0x4, scoped, tag = 'scoped memory for tpu_custom_call.1']
    #allocation5 [shape = 'u8[32768]{0}', space=vmem, size = 0x8000, scoped, tag = 'input window, operand 1, single buffered']
    #allocation6 [shape = 's32[1]{0}', space=sflag, size = 0x4, scoped, tag = 'scoped memory for tpu_custom_call.1']
    #allocation7 [shape = 'u8[16384]{0}', space=vmem, size = 0x4000, scoped, tag = 'input window, operand 2, single buffered']
    #allocation8 [shape = 'u8[16384]{0}', space=vmem, size = 0x4000, scoped, tag = 'input window, operand 3, single buffered']
    #allocation9 [shape = 's32[1]{0}', space=sflag, size = 0x4, scoped, tag = 'scoped memory for tpu_custom_call.1']
    #allocation10 [shape = 'u8[16384]{0}', space=vmem, size = 0x4000, scoped, tag = 'input window, operand 4, single buffered']
    #allocation11 [shape = 'u8[16384]{0}', space=vmem, size = 0x4000, scoped, tag = 'input window, operand 5, single buffered']
    #allocation12 [shape = 's32[1]{0}', space=sflag, size = 0x4, scoped, tag = 'scoped memory for tpu_custom_call.1']
    #allocation13 [shape = 'u8[16384]{0}', space=vmem, size = 0x4000, scoped, tag = 'input window, operand 6, single buffered']
    #allocation14 [shape = 'u8[16384]{0}', space=vmem, size = 0x4000, scoped, tag = 'input window, operand 7, single buffered']
    #allocation15 [shape = 's32[1]{0}', space=sflag, size = 0x4, scoped, tag = 'scoped memory for tpu_custom_call.1']
    #allocation16 [shape = 'u8[262144]{0}', space=vmem, size = 0x40000, scoped, tag = 'input window, operand 8, single buffered']
    #allocation17 [shape = 'u8[262144]{0}', space=vmem, size = 0x40000, scoped, tag = 'input window, operand 9, single buffered']
    #allocation18 [shape = 's32[1]{0}', space=sflag, size = 0x4, scoped, tag = 'scoped memory for tpu_custom_call.1']
    #allocation19 [shape = 'u8[262144]{0}', space=vmem, size = 0x40000, scoped, tag = 'input window, operand 10, single buffered']
    #allocation20 [shape = 'u8[262144]{0}', space=vmem, size = 0x40000, scoped, tag = 'input window, operand 11, single buffered']
    #allocation21 [shape = 's32[1]{0}', space=sflag, size = 0x4, scoped, tag = 'scoped memory for tpu_custom_call.1']
    #allocation22 [shape = 'u8[262144]{0}', space=vmem, size = 0x40000, scoped, tag = 'input window, operand 12, single buffered']
    #allocation23 [shape = 'u8[262144]{0}', space=vmem, size = 0x40000, scoped, tag = 'input window, operand 13, single buffered']
    #allocation24 [shape = 's32[1]{0}', space=sflag, size = 0x4, scoped, tag = 'scoped memory for tpu_custom_call.1']
    #allocation25 [shape = 'u8[32768]{0}', space=vmem, size = 0x8000, scoped, tag = 'input window, operand 14, single buffered']
    #allocation26 [shape = 'u8[32768]{0}', space=vmem, size = 0x8000, scoped, tag = 'input window, operand 15, single buffered']
    #allocation27 [shape = 's32[1]{0}', space=sflag, size = 0x4, scoped, tag = 'scoped memory for tpu_custom_call.1']
    #allocation28 [shape = 'u8[32768]{0}', space=vmem, size = 0x8000, scoped, tag = 'input window, operand 16, single buffered']
    #allocation29 [shape = 'u8[32768]{0}', space=vmem, size = 0x8000, scoped, tag = 'input window, operand 17, single buffered']
    #allocation30 [shape = 's32[1]{0}', space=sflag, size = 0x4, scoped, tag = 'scoped memory for tpu_custom_call.1']
    #allocation31 [shape = 'u8[32768]{0}', space=vmem, size = 0x8000, scoped, tag = 'input window, operand 18, single buffered']
    #allocation32 [shape = 'u8[32768]{0}', space=vmem, size = 0x8000, scoped, tag = 'input window, operand 19, single buffered']
    #allocation33 [shape = 's32[1]{0}', space=sflag, size = 0x4, scoped, tag = 'scoped memory for tpu_custom_call.1']
    #allocation34 [shape = 'u8[32768]{0}', space=vmem, size = 0x8000, scoped, tag = 'input window, operand 20, single buffered']
    #allocation35 [shape = 'u8[32768]{0}', space=vmem, size = 0x8000, scoped, tag = 'input window, operand 21, single buffered']
    #allocation36 [shape = 's32[1]{0}', space=sflag, size = 0x4, scoped, tag = 'scoped memory for tpu_custom_call.1']
    #allocation37 [shape = 'u8[32768]{0}', space=vmem, size = 0x8000, scoped, tag = 'output window, operand 0, single buffered']
    %27 = vsyncpa [#allocation3], 0
    %28 = vsyncpa [#allocation6], 0
    %29 = vsyncpa [#allocation9], 0
    %30 = vsyncpa [#allocation12], 0
    %31 = vsyncpa [#allocation15], 0
    %32 = vsyncpa [#allocation18], 0
    %33 = vsyncpa [#allocation21], 0
    %34 = vsyncpa [#allocation24], 0
    %35 = vsyncpa [#allocation27], 0
    %36 = vsyncpa [#allocation30], 0
    %37 = vsyncpa [#allocation33], 0
    %38 = vsyncpa [#allocation36], 0
    %39 = vsyncpa [#allocation4], 0
    // Predicated region
    $region2: #{tpu_custom_call.1} parent=1 // pred_check
      _
    $region3: #{tpu_custom_call.1} parent=1 // pred_check_branch
      %41 = sbr.rel (0) target = $region5
    $region4: #{tpu_custom_call.1} parent=1 // pred_region
      %43 = vsyncadd [#allocation3], 0
      %s44 = sshll.u32 %s0, 4
      %s45 = int_to_ptr.hbm [resolvable:$true] %s44
      %s46 = sshll.u32 [#allocation2], 4
      %s47 = int_to_ptr.vmem [resolvable:$true] %s46
      %52 = dma.hbm_to_vmem [thread:$0]  %s45, 1024, %s47, [#allocation3], 256, 256, 16
    $region5: #{tpu_custom_call.1} parent=1 // pred_fallthru
      _
    // Predicated region
    $region6: #{tpu_custom_call.1} parent=1 // pred_check
      _
    $region7: #{tpu_custom_call.1} parent=1 // pred_check_branch
      %54 = sbr.rel (0) target = $region9
    $region8: #{tpu_custom_call.1} parent=1 // pred_region
      %56 = vsyncadd [#allocation6], 0
      %s57 = sshll.u32 %s1, 4
      %s58 = int_to_ptr.hbm [resolvable:$true] %s57
      %s59 = sshll.u32 [#allocation5], 4
      %s60 = int_to_ptr.vmem [resolvable:$true] %s59
      %65 = dma.hbm_to_vmem [thread:$0]  %s58, 1024, %s60, [#allocation6], 256, 256, 16
    $region9: #{tpu_custom_call.1} parent=1 // pred_fallthru
      _
    // Predicated region
    $region10: #{tpu_custom_call.1} parent=1 // pred_check
      _
    $region11: #{tpu_custom_call.1} parent=1 // pred_check_branch
      %67 = sbr.rel (0) target = $region13
    $region12: #{tpu_custom_call.1} parent=1 // pred_region
      %69 = vsyncadd [#allocation6], 0
      %s70 = sshll.u32 %s2, 4
      %s71 = int_to_ptr.hbm [resolvable:$true] %s70
      %s72 = sshll.u32 [#allocation7], 4
      %s73 = int_to_ptr.vmem [resolvable:$true] %s72
      %78 = dma.hbm_to_vmem [thread:$0]  %s71, 512, %s73, [#allocation6], 128, 128, 8
    $region13: #{tpu_custom_call.1} parent=1 // pred_fallthru
      _
    // Predicated region
    $region14: #{tpu_custom_call.1} parent=1 // pred_check
      _
    $region15: #{tpu_custom_call.1} parent=1 // pred_check_branch
      %80 = sbr.rel (0) target = $region17
    $region16: #{tpu_custom_call.1} parent=1 // pred_region
      %82 = vsyncadd [#allocation9], 0
      %s83 = sshll.u32 %s3, 4
      %s84 = int_to_ptr.hbm [resolvable:$true] %s83
      %s85 = sshll.u32 [#allocation8], 4
      %s86 = int_to_ptr.vmem [resolvable:$true] %s85
      %91 = dma.hbm_to_vmem [thread:$0]  %s84, 512, %s86, [#allocation9], 128, 128, 8
    $region17: #{tpu_custom_call.1} parent=1 // pred_fallthru
      _
    // Predicated region
    $region18: #{tpu_custom_call.1} parent=1 // pred_check
      _
    $region19: #{tpu_custom_call.1} parent=1 // pred_check_branch
      %93 = sbr.rel (0) target = $region21
    $region20: #{tpu_custom_call.1} parent=1 // pred_region
      %95 = vsyncadd [#allocation9], 0
      %s96 = sshll.u32 %s4, 4
      %s97 = int_to_ptr.hbm [resolvable:$true] %s96
      %s98 = sshll.u32 [#allocation10], 4
      %s99 = int_to_ptr.vmem [resolvable:$true] %s98
      %104 = dma.hbm_to_vmem [thread:$0]  %s97, 512, %s99, [#allocation9], 128, 128, 8
    $region21: #{tpu_custom_call.1} parent=1 // pred_fallthru
      _
    // Predicated region
    $region22: #{tpu_custom_call.1} parent=1 // pred_check
      _
    $region23: #{tpu_custom_call.1} parent=1 // pred_check_branch
      %106 = sbr.rel (0) target = $region25
    $region24: #{tpu_custom_call.1} parent=1 // pred_region
      %108 = vsyncadd [#allocation12], 0
      %s109 = sshll.u32 %s5, 4
      %s110 = int_to_ptr.hbm [resolvable:$true] %s109
      %s111 = sshll.u32 [#allocation11], 4
      %s112 = int_to_ptr.vmem [resolvable:$true] %s111
      %117 = dma.hbm_to_vmem [thread:$0]  %s110, 512, %s112, [#allocation12], 128, 128, 8
    $region25: #{tpu_custom_call.1} parent=1 // pred_fallthru
      _
    // Predicated region
    $region26: #{tpu_custom_call.1} parent=1 // pred_check
      _
    $region27: #{tpu_custom_call.1} parent=1 // pred_check_branch
      %119 = sbr.rel (0) target = $region29
    $region28: #{tpu_custom_call.1} parent=1 // pred_region
      %121 = vsyncadd [#allocation12], 0
      %s122 = sshll.u32 %s6, 4
      %s123 = int_to_ptr.hbm [resolvable:$true] %s122
      %s124 = sshll.u32 [#allocation13], 4
      %s125 = int_to_ptr.vmem [resolvable:$true] %s124
      %130 = dma.hbm_to_vmem [thread:$0]  %s123, 512, %s125, [#allocation12], 128, 128, 8
    $region29: #{tpu_custom_call.1} parent=1 // pred_fallthru
      _
    // Predicated region
    $region30: #{tpu_custom_call.1} parent=1 // pred_check
      _
    $region31: #{tpu_custom_call.1} parent=1 // pred_check_branch
      %132 = sbr.rel (0) target = $region33
    $region32: #{tpu_custom_call.1} parent=1 // pred_region
      %134 = vsyncadd [#allocation15], 0
      %s135 = sshll.u32 %s7, 4
      %s136 = int_to_ptr.hbm [resolvable:$true] %s135
      %s137 = sshll.u32 [#allocation14], 4
      %s138 = int_to_ptr.vmem [resolvable:$true] %s137
      %143 = dma.hbm_to_vmem [thread:$0]  %s136, 512, %s138, [#allocation15], 128, 128, 8
    $region33: #{tpu_custom_call.1} parent=1 // pred_fallthru
      _
    // Predicated region
    $region34: #{tpu_custom_call.1} parent=1 // pred_check
      _
    $region35: #{tpu_custom_call.1} parent=1 // pred_check_branch
      %145 = sbr.rel (0) target = $region37
    $region36: #{tpu_custom_call.1} parent=1 // pred_region
      %147 = vsyncadd [#allocation15], 0
      %s148 = sshll.u32 %s8, 4
      %s149 = int_to_ptr.hbm [resolvable:$true] %s148
      %s150 = sshll.u32 [#allocation16], 4
      %s151 = int_to_ptr.vmem [resolvable:$true] %s150
      %156 = dma.hbm_to_vmem [thread:$0]  %s149, 8192, %s151, [#allocation15], 256, 256, 16
    $region37: #{tpu_custom_call.1} parent=1 // pred_fallthru
      _
    // Predicated region
    $region38: #{tpu_custom_call.1} parent=1 // pred_check
      _
    $region39: #{tpu_custom_call.1} parent=1 // pred_check_branch
      %158 = sbr.rel (0) target = $region41
    $region40: #{tpu_custom_call.1} parent=1 // pred_region
      %160 = vsyncadd [#allocation18], 0
      %s161 = sshll.u32 %s9, 4
      %s162 = int_to_ptr.hbm [resolvable:$true] %s161
      %s163 = sshll.u32 [#allocation17], 4
      %s164 = int_to_ptr.vmem [resolvable:$true] %s163
      %169 = dma.hbm_to_vmem [thread:$0]  %s162, 8192, %s164, [#allocation18], 256, 256, 16
    $region41: #{tpu_custom_call.1} parent=1 // pred_fallthru
      _
    // Predicated region
    $region42: #{tpu_custom_call.1} parent=1 // pred_check
      _
    $region43: #{tpu_custom_call.1} parent=1 // pred_check_branch
      %171 = sbr.rel (0) target = $region45
    $region44: #{tpu_custom_call.1} parent=1 // pred_region
      %173 = vsyncadd [#allocation18], 0
      %s174 = sshll.u32 %s10, 4
      %s175 = int_to_ptr.hbm [resolvable:$true] %s174
      %s176 = sshll.u32 [#allocation19], 4
      %s177 = int_to_ptr.vmem [resolvable:$true] %s176
      %182 = dma.hbm_to_vmem [thread:$0]  %s175, 8192, %s177, [#allocation18], 256, 256, 16
    $region45: #{tpu_custom_call.1} parent=1 // pred_fallthru
      _
    // Predicated region
    $region46: #{tpu_custom_call.1} parent=1 // pred_check
      _
    $region47: #{tpu_custom_call.1} parent=1 // pred_check_branch
      %184 = sbr.rel (0) target = $region49
    $region48: #{tpu_custom_call.1} parent=1 // pred_region
      %186 = vsyncadd [#allocation21], 0
      %s187 = sshll.u32 %s11, 4
      %s188 = int_to_ptr.hbm [resolvable:$true] %s187
      %s189 = sshll.u32 [#allocation20], 4
      %s190 = int_to_ptr.vmem [resolvable:$true] %s189
      %195 = dma.hbm_to_vmem [thread:$0]  %s188, 8192, %s190, [#allocation21], 256, 256, 16
    $region49: #{tpu_custom_call.1} parent=1 // pred_fallthru
      _
    // Predicated region
    $region50: #{tpu_custom_call.1} parent=1 // pred_check
      _
    $region51: #{tpu_custom_call.1} parent=1 // pred_check_branch
      %197 = sbr.rel (0) target = $region53
    $region52: #{tpu_custom_call.1} parent=1 // pred_region
      %199 = vsyncadd [#allocation21], 0
      %s200 = sshll.u32 %s12, 4
      %s201 = int_to_ptr.hbm [resolvable:$true] %s200
      %s202 = sshll.u32 [#allocation22], 4
      %s203 = int_to_ptr.vmem [resolvable:$true] %s202
      %208 = dma.hbm_to_vmem [thread:$0]  %s201, 8192, %s203, [#allocation21], 256, 256, 16
    $region53: #{tpu_custom_call.1} parent=1 // pred_fallthru
      _
    // Predicated region
    $region54: #{tpu_custom_call.1} parent=1 // pred_check
      _
    $region55: #{tpu_custom_call.1} parent=1 // pred_check_branch
      %210 = sbr.rel (0) target = $region57
    $region56: #{tpu_custom_call.1} parent=1 // pred_region
      %212 = vsyncadd [#allocation24], 0
      %s213 = sshll.u32 %s13, 4
      %s214 = int_to_ptr.hbm [resolvable:$true] %s213
      %s215 = sshll.u32 [#allocation23], 4
      %s216 = int_to_ptr.vmem [resolvable:$true] %s215
      %221 = dma.hbm_to_vmem [thread:$0]  %s214, 8192, %s216, [#allocation24], 256, 256, 16
    $region57: #{tpu_custom_call.1} parent=1 // pred_fallthru
      _
    // Predicated region
    $region58: #{tpu_custom_call.1} parent=1 // pred_check
      _
    $region59: #{tpu_custom_call.1} parent=1 // pred_check_branch
      %223 = sbr.rel (0) target = $region61
    $region60: #{tpu_custom_call.1} parent=1 // pred_region
      %225 = vsyncadd [#allocation24], 0
      %s226 = sshll.u32 %s14, 4
      %s227 = int_to_ptr.hbm [resolvable:$true] %s226
      %s228 = sshll.u32 [#allocation25], 4
      %s229 = int_to_ptr.vmem [resolvable:$true] %s228
      %234 = dma.hbm_to_vmem [thread:$0]  %s227, 1024, %s229, [#allocation24], 256, 256, 16
    $region61: #{tpu_custom_call.1} parent=1 // pred_fallthru
      _
    // Predicated region
    $region62: #{tpu_custom_call.1} parent=1 // pred_check
      _
    $region63: #{tpu_custom_call.1} parent=1 // pred_check_branch
      %236 = sbr.rel (0) target = $region65
    $region64: #{tpu_custom_call.1} parent=1 // pred_region
      %238 = vsyncadd [#allocation27], 0
      %s239 = sshll.u32 %s15, 4
      %s240 = int_to_ptr.hbm [resolvable:$true] %s239
      %s241 = sshll.u32 [#allocation26], 4
      %s242 = int_to_ptr.vmem [resolvable:$true] %s241
      %247 = dma.hbm_to_vmem [thread:$0]  %s240, 1024, %s242, [#allocation27], 256, 256, 16
    $region65: #{tpu_custom_call.1} parent=1 // pred_fallthru
      _
    // Predicated region
    $region66: #{tpu_custom_call.1} parent=1 // pred_check
      _
    $region67: #{tpu_custom_call.1} parent=1 // pred_check_branch
      %249 = sbr.rel (0) target = $region69
    $region68: #{tpu_custom_call.1} parent=1 // pred_region
      %251 = vsyncadd [#allocation27], 0
      %s252 = sshll.u32 %s16, 4
      %s253 = int_to_ptr.hbm [resolvable:$true] %s252
      %s254 = sshll.u32 [#allocation28], 4
      %s255 = int_to_ptr.vmem [resolvable:$true] %s254
      %260 = dma.hbm_to_vmem [thread:$0]  %s253, 1024, %s255, [#allocation27], 256, 256, 16
    $region69: #{tpu_custom_call.1} parent=1 // pred_fallthru
      _
    // Predicated region
    $region70: #{tpu_custom_call.1} parent=1 // pred_check
      _
    $region71: #{tpu_custom_call.1} parent=1 // pred_check_branch
      %262 = sbr.rel (0) target = $region73
    $region72: #{tpu_custom_call.1} parent=1 // pred_region
      %264 = vsyncadd [#allocation30], 0
      %s265 = sshll.u32 %s17, 4
      %s266 = int_to_ptr.hbm [resolvable:$true] %s265
      %s267 = sshll.u32 [#allocation29], 4
      %s268 = int_to_ptr.vmem [resolvable:$true] %s267
      %273 = dma.hbm_to_vmem [thread:$0]  %s266, 1024, %s268, [#allocation30], 256, 256, 16
    $region73: #{tpu_custom_call.1} parent=1 // pred_fallthru
      _
    // Predicated region
    $region74: #{tpu_custom_call.1} parent=1 // pred_check
      _
    $region75: #{tpu_custom_call.1} parent=1 // pred_check_branch
      %275 = sbr.rel (0) target = $region77
    $region76: #{tpu_custom_call.1} parent=1 // pred_region
      %277 = vsyncadd [#allocation30], 0
      %s278 = sshll.u32 %s18, 4
      %s279 = int_to_ptr.hbm [resolvable:$true] %s278
      %s280 = sshll.u32 [#allocation31], 4
      %s281 = int_to_ptr.vmem [resolvable:$true] %s280
      %286 = dma.hbm_to_vmem [thread:$0]  %s279, 1024, %s281, [#allocation30], 256, 256, 16
    $region77: #{tpu_custom_call.1} parent=1 // pred_fallthru
      _
    // Predicated region
    $region78: #{tpu_custom_call.1} parent=1 // pred_check
      _
    $region79: #{tpu_custom_call.1} parent=1 // pred_check_branch
      %288 = sbr.rel (0) target = $region81
    $region80: #{tpu_custom_call.1} parent=1 // pred_region
      %290 = vsyncadd [#allocation33], 0
      %s291 = sshll.u32 %s19, 4
      %s292 = int_to_ptr.hbm [resolvable:$true] %s291
      %s293 = sshll.u32 [#allocation32], 4
      %s294 = int_to_ptr.vmem [resolvable:$true] %s293
      %299 = dma.hbm_to_vmem [thread:$0]  %s292, 1024, %s294, [#allocation33], 256, 256, 16
    $region81: #{tpu_custom_call.1} parent=1 // pred_fallthru
      _
    // Predicated region
    $region82: #{tpu_custom_call.1} parent=1 // pred_check
      _
    $region83: #{tpu_custom_call.1} parent=1 // pred_check_branch
      %301 = sbr.rel (0) target = $region85
    $region84: #{tpu_custom_call.1} parent=1 // pred_region
      %303 = vsyncadd [#allocation33], 0
      %s304 = sshll.u32 %s20, 4
      %s305 = int_to_ptr.hbm [resolvable:$true] %s304
      %s306 = sshll.u32 [#allocation34], 4
      %s307 = int_to_ptr.vmem [resolvable:$true] %s306
      %312 = dma.hbm_to_vmem [thread:$0]  %s305, 1024, %s307, [#allocation33], 256, 256, 16
    $region85: #{tpu_custom_call.1} parent=1 // pred_fallthru
      _
    // Predicated region
    $region86: #{tpu_custom_call.1} parent=1 // pred_check
      _
    $region87: #{tpu_custom_call.1} parent=1 // pred_check_branch
      %314 = sbr.rel (0) target = $region89
    $region88: #{tpu_custom_call.1} parent=1 // pred_region
      %316 = vsyncadd [#allocation36], 0
      %s317 = sshll.u32 %s21, 4
      %s318 = int_to_ptr.hbm [resolvable:$true] %s317
      %s319 = sshll.u32 [#allocation35], 4
      %s320 = int_to_ptr.vmem [resolvable:$true] %s319
      %325 = dma.hbm_to_vmem [thread:$0]  %s318, 1024, %s320, [#allocation36], 256, 256, 16
    $region89: #{tpu_custom_call.1} parent=1 // pred_fallthru
      _
    // Predicated region
    $region90: #{tpu_custom_call.1} parent=1 // pred_check
      _
    $region91: #{tpu_custom_call.1} parent=1 // pred_check_branch
      %327 = sbr.rel (0) target = $region93
    $region92: #{tpu_custom_call.1} parent=1 // pred_region
      %329 = dma.done [#allocation3], 1024
    $region93: #{tpu_custom_call.1} parent=1 // pred_fallthru
      _
    // Predicated region
    $region94: #{tpu_custom_call.1} parent=1 // pred_check
      _
    $region95: #{tpu_custom_call.1} parent=1 // pred_check_branch
      %331 = sbr.rel (0) target = $region97
    $region96: #{tpu_custom_call.1} parent=1 // pred_region
      %333 = dma.done [#allocation6], 1024
    $region97: #{tpu_custom_call.1} parent=1 // pred_fallthru
      _
    // Predicated region
    $region98: #{tpu_custom_call.1} parent=1 // pred_check
      _
    $region99: #{tpu_custom_call.1} parent=1 // pred_check_branch
      %335 = sbr.rel (0) target = $region101
    $region100: #{tpu_custom_call.1} parent=1 // pred_region
      %337 = dma.done [#allocation6], 512
    $region101: #{tpu_custom_call.1} parent=1 // pred_fallthru
      _
    // Predicated region
    $region102: #{tpu_custom_call.1} parent=1 // pred_check
      _
    $region103: #{tpu_custom_call.1} parent=1 // pred_check_branch
      %339 = sbr.rel (0) target = $region105
    $region104: #{tpu_custom_call.1} parent=1 // pred_region
      %341 = dma.done [#allocation9], 512
    $region105: #{tpu_custom_call.1} parent=1 // pred_fallthru
      _
    // Predicated region
    $region106: #{tpu_custom_call.1} parent=1 // pred_check
      _
    $region107: #{tpu_custom_call.1} parent=1 // pred_check_branch
      %343 = sbr.rel (0) target = $region109
    $region108: #{tpu_custom_call.1} parent=1 // pred_region
      %345 = dma.done [#allocation9], 512
    $region109: #{tpu_custom_call.1} parent=1 // pred_fallthru
      _
    // Predicated region
    $region110: #{tpu_custom_call.1} parent=1 // pred_check
      _
    $region111: #{tpu_custom_call.1} parent=1 // pred_check_branch
      %347 = sbr.rel (0) target = $region113
    $region112: #{tpu_custom_call.1} parent=1 // pred_region
      %349 = dma.done [#allocation12], 512
    $region113: #{tpu_custom_call.1} parent=1 // pred_fallthru
      _
    // Predicated region
    $region114: #{tpu_custom_call.1} parent=1 // pred_check
      _
    $region115: #{tpu_custom_call.1} parent=1 // pred_check_branch
      %351 = sbr.rel (0) target = $region117
    $region116: #{tpu_custom_call.1} parent=1 // pred_region
      %353 = dma.done [#allocation12], 512
    $region117: #{tpu_custom_call.1} parent=1 // pred_fallthru
      _
    // Predicated region
    $region118: #{tpu_custom_call.1} parent=1 // pred_check
      _
    $region119: #{tpu_custom_call.1} parent=1 // pred_check_branch
      %355 = sbr.rel (0) target = $region121
    $region120: #{tpu_custom_call.1} parent=1 // pred_region
      %357 = dma.done [#allocation15], 512
    $region121: #{tpu_custom_call.1} parent=1 // pred_fallthru
      _
    // Predicated region
    $region122: #{tpu_custom_call.1} parent=1 // pred_check
      _
    $region123: #{tpu_custom_call.1} parent=1 // pred_check_branch
      %359 = sbr.rel (0) target = $region125
    $region124: #{tpu_custom_call.1} parent=1 // pred_region
      %361 = dma.done [#allocation15], 8192
    $region125: #{tpu_custom_call.1} parent=1 // pred_fallthru
      _
    // Predicated region
    $region126: #{tpu_custom_call.1} parent=1 // pred_check
      _
    $region127: #{tpu_custom_call.1} parent=1 // pred_check_branch
      %363 = sbr.rel (0) target = $region129
    $region128: #{tpu_custom_call.1} parent=1 // pred_region
      %365 = dma.done [#allocation18], 8192
    $region129: #{tpu_custom_call.1} parent=1 // pred_fallthru
      _
    // Predicated region
    $region130: #{tpu_custom_call.1} parent=1 // pred_check
      _
    $region131: #{tpu_custom_call.1} parent=1 // pred_check_branch
      %367 = sbr.rel (0) target = $region133
    $region132: #{tpu_custom_call.1} parent=1 // pred_region
      %369 = dma.done [#allocation18], 8192
    $region133: #{tpu_custom_call.1} parent=1 // pred_fallthru
      _
    // Predicated region
    $region134: #{tpu_custom_call.1} parent=1 // pred_check
      _
    $region135: #{tpu_custom_call.1} parent=1 // pred_check_branch
      %371 = sbr.rel (0) target = $region137
    $region136: #{tpu_custom_call.1} parent=1 // pred_region
      %373 = dma.done [#allocation21], 8192
    $region137: #{tpu_custom_call.1} parent=1 // pred_fallthru
      _
    // Predicated region
    $region138: #{tpu_custom_call.1} parent=1 // pred_check
      _
    $region139: #{tpu_custom_call.1} parent=1 // pred_check_branch
      %375 = sbr.rel (0) target = $region141
    $region140: #{tpu_custom_call.1} parent=1 // pred_region
      %377 = dma.done [#allocation21], 8192
    $region141: #{tpu_custom_call.1} parent=1 // pred_fallthru
      _
    // Predicated region
    $region142: #{tpu_custom_call.1} parent=1 // pred_check
      _
    $region143: #{tpu_custom_call.1} parent=1 // pred_check_branch
      %379 = sbr.rel (0) target = $region145
    $region144: #{tpu_custom_call.1} parent=1 // pred_region
      %381 = dma.done [#allocation24], 8192
    $region145: #{tpu_custom_call.1} parent=1 // pred_fallthru
      _
    // Predicated region
    $region146: #{tpu_custom_call.1} parent=1 // pred_check
      _
    $region147: #{tpu_custom_call.1} parent=1 // pred_check_branch
      %383 = sbr.rel (0) target = $region149
    $region148: #{tpu_custom_call.1} parent=1 // pred_region
      %385 = dma.done [#allocation24], 1024
    $region149: #{tpu_custom_call.1} parent=1 // pred_fallthru
      _
    // Predicated region
    $region150: #{tpu_custom_call.1} parent=1 // pred_check
      _
    $region151: #{tpu_custom_call.1} parent=1 // pred_check_branch
      %387 = sbr.rel (0) target = $region153
    $region152: #{tpu_custom_call.1} parent=1 // pred_region
      %389 = dma.done [#allocation27], 1024
    $region153: #{tpu_custom_call.1} parent=1 // pred_fallthru
      _
    // Predicated region
    $region154: #{tpu_custom_call.1} parent=1 // pred_check
      _
    $region155: #{tpu_custom_call.1} parent=1 // pred_check_branch
      %391 = sbr.rel (0) target = $region157
    $region156: #{tpu_custom_call.1} parent=1 // pred_region
      %393 = dma.done [#allocation27], 1024
    $region157: #{tpu_custom_call.1} parent=1 // pred_fallthru
      _
    // Predicated region
    $region158: #{tpu_custom_call.1} parent=1 // pred_check
      _
    $region159: #{tpu_custom_call.1} parent=1 // pred_check_branch
      %395 = sbr.rel (0) target = $region161
    $region160: #{tpu_custom_call.1} parent=1 // pred_region
      %397 = dma.done [#allocation30], 1024
    $region161: #{tpu_custom_call.1} parent=1 // pred_fallthru
      _
    // Predicated region
    $region162: #{tpu_custom_call.1} parent=1 // pred_check
      _
    $region163: #{tpu_custom_call.1} parent=1 // pred_check_branch
      %399 = sbr.rel (0) target = $region165
    $region164: #{tpu_custom_call.1} parent=1 // pred_region
      %401 = dma.done [#allocation30], 1024
    $region165: #{tpu_custom_call.1} parent=1 // pred_fallthru
      _
    // Predicated region
    $region166: #{tpu_custom_call.1} parent=1 // pred_check
      _
    $region167: #{tpu_custom_call.1} parent=1 // pred_check_branch
      %403 = sbr.rel (0) target = $region169
    $region168: #{tpu_custom_call.1} parent=1 // pred_region
      %405 = dma.done [#allocation33], 1024
    $region169: #{tpu_custom_call.1} parent=1 // pred_fallthru
      _
    // Predicated region
    $region170: #{tpu_custom_call.1} parent=1 // pred_check
      _
    $region171: #{tpu_custom_call.1} parent=1 // pred_check_branch
      %407 = sbr.rel (0) target = $region173
    $region172: #{tpu_custom_call.1} parent=1 // pred_region
      %409 = dma.done [#allocation33], 1024
    $region173: #{tpu_custom_call.1} parent=1 // pred_fallthru
      _
    // Predicated region
    $region174: #{tpu_custom_call.1} parent=1 // pred_check
      _
    $region175: #{tpu_custom_call.1} parent=1 // pred_check_branch
      %411 = sbr.rel (0) target = $region177
    $region176: #{tpu_custom_call.1} parent=1 // pred_region
      %413 = dma.done [#allocation36], 1024
    $region177: #{tpu_custom_call.1} parent=1 // pred_fallthru
      _
    %v414 = vld [vmem:[#allocation7] sm:$0xff]
    %v415 = vld [vmem:[#allocation7 + $0x8] sm:$0xff]
    %v416 = vld [vmem:[#allocation7 + $0x10] sm:$0xff]
    %v417 = vld [vmem:[#allocation7 + $0x18] sm:$0xff]
    %v418 = vld [vmem:[#allocation8] sm:$0xff]
    %v419 = vld [vmem:[#allocation8 + $0x8] sm:$0xff]
    %v420 = vld [vmem:[#allocation8 + $0x10] sm:$0xff]
    %v421 = vld [vmem:[#allocation8 + $0x18] sm:$0xff]
    %v422 = vld [vmem:[#allocation10] sm:$0xff]
    %v423 = vld [vmem:[#allocation10 + $0x8] sm:$0xff]
    %v424 = vld [vmem:[#allocation10 + $0x10] sm:$0xff]
    %v425 = vld [vmem:[#allocation10 + $0x18] sm:$0xff]
    %v426 = vld [vmem:[#allocation11] sm:$0xff]
    %v427 = vld [vmem:[#allocation11 + $0x8] sm:$0xff]
    %v428 = vld [vmem:[#allocation11 + $0x10] sm:$0xff]
    %v429 = vld [vmem:[#allocation11 + $0x18] sm:$0xff]
    %v430 = vld [vmem:[#allocation13] sm:$0xff]
    %v431 = vld [vmem:[#allocation13 + $0x8] sm:$0xff]
    %v432 = vld [vmem:[#allocation13 + $0x10] sm:$0xff]
    %v433 = vld [vmem:[#allocation13 + $0x18] sm:$0xff]
    %v434 = vld [vmem:[#allocation14] sm:$0xff]
    %v435 = vld [vmem:[#allocation14 + $0x8] sm:$0xff]
    %v436 = vld [vmem:[#allocation14 + $0x10] sm:$0xff]
    %v437 = vld [vmem:[#allocation14 + $0x18] sm:$0xff]
    %v438 = vld [vmem:[#allocation16] sm:$0xff]
    %v439 = vld [vmem:[#allocation16 + $0x8] sm:$0xff]
    %v440 = vld [vmem:[#allocation16 + $0x10] sm:$0xff]
    %v441 = vld [vmem:[#allocation16 + $0x18] sm:$0xff]
    %v442 = vld [vmem:[#allocation16 + $0x20] sm:$0xff]
    %v443 = vld [vmem:[#allocation16 + $0x28] sm:$0xff]
    %v444 = vld [vmem:[#allocation16 + $0x30] sm:$0xff]
    %v445 = vld [vmem:[#allocation16 + $0x38] sm:$0xff]
    %v446 = vld [vmem:[#allocation16 + $0x40] sm:$0xff]
    %v447 = vld [vmem:[#allocation16 + $0x48] sm:$0xff]
    %v448 = vld [vmem:[#allocation16 + $0x50] sm:$0xff]
    %v449 = vld [vmem:[#allocation16 + $0x58] sm:$0xff]
    %v450 = vld [vmem:[#allocation16 + $0x60] sm:$0xff]
    %v451 = vld [vmem:[#allocation16 + $0x68] sm:$0xff]
    %v452 = vld [vmem:[#allocation16 + $0x70] sm:$0xff]
    %v453 = vld [vmem:[#allocation16 + $0x78] sm:$0xff]
    %v454 = vld [vmem:[#allocation16 + $0x80] sm:$0xff]
    %v455 = vld [vmem:[#allocation16 + $0x88] sm:$0xff]
    %v456 = vld [vmem:[#allocation16 + $0x90] sm:$0xff]
    %v457 = vld [vmem:[#allocation16 + $0x98] sm:$0xff]
    %v458 = vld [vmem:[#allocation16 + $0xa0] sm:$0xff]
    %v459 = vld [vmem:[#allocation16 + $0xa8] sm:$0xff]
    %v460 = vld [vmem:[#allocation16 + $0xb0] sm:$0xff]
    %v461 = vld [vmem:[#allocation16 + $0xb8] sm:$0xff]
    %v462 = vld [vmem:[#allocation16 + $0xc0] sm:$0xff]
    %v463 = vld [vmem:[#allocation16 + $0xc8] sm:$0xff]
    %v464 = vld [vmem:[#allocation16 + $0xd0] sm:$0xff]
    %v465 = vld [vmem:[#allocation16 + $0xd8] sm:$0xff]
    %v466 = vld [vmem:[#allocation16 + $0xe0] sm:$0xff]
    %v467 = vld [vmem:[#allocation16 + $0xe8] sm:$0xff]
    %v468 = vld [vmem:[#allocation16 + $0xf0] sm:$0xff]
    %v469 = vld [vmem:[#allocation16 + $0xf8] sm:$0xff]
    %v470 = vld [vmem:[#allocation16 + $0x100] sm:$0xff]
    %v471 = vld [vmem:[#allocation16 + $0x108] sm:$0xff]
    %v472 = vld [vmem:[#allocation16 + $0x110] sm:$0xff]
    %v473 = vld [vmem:[#allocation16 + $0x118] sm:$0xff]
    %v474 = vld [vmem:[#allocation16 + $0x120] sm:$0xff]
    %v475 = vld [vmem:[#allocation16 + $0x128] sm:$0xff]
    %v476 = vld [vmem:[#allocation16 + $0x130] sm:$0xff]
    %v477 = vld [vmem:[#allocation16 + $0x138] sm:$0xff]
    %v478 = vld [vmem:[#allocation16 + $0x140] sm:$0xff]
    %v479 = vld [vmem:[#allocation16 + $0x148] sm:$0xff]
    %v480 = vld [vmem:[#allocation16 + $0x150] sm:$0xff]
    %v481 = vld [vmem:[#allocation16 + $0x158] sm:$0xff]
    %v482 = vld [vmem:[#allocation16 + $0x160] sm:$0xff]
    %v483 = vld [vmem:[#allocation16 + $0x168] sm:$0xff]
    %v484 = vld [vmem:[#allocation16 + $0x170] sm:$0xff]
    %v485 = vld [vmem:[#allocation16 + $0x178] sm:$0xff]
    %v486 = vld [vmem:[#allocation16 + $0x180] sm:$0xff]
    %v487 = vld [vmem:[#allocation16 + $0x188] sm:$0xff]
    %v488 = vld [vmem:[#allocation16 + $0x190] sm:$0xff]
    %v489 = vld [vmem:[#allocation16 + $0x198] sm:$0xff]
    %v490 = vld [vmem:[#allocation16 + $0x1a0] sm:$0xff]
    %v491 = vld [vmem:[#allocation16 + $0x1a8] sm:$0xff]
    %v492 = vld [vmem:[#allocation16 + $0x1b0] sm:$0xff]
    %v493 = vld [vmem:[#allocation16 + $0x1b8] sm:$0xff]
    %v494 = vld [vmem:[#allocation16 + $0x1c0] sm:$0xff]
    %v495 = vld [vmem:[#allocation16 + $0x1c8] sm:$0xff]
    %v496 = vld [vmem:[#allocation16 + $0x1d0] sm:$0xff]
    %v497 = vld [vmem:[#allocation16 + $0x1d8] sm:$0xff]
    %v498 = vld [vmem:[#allocation16 + $0x1e0] sm:$0xff]
    %v499 = vld [vmem:[#allocation16 + $0x1e8] sm:$0xff]
    %v500 = vld [vmem:[#allocation16 + $0x1f0] sm:$0xff]
    %v501 = vld [vmem:[#allocation16 + $0x1f8] sm:$0xff]
    %v502 = vld [vmem:[#allocation17] sm:$0xff]
    %v503 = vld [vmem:[#allocation17 + $0x8] sm:$0xff]
    %v504 = vld [vmem:[#allocation17 + $0x10] sm:$0xff]
    %v505 = vld [vmem:[#allocation17 + $0x18] sm:$0xff]
    %v506 = vld [vmem:[#allocation17 + $0x20] sm:$0xff]
    %v507 = vld [vmem:[#allocation17 + $0x28] sm:$0xff]
    %v508 = vld [vmem:[#allocation17 + $0x30] sm:$0xff]
    %v509 = vld [vmem:[#allocation17 + $0x38] sm:$0xff]
    %v510 = vld [vmem:[#allocation17 + $0x40] sm:$0xff]
    %v511 = vld [vmem:[#allocation17 + $0x48] sm:$0xff]
    %v512 = vld [vmem:[#allocation17 + $0x50] sm:$0xff]
    %v513 = vld [vmem:[#allocation17 + $0x58] sm:$0xff]
    %v514 = vld [vmem:[#allocation17 + $0x60] sm:$0xff]
    %v515 = vld [vmem:[#allocation17 + $0x68] sm:$0xff]
    %v516 = vld [vmem:[#allocation17 + $0x70] sm:$0xff]
    %v517 = vld [vmem:[#allocation17 + $0x78] sm:$0xff]
    %v518 = vld [vmem:[#allocation17 + $0x80] sm:$0xff]
    %v519 = vld [vmem:[#allocation17 + $0x88] sm:$0xff]
    %v520 = vld [vmem:[#allocation17 + $0x90] sm:$0xff]
    %v521 = vld [vmem:[#allocation17 + $0x98] sm:$0xff]
    %v522 = vld [vmem:[#allocation17 + $0xa0] sm:$0xff]
    %v523 = vld [vmem:[#allocation17 + $0xa8] sm:$0xff]
    %v524 = vld [vmem:[#allocation17 + $0xb0] sm:$0xff]
    %v525 = vld [vmem:[#allocation17 + $0xb8] sm:$0xff]
    %v526 = vld [vmem:[#allocation17 + $0xc0] sm:$0xff]
    %v527 = vld [vmem:[#allocation17 + $0xc8] sm:$0xff]
    %v528 = vld [vmem:[#allocation17 + $0xd0] sm:$0xff]
    %v529 = vld [vmem:[#allocation17 + $0xd8] sm:$0xff]
    %v530 = vld [vmem:[#allocation17 + $0xe0] sm:$0xff]
    %v531 = vld [vmem:[#allocation17 + $0xe8] sm:$0xff]
    %v532 = vld [vmem:[#allocation17 + $0xf0] sm:$0xff]
    %v533 = vld [vmem:[#allocation17 + $0xf8] sm:$0xff]
    %v534 = vld [vmem:[#allocation17 + $0x100] sm:$0xff]
    %v535 = vld [vmem:[#allocation17 + $0x108] sm:$0xff]
    %v536 = vld [vmem:[#allocation17 + $0x110] sm:$0xff]
    %v537 = vld [vmem:[#allocation17 + $0x118] sm:$0xff]
    %v538 = vld [vmem:[#allocation17 + $0x120] sm:$0xff]
    %v539 = vld [vmem:[#allocation17 + $0x128] sm:$0xff]
    %v540 = vld [vmem:[#allocation17 + $0x130] sm:$0xff]
    %v541 = vld [vmem:[#allocation17 + $0x138] sm:$0xff]
    %v542 = vld [vmem:[#allocation17 + $0x140] sm:$0xff]
    %v543 = vld [vmem:[#allocation17 + $0x148] sm:$0xff]
    %v544 = vld [vmem:[#allocation17 + $0x150] sm:$0xff]
    %v545 = vld [vmem:[#allocation17 + $0x158] sm:$0xff]
    %v546 = vld [vmem:[#allocation17 + $0x160] sm:$0xff]
    %v547 = vld [vmem:[#allocation17 + $0x168] sm:$0xff]
    %v548 = vld [vmem:[#allocation17 + $0x170] sm:$0xff]
    %v549 = vld [vmem:[#allocation17 + $0x178] sm:$0xff]
    %v550 = vld [vmem:[#allocation17 + $0x180] sm:$0xff]
    %v551 = vld [vmem:[#allocation17 + $0x188] sm:$0xff]
    %v552 = vld [vmem:[#allocation17 + $0x190] sm:$0xff]
    %v553 = vld [vmem:[#allocation17 + $0x198] sm:$0xff]
    %v554 = vld [vmem:[#allocation17 + $0x1a0] sm:$0xff]
    %v555 = vld [vmem:[#allocation17 + $0x1a8] sm:$0xff]
    %v556 = vld [vmem:[#allocation17 + $0x1b0] sm:$0xff]
    %v557 = vld [vmem:[#allocation17 + $0x1b8] sm:$0xff]
    %v558 = vld [vmem:[#allocation17 + $0x1c0] sm:$0xff]
    %v559 = vld [vmem:[#allocation17 + $0x1c8] sm:$0xff]
    %v560 = vld [vmem:[#allocation17 + $0x1d0] sm:$0xff]
    %v561 = vld [vmem:[#allocation17 + $0x1d8] sm:$0xff]
    %v562 = vld [vmem:[#allocation17 + $0x1e0] sm:$0xff]
    %v563 = vld [vmem:[#allocation17 + $0x1e8] sm:$0xff]
    %v564 = vld [vmem:[#allocation17 + $0x1f0] sm:$0xff]
    %v565 = vld [vmem:[#allocation17 + $0x1f8] sm:$0xff]
    %v566 = vld [vmem:[#allocation19] sm:$0xff]
    %v567 = vld [vmem:[#allocation19 + $0x8] sm:$0xff]
    %v568 = vld [vmem:[#allocation19 + $0x10] sm:$0xff]
    %v569 = vld [vmem:[#allocation19 + $0x18] sm:$0xff]
    %v570 = vld [vmem:[#allocation19 + $0x20] sm:$0xff]
    %v571 = vld [vmem:[#allocation19 + $0x28] sm:$0xff]
    %v572 = vld [vmem:[#allocation19 + $0x30] sm:$0xff]
    %v573 = vld [vmem:[#allocation19 + $0x38] sm:$0xff]
    %v574 = vld [vmem:[#allocation19 + $0x40] sm:$0xff]
    %v575 = vld [vmem:[#allocation19 + $0x48] sm:$0xff]
    %v576 = vld [vmem:[#allocation19 + $0x50] sm:$0xff]
    %v577 = vld [vmem:[#allocation19 + $0x58] sm:$0xff]
    %v578 = vld [vmem:[#allocation19 + $0x60] sm:$0xff]
    %v579 = vld [vmem:[#allocation19 + $0x68] sm:$0xff]
    %v580 = vld [vmem:[#allocation19 + $0x70] sm:$0xff]
    %v581 = vld [vmem:[#allocation19 + $0x78] sm:$0xff]
    %v582 = vld [vmem:[#allocation19 + $0x80] sm:$0xff]
    %v583 = vld [vmem:[#allocation19 + $0x88] sm:$0xff]
    %v584 = vld [vmem:[#allocation19 + $0x90] sm:$0xff]
    %v585 = vld [vmem:[#allocation19 + $0x98] sm:$0xff]
    %v586 = vld [vmem:[#allocation19 + $0xa0] sm:$0xff]
    %v587 = vld [vmem:[#allocation19 + $0xa8] sm:$0xff]
    %v588 = vld [vmem:[#allocation19 + $0xb0] sm:$0xff]
    %v589 = vld [vmem:[#allocation19 + $0xb8] sm:$0xff]
    %v590 = vld [vmem:[#allocation19 + $0xc0] sm:$0xff]
    %v591 = vld [vmem:[#allocation19 + $0xc8] sm:$0xff]
    %v592 = vld [vmem:[#allocation19 + $0xd0] sm:$0xff]
    %v593 = vld [vmem:[#allocation19 + $0xd8] sm:$0xff]
    %v594 = vld [vmem:[#allocation19 + $0xe0] sm:$0xff]
    %v595 = vld [vmem:[#allocation19 + $0xe8] sm:$0xff]
    %v596 = vld [vmem:[#allocation19 + $0xf0] sm:$0xff]
    %v597 = vld [vmem:[#allocation19 + $0xf8] sm:$0xff]
    %v598 = vld [vmem:[#allocation19 + $0x100] sm:$0xff]
    %v599 = vld [vmem:[#allocation19 + $0x108] sm:$0xff]
    %v600 = vld [vmem:[#allocation19 + $0x110] sm:$0xff]
    %v601 = vld [vmem:[#allocation19 + $0x118] sm:$0xff]
    %v602 = vld [vmem:[#allocation19 + $0x120] sm:$0xff]
    %v603 = vld [vmem:[#allocation19 + $0x128] sm:$0xff]
    %v604 = vld [vmem:[#allocation19 + $0x130] sm:$0xff]
    %v605 = vld [vmem:[#allocation19 + $0x138] sm:$0xff]
    %v606 = vld [vmem:[#allocation19 + $0x140] sm:$0xff]
    %v607 = vld [vmem:[#allocation19 + $0x148] sm:$0xff]
    %v608 = vld [vmem:[#allocation19 + $0x150] sm:$0xff]
    %v609 = vld [vmem:[#allocation19 + $0x158] sm:$0xff]
    %v610 = vld [vmem:[#allocation19 + $0x160] sm:$0xff]
    %v611 = vld [vmem:[#allocation19 + $0x168] sm:$0xff]
    %v612 = vld [vmem:[#allocation19 + $0x170] sm:$0xff]
    %v613 = vld [vmem:[#allocation19 + $0x178] sm:$0xff]
    %v614 = vld [vmem:[#allocation19 + $0x180] sm:$0xff]
    %v615 = vld [vmem:[#allocation19 + $0x188] sm:$0xff]
    %v616 = vld [vmem:[#allocation19 + $0x190] sm:$0xff]
    %v617 = vld [vmem:[#allocation19 + $0x198] sm:$0xff]
    %v618 = vld [vmem:[#allocation19 + $0x1a0] sm:$0xff]
    %v619 = vld [vmem:[#allocation19 + $0x1a8] sm:$0xff]
    %v620 = vld [vmem:[#allocation19 + $0x1b0] sm:$0xff]
    %v621 = vld [vmem:[#allocation19 + $0x1b8] sm:$0xff]
    %v622 = vld [vmem:[#allocation19 + $0x1c0] sm:$0xff]
    %v623 = vld [vmem:[#allocation19 + $0x1c8] sm:$0xff]
    %v624 = vld [vmem:[#allocation19 + $0x1d0] sm:$0xff]
    %v625 = vld [vmem:[#allocation19 + $0x1d8] sm:$0xff]
    %v626 = vld [vmem:[#allocation19 + $0x1e0] sm:$0xff]
    %v627 = vld [vmem:[#allocation19 + $0x1e8] sm:$0xff]
    %v628 = vld [vmem:[#allocation19 + $0x1f0] sm:$0xff]
    %v629 = vld [vmem:[#allocation19 + $0x1f8] sm:$0xff]
    %v630 = vld [vmem:[#allocation20] sm:$0xff]
    %v631 = vld [vmem:[#allocation20 + $0x8] sm:$0xff]
    %v632 = vld [vmem:[#allocation20 + $0x10] sm:$0xff]
    %v633 = vld [vmem:[#allocation20 + $0x18] sm:$0xff]
    %v634 = vld [vmem:[#allocation20 + $0x20] sm:$0xff]
    %v635 = vld [vmem:[#allocation20 + $0x28] sm:$0xff]
    %v636 = vld [vmem:[#allocation20 + $0x30] sm:$0xff]
    %v637 = vld [vmem:[#allocation20 + $0x38] sm:$0xff]
    %v638 = vld [vmem:[#allocation20 + $0x40] sm:$0xff]
    %v639 = vld [vmem:[#allocation20 + $0x48] sm:$0xff]
    %v640 = vld [vmem:[#allocation20 + $0x50] sm:$0xff]
    %v641 = vld [vmem:[#allocation20 + $0x58] sm:$0xff]
    %v642 = vld [vmem:[#allocation20 + $0x60] sm:$0xff]
    %v643 = vld [vmem:[#allocation20 + $0x68] sm:$0xff]
    %v644 = vld [vmem:[#allocation20 + $0x70] sm:$0xff]
    %v645 = vld [vmem:[#allocation20 + $0x78] sm:$0xff]
    %v646 = vld [vmem:[#allocation20 + $0x80] sm:$0xff]
    %v647 = vld [vmem:[#allocation20 + $0x88] sm:$0xff]
    %v648 = vld [vmem:[#allocation20 + $0x90] sm:$0xff]
    %v649 = vld [vmem:[#allocation20 + $0x98] sm:$0xff]
    %v650 = vld [vmem:[#allocation20 + $0xa0] sm:$0xff]
    %v651 = vld [vmem:[#allocation20 + $0xa8] sm:$0xff]
    %v652 = vld [vmem:[#allocation20 + $0xb0] sm:$0xff]
    %v653 = vld [vmem:[#allocation20 + $0xb8] sm:$0xff]
    %v654 = vld [vmem:[#allocation20 + $0xc0] sm:$0xff]
    %v655 = vld [vmem:[#allocation20 + $0xc8] sm:$0xff]
    %v656 = vld [vmem:[#allocation20 + $0xd0] sm:$0xff]
    %v657 = vld [vmem:[#allocation20 + $0xd8] sm:$0xff]
    %v658 = vld [vmem:[#allocation20 + $0xe0] sm:$0xff]
    %v659 = vld [vmem:[#allocation20 + $0xe8] sm:$0xff]
    %v660 = vld [vmem:[#allocation20 + $0xf0] sm:$0xff]
    %v661 = vld [vmem:[#allocation20 + $0xf8] sm:$0xff]
    %v662 = vld [vmem:[#allocation20 + $0x100] sm:$0xff]
    %v663 = vld [vmem:[#allocation20 + $0x108] sm:$0xff]
    %v664 = vld [vmem:[#allocation20 + $0x110] sm:$0xff]
    %v665 = vld [vmem:[#allocation20 + $0x118] sm:$0xff]
    %v666 = vld [vmem:[#allocation20 + $0x120] sm:$0xff]
    %v667 = vld [vmem:[#allocation20 + $0x128] sm:$0xff]
    %v668 = vld [vmem:[#allocation20 + $0x130] sm:$0xff]
    %v669 = vld [vmem:[#allocation20 + $0x138] sm:$0xff]
    %v670 = vld [vmem:[#allocation20 + $0x140] sm:$0xff]
    %v671 = vld [vmem:[#allocation20 + $0x148] sm:$0xff]
    %v672 = vld [vmem:[#allocation20 + $0x150] sm:$0xff]
    %v673 = vld [vmem:[#allocation20 + $0x158] sm:$0xff]
    %v674 = vld [vmem:[#allocation20 + $0x160] sm:$0xff]
    %v675 = vld [vmem:[#allocation20 + $0x168] sm:$0xff]
    %v676 = vld [vmem:[#allocation20 + $0x170] sm:$0xff]
    %v677 = vld [vmem:[#allocation20 + $0x178] sm:$0xff]
    %v678 = vld [vmem:[#allocation20 + $0x180] sm:$0xff]
    %v679 = vld [vmem:[#allocation20 + $0x188] sm:$0xff]
    %v680 = vld [vmem:[#allocation20 + $0x190] sm:$0xff]
    %v681 = vld [vmem:[#allocation20 + $0x198] sm:$0xff]
    %v682 = vld [vmem:[#allocation20 + $0x1a0] sm:$0xff]
    %v683 = vld [vmem:[#allocation20 + $0x1a8] sm:$0xff]
    %v684 = vld [vmem:[#allocation20 + $0x1b0] sm:$0xff]
    %v685 = vld [vmem:[#allocation20 + $0x1b8] sm:$0xff]
    %v686 = vld [vmem:[#allocation20 + $0x1c0] sm:$0xff]
    %v687 = vld [vmem:[#allocation20 + $0x1c8] sm:$0xff]
    %v688 = vld [vmem:[#allocation20 + $0x1d0] sm:$0xff]
    %v689 = vld [vmem:[#allocation20 + $0x1d8] sm:$0xff]
    %v690 = vld [vmem:[#allocation20 + $0x1e0] sm:$0xff]
    %v691 = vld [vmem:[#allocation20 + $0x1e8] sm:$0xff]
    %v692 = vld [vmem:[#allocation20 + $0x1f0] sm:$0xff]
    %v693 = vld [vmem:[#allocation20 + $0x1f8] sm:$0xff]
    %v694 = vld [vmem:[#allocation22] sm:$0xff]
    %v695 = vld [vmem:[#allocation22 + $0x8] sm:$0xff]
    %v696 = vld [vmem:[#allocation22 + $0x10] sm:$0xff]
    %v697 = vld [vmem:[#allocation22 + $0x18] sm:$0xff]
    %v698 = vld [vmem:[#allocation22 + $0x20] sm:$0xff]
    %v699 = vld [vmem:[#allocation22 + $0x28] sm:$0xff]
    %v700 = vld [vmem:[#allocation22 + $0x30] sm:$0xff]
    %v701 = vld [vmem:[#allocation22 + $0x38] sm:$0xff]
    %v702 = vld [vmem:[#allocation22 + $0x40] sm:$0xff]
    %v703 = vld [vmem:[#allocation22 + $0x48] sm:$0xff]
    %v704 = vld [vmem:[#allocation22 + $0x50] sm:$0xff]
    %v705 = vld [vmem:[#allocation22 + $0x58] sm:$0xff]
    %v706 = vld [vmem:[#allocation22 + $0x60] sm:$0xff]
    %v707 = vld [vmem:[#allocation22 + $0x68] sm:$0xff]
    %v708 = vld [vmem:[#allocation22 + $0x70] sm:$0xff]
    %v709 = vld [vmem:[#allocation22 + $0x78] sm:$0xff]
    %v710 = vld [vmem:[#allocation22 + $0x80] sm:$0xff]
    %v711 = vld [vmem:[#allocation22 + $0x88] sm:$0xff]
    %v712 = vld [vmem:[#allocation22 + $0x90] sm:$0xff]
    %v713 = vld [vmem:[#allocation22 + $0x98] sm:$0xff]
    %v714 = vld [vmem:[#allocation22 + $0xa0] sm:$0xff]
    %v715 = vld [vmem:[#allocation22 + $0xa8] sm:$0xff]
    %v716 = vld [vmem:[#allocation22 + $0xb0] sm:$0xff]
    %v717 = vld [vmem:[#allocation22 + $0xb8] sm:$0xff]
    %v718 = vld [vmem:[#allocation22 + $0xc0] sm:$0xff]
    %v719 = vld [vmem:[#allocation22 + $0xc8] sm:$0xff]
    %v720 = vld [vmem:[#allocation22 + $0xd0] sm:$0xff]
    %v721 = vld [vmem:[#allocation22 + $0xd8] sm:$0xff]
    %v722 = vld [vmem:[#allocation22 + $0xe0] sm:$0xff]
    %v723 = vld [vmem:[#allocation22 + $0xe8] sm:$0xff]
    %v724 = vld [vmem:[#allocation22 + $0xf0] sm:$0xff]
    %v725 = vld [vmem:[#allocation22 + $0xf8] sm:$0xff]
    %v726 = vld [vmem:[#allocation22 + $0x100] sm:$0xff]
    %v727 = vld [vmem:[#allocation22 + $0x108] sm:$0xff]
    %v728 = vld [vmem:[#allocation22 + $0x110] sm:$0xff]
    %v729 = vld [vmem:[#allocation22 + $0x118] sm:$0xff]
    %v730 = vld [vmem:[#allocation22 + $0x120] sm:$0xff]
    %v731 = vld [vmem:[#allocation22 + $0x128] sm:$0xff]
    %v732 = vld [vmem:[#allocation22 + $0x130] sm:$0xff]
    %v733 = vld [vmem:[#allocation22 + $0x138] sm:$0xff]
    %v734 = vld [vmem:[#allocation22 + $0x140] sm:$0xff]
    %v735 = vld [vmem:[#allocation22 + $0x148] sm:$0xff]
    %v736 = vld [vmem:[#allocation22 + $0x150] sm:$0xff]
    %v737 = vld [vmem:[#allocation22 + $0x158] sm:$0xff]
    %v738 = vld [vmem:[#allocation22 + $0x160] sm:$0xff]
    %v739 = vld [vmem:[#allocation22 + $0x168] sm:$0xff]
    %v740 = vld [vmem:[#allocation22 + $0x170] sm:$0xff]
    %v741 = vld [vmem:[#allocation22 + $0x178] sm:$0xff]
    %v742 = vld [vmem:[#allocation22 + $0x180] sm:$0xff]
    %v743 = vld [vmem:[#allocation22 + $0x188] sm:$0xff]
    %v744 = vld [vmem:[#allocation22 + $0x190] sm:$0xff]
    %v745 = vld [vmem:[#allocation22 + $0x198] sm:$0xff]
    %v746 = vld [vmem:[#allocation22 + $0x1a0] sm:$0xff]
    %v747 = vld [vmem:[#allocation22 + $0x1a8] sm:$0xff]
    %v748 = vld [vmem:[#allocation22 + $0x1b0] sm:$0xff]
    %v749 = vld [vmem:[#allocation22 + $0x1b8] sm:$0xff]
    %v750 = vld [vmem:[#allocation22 + $0x1c0] sm:$0xff]
    %v751 = vld [vmem:[#allocation22 + $0x1c8] sm:$0xff]
    %v752 = vld [vmem:[#allocation22 + $0x1d0] sm:$0xff]
    %v753 = vld [vmem:[#allocation22 + $0x1d8] sm:$0xff]
    %v754 = vld [vmem:[#allocation22 + $0x1e0] sm:$0xff]
    %v755 = vld [vmem:[#allocation22 + $0x1e8] sm:$0xff]
    %v756 = vld [vmem:[#allocation22 + $0x1f0] sm:$0xff]
    %v757 = vld [vmem:[#allocation22 + $0x1f8] sm:$0xff]
    %v758 = vld [vmem:[#allocation23] sm:$0xff]
    %v759 = vld [vmem:[#allocation23 + $0x8] sm:$0xff]
    %v760 = vld [vmem:[#allocation23 + $0x10] sm:$0xff]
    %v761 = vld [vmem:[#allocation23 + $0x18] sm:$0xff]
    %v762 = vld [vmem:[#allocation23 + $0x20] sm:$0xff]
    %v763 = vld [vmem:[#allocation23 + $0x28] sm:$0xff]
    %v764 = vld [vmem:[#allocation23 + $0x30] sm:$0xff]
    %v765 = vld [vmem:[#allocation23 + $0x38] sm:$0xff]
    %v766 = vld [vmem:[#allocation23 + $0x40] sm:$0xff]
    %v767 = vld [vmem:[#allocation23 + $0x48] sm:$0xff]
    %v768 = vld [vmem:[#allocation23 + $0x50] sm:$0xff]
    %v769 = vld [vmem:[#allocation23 + $0x58] sm:$0xff]
    %v770 = vld [vmem:[#allocation23 + $0x60] sm:$0xff]
    %v771 = vld [vmem:[#allocation23 + $0x68] sm:$0xff]
    %v772 = vld [vmem:[#allocation23 + $0x70] sm:$0xff]
    %v773 = vld [vmem:[#allocation23 + $0x78] sm:$0xff]
    %v774 = vld [vmem:[#allocation23 + $0x80] sm:$0xff]
    %v775 = vld [vmem:[#allocation23 + $0x88] sm:$0xff]
    %v776 = vld [vmem:[#allocation23 + $0x90] sm:$0xff]
    %v777 = vld [vmem:[#allocation23 + $0x98] sm:$0xff]
    %v778 = vld [vmem:[#allocation23 + $0xa0] sm:$0xff]
    %v779 = vld [vmem:[#allocation23 + $0xa8] sm:$0xff]
    %v780 = vld [vmem:[#allocation23 + $0xb0] sm:$0xff]
    %v781 = vld [vmem:[#allocation23 + $0xb8] sm:$0xff]
    %v782 = vld [vmem:[#allocation23 + $0xc0] sm:$0xff]
    %v783 = vld [vmem:[#allocation23 + $0xc8] sm:$0xff]
    %v784 = vld [vmem:[#allocation23 + $0xd0] sm:$0xff]
    %v785 = vld [vmem:[#allocation23 + $0xd8] sm:$0xff]
    %v786 = vld [vmem:[#allocation23 + $0xe0] sm:$0xff]
    %v787 = vld [vmem:[#allocation23 + $0xe8] sm:$0xff]
    %v788 = vld [vmem:[#allocation23 + $0xf0] sm:$0xff]
    %v789 = vld [vmem:[#allocation23 + $0xf8] sm:$0xff]
    %v790 = vld [vmem:[#allocation23 + $0x100] sm:$0xff]
    %v791 = vld [vmem:[#allocation23 + $0x108] sm:$0xff]
    %v792 = vld [vmem:[#allocation23 + $0x110] sm:$0xff]
    %v793 = vld [vmem:[#allocation23 + $0x118] sm:$0xff]
    %v794 = vld [vmem:[#allocation23 + $0x120] sm:$0xff]
    %v795 = vld [vmem:[#allocation23 + $0x128] sm:$0xff]
    %v796 = vld [vmem:[#allocation23 + $0x130] sm:$0xff]
    %v797 = vld [vmem:[#allocation23 + $0x138] sm:$0xff]
    %v798 = vld [vmem:[#allocation23 + $0x140] sm:$0xff]
    %v799 = vld [vmem:[#allocation23 + $0x148] sm:$0xff]
    %v800 = vld [vmem:[#allocation23 + $0x150] sm:$0xff]
    %v801 = vld [vmem:[#allocation23 + $0x158] sm:$0xff]
    %v802 = vld [vmem:[#allocation23 + $0x160] sm:$0xff]
    %v803 = vld [vmem:[#allocation23 + $0x168] sm:$0xff]
    %v804 = vld [vmem:[#allocation23 + $0x170] sm:$0xff]
    %v805 = vld [vmem:[#allocation23 + $0x178] sm:$0xff]
    %v806 = vld [vmem:[#allocation23 + $0x180] sm:$0xff]
    %v807 = vld [vmem:[#allocation23 + $0x188] sm:$0xff]
    %v808 = vld [vmem:[#allocation23 + $0x190] sm:$0xff]
    %v809 = vld [vmem:[#allocation23 + $0x198] sm:$0xff]
    %v810 = vld [vmem:[#allocation23 + $0x1a0] sm:$0xff]
    %v811 = vld [vmem:[#allocation23 + $0x1a8] sm:$0xff]
    %v812 = vld [vmem:[#allocation23 + $0x1b0] sm:$0xff]
    %v813 = vld [vmem:[#allocation23 + $0x1b8] sm:$0xff]
    %v814 = vld [vmem:[#allocation23 + $0x1c0] sm:$0xff]
    %v815 = vld [vmem:[#allocation23 + $0x1c8] sm:$0xff]
    %v816 = vld [vmem:[#allocation23 + $0x1d0] sm:$0xff]
    %v817 = vld [vmem:[#allocation23 + $0x1d8] sm:$0xff]
    %v818 = vld [vmem:[#allocation23 + $0x1e0] sm:$0xff]
    %v819 = vld [vmem:[#allocation23 + $0x1e8] sm:$0xff]
    %v820 = vld [vmem:[#allocation23 + $0x1f0] sm:$0xff]
    %v821 = vld [vmem:[#allocation23 + $0x1f8] sm:$0xff]
    %v822 = vld [vmem:[#allocation2] sm:$0xff]
    %v823 = vld [vmem:[#allocation2 + $0x8] sm:$0xff]
    %v824 = vld [vmem:[#allocation2 + $0x10] sm:$0xff]
    %v825 = vld [vmem:[#allocation2 + $0x18] sm:$0xff]
    %v826 = vld [vmem:[#allocation2 + $0x20] sm:$0xff]
    %v827 = vld [vmem:[#allocation2 + $0x28] sm:$0xff]
    %v828 = vld [vmem:[#allocation2 + $0x30] sm:$0xff]
    %v829 = vld [vmem:[#allocation2 + $0x38] sm:$0xff]
    %v830 = vld [vmem:[#allocation5] sm:$0xff]
    %v831 = vld [vmem:[#allocation5 + $0x8] sm:$0xff]
    %v832 = vld [vmem:[#allocation5 + $0x10] sm:$0xff]
    %v833 = vld [vmem:[#allocation5 + $0x18] sm:$0xff]
    %v834 = vld [vmem:[#allocation5 + $0x20] sm:$0xff]
    %v835 = vld [vmem:[#allocation5 + $0x28] sm:$0xff]
    %v836 = vld [vmem:[#allocation5 + $0x30] sm:$0xff]
    %v837 = vld [vmem:[#allocation5 + $0x38] sm:$0xff]
    %v838 = vld [vmem:[#allocation25] sm:$0xff]
    %v839 = vld [vmem:[#allocation25 + $0x8] sm:$0xff]
    %v840 = vld [vmem:[#allocation25 + $0x10] sm:$0xff]
    %v841 = vld [vmem:[#allocation25 + $0x18] sm:$0xff]
    %v842 = vld [vmem:[#allocation25 + $0x20] sm:$0xff]
    %v843 = vld [vmem:[#allocation25 + $0x28] sm:$0xff]
    %v844 = vld [vmem:[#allocation25 + $0x30] sm:$0xff]
    %v845 = vld [vmem:[#allocation25 + $0x38] sm:$0xff]
    %v846 = vld [vmem:[#allocation26] sm:$0xff]
    %v847 = vld [vmem:[#allocation26 + $0x8] sm:$0xff]
    %v848 = vld [vmem:[#allocation26 + $0x10] sm:$0xff]
    %v849 = vld [vmem:[#allocation26 + $0x18] sm:$0xff]
    %v850 = vld [vmem:[#allocation26 + $0x20] sm:$0xff]
    %v851 = vld [vmem:[#allocation26 + $0x28] sm:$0xff]
    %v852 = vld [vmem:[#allocation26 + $0x30] sm:$0xff]
    %v853 = vld [vmem:[#allocation26 + $0x38] sm:$0xff]
    %v854 = vadd.f32 %v822, %v830
    %v855 = vadd.f32 %v823, %v831
    %v856 = vadd.f32 %v824, %v832
    %v857 = vadd.f32 %v825, %v833
    %v858 = vadd.f32 %v826, %v834
    %v859 = vadd.f32 %v827, %v835
    %v860 = vadd.f32 %v828, %v836
    %v861 = vadd.f32 %v829, %v837
    %vm862 = vcmask 261120
    %v864 = vsel %vm862, %v414, 0
    %v867 = vsel %vm862, %v415, 0
    %v870 = vsel %vm862, %v416, 0
    %v873 = vsel %vm862, %v417, 0
    %875 = vmatpush.msra.mxu0 0.0
    %876 = vmatpush.msra.mxu0 0.0
    %877 = vmatpush.msra.mxu0 0.0
    %878 = vmatpush.msra.mxu0 0.0
    %879 = vmatpush.msra.mxu0 0.0
    %880 = vmatpush.msra.mxu0 0.0
    %881 = vmatpush.msra.mxu0 0.0
    %882 = vmatpush.msra.mxu0 0.0
    %883 = vmatpush.msra.mxu0 0.0
    %884 = vmatpush.msra.mxu0 0.0
    %885 = vmatpush.msra.mxu0 0.0
    %886 = vmatpush.msra.mxu0 0.0
    %887 = vmatpush.msra.mxu0 %v828
    %888 = vmatpush.msra.mxu0 %v826
    %889 = vmatpush.msra.mxu0 %v824
    %890 = vmatpush.msra.mxu0 %v822
    %891 = vmatmul.f32.gmra.mxu0 %v864
    %v892 = vpop.f32.mrf.mxu0
    %v893 = vadd.f32 0.0, %v892
    %894 = vmatmul.f32.gmra.mxu0 %v867
    %v895 = vpop.f32.mrf.mxu0
    %v896 = vadd.f32 0.0, %v895
    %897 = vmatmul.f32.gmra.mxu0 %v870
    %v898 = vpop.f32.mrf.mxu0
    %v899 = vadd.f32 0.0, %v898
    %900 = vmatmul.f32.gmra.mxu0 %v873
    %v901 = vpop.f32.mrf.mxu0
    %v902 = vadd.f32 0.0, %v901
    %903 = vdwg.mxu0
    %904 = vmatpush.msra.mxu0 0.0
    %905 = vmatpush.msra.mxu0 0.0
    %906 = vmatpush.msra.mxu0 0.0
    %907 = vmatpush.msra.mxu0 0.0
    %908 = vmatpush.msra.mxu0 0.0
    %909 = vmatpush.msra.mxu0 0.0
    %910 = vmatpush.msra.mxu0 0.0
    %911 = vmatpush.msra.mxu0 0.0
    %912 = vmatpush.msra.mxu0 0.0
    %913 = vmatpush.msra.mxu0 0.0
    %914 = vmatpush.msra.mxu0 0.0
    %915 = vmatpush.msra.mxu0 0.0
    %916 = vmatpush.msra.mxu0 %v829
    %917 = vmatpush.msra.mxu0 %v827
    %918 = vmatpush.msra.mxu0 %v825
    %919 = vmatpush.msra.mxu0 %v823
    %920 = vmatmul.f32.gmra.mxu0 %v864
    %v921 = vpop.f32.mrf.mxu0
    %v922 = vadd.f32 0.0, %v921
    %923 = vmatmul.f32.gmra.mxu0 %v867
    %v924 = vpop.f32.mrf.mxu0
    %v925 = vadd.f32 0.0, %v924
    %926 = vmatmul.f32.gmra.mxu0 %v870
    %v927 = vpop.f32.mrf.mxu0
    %v928 = vadd.f32 0.0, %v927
    %929 = vmatmul.f32.gmra.mxu0 %v873
    %v930 = vpop.f32.mrf.mxu0
    %v931 = vadd.f32 0.0, %v930
    %932 = vdwg.mxu0
    %v934 = vsel %vm862, %v418, 0
    %v937 = vsel %vm862, %v419, 0
    %v940 = vsel %vm862, %v420, 0
    %v943 = vsel %vm862, %v421, 0
    %945 = vmatpush.msra.mxu0 0.0
    %946 = vmatpush.msra.mxu0 0.0
    %947 = vmatpush.msra.mxu0 0.0
    %948 = vmatpush.msra.mxu0 0.0
    %949 = vmatpush.msra.mxu0 0.0
    %950 = vmatpush.msra.mxu0 0.0
    %951 = vmatpush.msra.mxu0 0.0
    %952 = vmatpush.msra.mxu0 0.0
    %953 = vmatpush.msra.mxu0 0.0
    %954 = vmatpush.msra.mxu0 0.0
    %955 = vmatpush.msra.mxu0 0.0
    %956 = vmatpush.msra.mxu0 0.0
    %957 = vmatpush.msra.mxu0 %v836
    %958 = vmatpush.msra.mxu0 %v834
    %959 = vmatpush.msra.mxu0 %v832
    %960 = vmatpush.msra.mxu0 %v830
    %961 = vmatmul.f32.gmra.mxu0 %v934
    %v962 = vpop.f32.mrf.mxu0
    %v963 = vadd.f32 0.0, %v962
    %964 = vmatmul.f32.gmra.mxu0 %v937
    %v965 = vpop.f32.mrf.mxu0
    %v966 = vadd.f32 0.0, %v965
    %967 = vmatmul.f32.gmra.mxu0 %v940
    %v968 = vpop.f32.mrf.mxu0
    %v969 = vadd.f32 0.0, %v968
    %970 = vmatmul.f32.gmra.mxu0 %v943
    %v971 = vpop.f32.mrf.mxu0
    %v972 = vadd.f32 0.0, %v971
    %973 = vdwg.mxu0
    %974 = vmatpush.msra.mxu0 0.0
    %975 = vmatpush.msra.mxu0 0.0
    %976 = vmatpush.msra.mxu0 0.0
    %977 = vmatpush.msra.mxu0 0.0
    %978 = vmatpush.msra.mxu0 0.0
    %979 = vmatpush.msra.mxu0 0.0
    %980 = vmatpush.msra.mxu0 0.0
    %981 = vmatpush.msra.mxu0 0.0
    %982 = vmatpush.msra.mxu0 0.0
    %983 = vmatpush.msra.mxu0 0.0
    %984 = vmatpush.msra.mxu0 0.0
    %985 = vmatpush.msra.mxu0 0.0
    %986 = vmatpush.msra.mxu0 %v837
    %987 = vmatpush.msra.mxu0 %v835
    %988 = vmatpush.msra.mxu0 %v833
    %989 = vmatpush.msra.mxu0 %v831
    %990 = vmatmul.f32.gmra.mxu0 %v934
    %v991 = vpop.f32.mrf.mxu0
    %v992 = vadd.f32 0.0, %v991
    %993 = vmatmul.f32.gmra.mxu0 %v937
    %v994 = vpop.f32.mrf.mxu0
    %v995 = vadd.f32 0.0, %v994
    %996 = vmatmul.f32.gmra.mxu0 %v940
    %v997 = vpop.f32.mrf.mxu0
    %v998 = vadd.f32 0.0, %v997
    %999 = vmatmul.f32.gmra.mxu0 %v943
    %v1000 = vpop.f32.mrf.mxu0
    %v1001 = vadd.f32 0.0, %v1000
    %1002 = vdwg.mxu0
    %v1004 = vsel %vm862, %v422, 0
    %v1007 = vsel %vm862, %v423, 0
    %v1010 = vsel %vm862, %v424, 0
    %v1013 = vsel %vm862, %v425, 0
    %1015 = vmatpush.msra.mxu0 0.0
    %1016 = vmatpush.msra.mxu0 0.0
    %1017 = vmatpush.msra.mxu0 0.0
    %1018 = vmatpush.msra.mxu0 0.0
    %1019 = vmatpush.msra.mxu0 0.0
    %1020 = vmatpush.msra.mxu0 0.0
    %1021 = vmatpush.msra.mxu0 0.0
    %1022 = vmatpush.msra.mxu0 0.0
    %1023 = vmatpush.msra.mxu0 0.0
    %1024 = vmatpush.msra.mxu0 0.0
    %1025 = vmatpush.msra.mxu0 0.0
    %1026 = vmatpush.msra.mxu0 0.0
    %1027 = vmatpush.msra.mxu0 %v860
    %1028 = vmatpush.msra.mxu0 %v858
    %1029 = vmatpush.msra.mxu0 %v856
    %1030 = vmatpush.msra.mxu0 %v854
    %1031 = vmatmul.f32.gmra.mxu0 %v1004
    %v1032 = vpop.f32.mrf.mxu0
    %v1033 = vadd.f32 0.0, %v1032
    %1034 = vmatmul.f32.gmra.mxu0 %v1007
    %v1035 = vpop.f32.mrf.mxu0
    %v1036 = vadd.f32 0.0, %v1035
    %1037 = vmatmul.f32.gmra.mxu0 %v1010
    %v1038 = vpop.f32.mrf.mxu0
    %v1039 = vadd.f32 0.0, %v1038
    %1040 = vmatmul.f32.gmra.mxu0 %v1013
    %v1041 = vpop.f32.mrf.mxu0
    %v1042 = vadd.f32 0.0, %v1041
    %1043 = vdwg.mxu0
    %1044 = vmatpush.msra.mxu0 0.0
    %1045 = vmatpush.msra.mxu0 0.0
    %1046 = vmatpush.msra.mxu0 0.0
    %1047 = vmatpush.msra.mxu0 0.0
    %1048 = vmatpush.msra.mxu0 0.0
    %1049 = vmatpush.msra.mxu0 0.0
    %1050 = vmatpush.msra.mxu0 0.0
    %1051 = vmatpush.msra.mxu0 0.0
    %1052 = vmatpush.msra.mxu0 0.0
    %1053 = vmatpush.msra.mxu0 0.0
    %1054 = vmatpush.msra.mxu0 0.0
    %1055 = vmatpush.msra.mxu0 0.0
    %1056 = vmatpush.msra.mxu0 %v861
    %1057 = vmatpush.msra.mxu0 %v859
    %1058 = vmatpush.msra.mxu0 %v857
    %1059 = vmatpush.msra.mxu0 %v855
    %1060 = vmatmul.f32.gmra.mxu0 %v1004
    %v1061 = vpop.f32.mrf.mxu0
    %v1062 = vadd.f32 0.0, %v1061
    %1063 = vmatmul.f32.gmra.mxu0 %v1007
    %v1064 = vpop.f32.mrf.mxu0
    %v1065 = vadd.f32 0.0, %v1064
    %1066 = vmatmul.f32.gmra.mxu0 %v1010
    %v1067 = vpop.f32.mrf.mxu0
    %v1068 = vadd.f32 0.0, %v1067
    %1069 = vmatmul.f32.gmra.mxu0 %v1013
    %v1070 = vpop.f32.mrf.mxu0
    %v1071 = vadd.f32 0.0, %v1070
    %1072 = vdwg.mxu0
    %v1073 = vsub.f32 %v893, %v963
    %v1074 = vsub.f32 %v922, %v992
    %v1075 = vsub.f32 %v896, %v966
    %v1076 = vsub.f32 %v925, %v995
    %v1077 = vsub.f32 %v899, %v969
    %v1078 = vsub.f32 %v928, %v998
    %v1079 = vsub.f32 %v902, %v972
    %v1080 = vsub.f32 %v931, %v1001
    %v1081 = vsub.f32 %v1033, %v893
    %v1082 = vsub.f32 %v1062, %v922
    %v1083 = vsub.f32 %v1036, %v896
    %v1084 = vsub.f32 %v1065, %v925
    %v1085 = vsub.f32 %v1039, %v899
    %v1086 = vsub.f32 %v1068, %v928
    %v1087 = vsub.f32 %v1042, %v902
    %v1088 = vsub.f32 %v1071, %v931
    %v1089 = vsub.f32 %v1081, %v963
    %v1090 = vsub.f32 %v1082, %v992
    %v1091 = vsub.f32 %v1083, %v966
    %v1092 = vsub.f32 %v1084, %v995
    %v1093 = vsub.f32 %v1085, %v969
    %v1094 = vsub.f32 %v1086, %v998
    %v1095 = vsub.f32 %v1087, %v972
    %v1096 = vsub.f32 %v1088, %v1001
    %v1097 = vadd.f32 %v1073, %v1089
    %v1098 = vadd.f32 %v1074, %v1090
    %v1099 = vadd.f32 %v1075, %v1091
    %v1100 = vadd.f32 %v1076, %v1092
    %v1101 = vadd.f32 %v1077, %v1093
    %v1102 = vadd.f32 %v1078, %v1094
    %v1103 = vadd.f32 %v1079, %v1095
    %v1104 = vadd.f32 %v1080, %v1096
    %1105 = vmatpush.msra.mxu0 %v468
    %1106 = vmatpush.msra.mxu0 %v466
    %1107 = vmatpush.msra.mxu0 %v464
    %1108 = vmatpush.msra.mxu0 %v462
    %1109 = vmatpush.msra.mxu0 %v460
    %1110 = vmatpush.msra.mxu0 %v458
    %1111 = vmatpush.msra.mxu0 %v456
    %1112 = vmatpush.msra.mxu0 %v454
    %1113 = vmatpush.msra.mxu0 %v452
    %1114 = vmatpush.msra.mxu0 %v450
    %1115 = vmatpush.msra.mxu0 %v448
    %1116 = vmatpush.msra.mxu0 %v446
    %1117 = vmatpush.msra.mxu0 %v444
    %1118 = vmatpush.msra.mxu0 %v442
    %1119 = vmatpush.msra.mxu0 %v440
    %1120 = vmatpush.msra.mxu0 %v438
    %1121 = vmatmul.f32.gmra.mxu0 %v1073
    %v1122 = vpop.f32.mrf.mxu0
    %v1123 = vadd.f32 0.0, %v1122
    %1124 = vmatmul.f32.gmra.mxu0 %v1075
    %v1125 = vpop.f32.mrf.mxu0
    %v1126 = vadd.f32 0.0, %v1125
    %1127 = vmatmul.f32.gmra.mxu0 %v1077
    %v1128 = vpop.f32.mrf.mxu0
    %v1129 = vadd.f32 0.0, %v1128
    %1130 = vmatmul.f32.gmra.mxu0 %v1079
    %v1131 = vpop.f32.mrf.mxu0
    %v1132 = vadd.f32 0.0, %v1131
    %1133 = vdwg.mxu0
    %1134 = vmatpush.msra.mxu0 %v500
    %1135 = vmatpush.msra.mxu0 %v498
    %1136 = vmatpush.msra.mxu0 %v496
    %1137 = vmatpush.msra.mxu0 %v494
    %1138 = vmatpush.msra.mxu0 %v492
    %1139 = vmatpush.msra.mxu0 %v490
    %1140 = vmatpush.msra.mxu0 %v488
    %1141 = vmatpush.msra.mxu0 %v486
    %1142 = vmatpush.msra.mxu0 %v484
    %1143 = vmatpush.msra.mxu0 %v482
    %1144 = vmatpush.msra.mxu0 %v480
    %1145 = vmatpush.msra.mxu0 %v478
    %1146 = vmatpush.msra.mxu0 %v476
    %1147 = vmatpush.msra.mxu0 %v474
    %1148 = vmatpush.msra.mxu0 %v472
    %1149 = vmatpush.msra.mxu0 %v470
    %1150 = vmatmul.f32.gmra.mxu0 %v1074
    %v1151 = vpop.f32.mrf.mxu0
    %v1152 = vadd.f32 %v1123, %v1151
    %1153 = vmatmul.f32.gmra.mxu0 %v1076
    %v1154 = vpop.f32.mrf.mxu0
    %v1155 = vadd.f32 %v1126, %v1154
    %1156 = vmatmul.f32.gmra.mxu0 %v1078
    %v1157 = vpop.f32.mrf.mxu0
    %v1158 = vadd.f32 %v1129, %v1157
    %1159 = vmatmul.f32.gmra.mxu0 %v1080
    %v1160 = vpop.f32.mrf.mxu0
    %v1161 = vadd.f32 %v1132, %v1160
    %1162 = vdwg.mxu0
    %1163 = vmatpush.msra.mxu0 %v469
    %1164 = vmatpush.msra.mxu0 %v467
    %1165 = vmatpush.msra.mxu0 %v465
    %1166 = vmatpush.msra.mxu0 %v463
    %1167 = vmatpush.msra.mxu0 %v461
    %1168 = vmatpush.msra.mxu0 %v459
    %1169 = vmatpush.msra.mxu0 %v457
    %1170 = vmatpush.msra.mxu0 %v455
    %1171 = vmatpush.msra.mxu0 %v453
    %1172 = vmatpush.msra.mxu0 %v451
    %1173 = vmatpush.msra.mxu0 %v449
    %1174 = vmatpush.msra.mxu0 %v447
    %1175 = vmatpush.msra.mxu0 %v445
    %1176 = vmatpush.msra.mxu0 %v443
    %1177 = vmatpush.msra.mxu0 %v441
    %1178 = vmatpush.msra.mxu0 %v439
    %1179 = vmatmul.f32.gmra.mxu0 %v1073
    %v1180 = vpop.f32.mrf.mxu0
    %v1181 = vadd.f32 0.0, %v1180
    %1182 = vmatmul.f32.gmra.mxu0 %v1075
    %v1183 = vpop.f32.mrf.mxu0
    %v1184 = vadd.f32 0.0, %v1183
    %1185 = vmatmul.f32.gmra.mxu0 %v1077
    %v1186 = vpop.f32.mrf.mxu0
    %v1187 = vadd.f32 0.0, %v1186
    %1188 = vmatmul.f32.gmra.mxu0 %v1079
    %v1189 = vpop.f32.mrf.mxu0
    %v1190 = vadd.f32 0.0, %v1189
    %1191 = vdwg.mxu0
    %1192 = vmatpush.msra.mxu0 %v501
    %1193 = vmatpush.msra.mxu0 %v499
    %1194 = vmatpush.msra.mxu0 %v497
    %1195 = vmatpush.msra.mxu0 %v495
    %1196 = vmatpush.msra.mxu0 %v493
    %1197 = vmatpush.msra.mxu0 %v491
    %1198 = vmatpush.msra.mxu0 %v489
    %1199 = vmatpush.msra.mxu0 %v487
    %1200 = vmatpush.msra.mxu0 %v485
    %1201 = vmatpush.msra.mxu0 %v483
    %1202 = vmatpush.msra.mxu0 %v481
    %1203 = vmatpush.msra.mxu0 %v479
    %1204 = vmatpush.msra.mxu0 %v477
    %1205 = vmatpush.msra.mxu0 %v475
    %1206 = vmatpush.msra.mxu0 %v473
    %1207 = vmatpush.msra.mxu0 %v471
    %1208 = vmatmul.f32.gmra.mxu0 %v1074
    %v1209 = vpop.f32.mrf.mxu0
    %v1210 = vadd.f32 %v1181, %v1209
    %1211 = vmatmul.f32.gmra.mxu0 %v1076
    %v1212 = vpop.f32.mrf.mxu0
    %v1213 = vadd.f32 %v1184, %v1212
    %1214 = vmatmul.f32.gmra.mxu0 %v1078
    %v1215 = vpop.f32.mrf.mxu0
    %v1216 = vadd.f32 %v1187, %v1215
    %1217 = vmatmul.f32.gmra.mxu0 %v1080
    %v1218 = vpop.f32.mrf.mxu0
    %v1219 = vadd.f32 %v1190, %v1218
    %1220 = vdwg.mxu0
    %1221 = vmatpush.msra.mxu0 %v532
    %1222 = vmatpush.msra.mxu0 %v530
    %1223 = vmatpush.msra.mxu0 %v528
    %1224 = vmatpush.msra.mxu0 %v526
    %1225 = vmatpush.msra.mxu0 %v524
    %1226 = vmatpush.msra.mxu0 %v522
    %1227 = vmatpush.msra.mxu0 %v520
    %1228 = vmatpush.msra.mxu0 %v518
    %1229 = vmatpush.msra.mxu0 %v516
    %1230 = vmatpush.msra.mxu0 %v514
    %1231 = vmatpush.msra.mxu0 %v512
    %1232 = vmatpush.msra.mxu0 %v510
    %1233 = vmatpush.msra.mxu0 %v508
    %1234 = vmatpush.msra.mxu0 %v506
    %1235 = vmatpush.msra.mxu0 %v504
    %1236 = vmatpush.msra.mxu0 %v502
    %1237 = vmatmul.f32.gmra.mxu0 %v1089
    %v1238 = vpop.f32.mrf.mxu0
    %v1239 = vadd.f32 0.0, %v1238
    %1240 = vmatmul.f32.gmra.mxu0 %v1091
    %v1241 = vpop.f32.mrf.mxu0
    %v1242 = vadd.f32 0.0, %v1241
    %1243 = vmatmul.f32.gmra.mxu0 %v1093
    %v1244 = vpop.f32.mrf.mxu0
    %v1245 = vadd.f32 0.0, %v1244
    %1246 = vmatmul.f32.gmra.mxu0 %v1095
    %v1247 = vpop.f32.mrf.mxu0
    %v1248 = vadd.f32 0.0, %v1247
    %1249 = vdwg.mxu0
    %1250 = vmatpush.msra.mxu0 %v564
    %1251 = vmatpush.msra.mxu0 %v562
    %1252 = vmatpush.msra.mxu0 %v560
    %1253 = vmatpush.msra.mxu0 %v558
    %1254 = vmatpush.msra.mxu0 %v556
    %1255 = vmatpush.msra.mxu0 %v554
    %1256 = vmatpush.msra.mxu0 %v552
    %1257 = vmatpush.msra.mxu0 %v550
    %1258 = vmatpush.msra.mxu0 %v548
    %1259 = vmatpush.msra.mxu0 %v546
    %1260 = vmatpush.msra.mxu0 %v544
    %1261 = vmatpush.msra.mxu0 %v542
    %1262 = vmatpush.msra.mxu0 %v540
    %1263 = vmatpush.msra.mxu0 %v538
    %1264 = vmatpush.msra.mxu0 %v536
    %1265 = vmatpush.msra.mxu0 %v534
    %1266 = vmatmul.f32.gmra.mxu0 %v1090
    %v1267 = vpop.f32.mrf.mxu0
    %v1268 = vadd.f32 %v1239, %v1267
    %1269 = vmatmul.f32.gmra.mxu0 %v1092
    %v1270 = vpop.f32.mrf.mxu0
    %v1271 = vadd.f32 %v1242, %v1270
    %1272 = vmatmul.f32.gmra.mxu0 %v1094
    %v1273 = vpop.f32.mrf.mxu0
    %v1274 = vadd.f32 %v1245, %v1273
    %1275 = vmatmul.f32.gmra.mxu0 %v1096
    %v1276 = vpop.f32.mrf.mxu0
    %v1277 = vadd.f32 %v1248, %v1276
    %1278 = vdwg.mxu0
    %1279 = vmatpush.msra.mxu0 %v533
    %1280 = vmatpush.msra.mxu0 %v531
    %1281 = vmatpush.msra.mxu0 %v529
    %1282 = vmatpush.msra.mxu0 %v527
    %1283 = vmatpush.msra.mxu0 %v525
    %1284 = vmatpush.msra.mxu0 %v523
    %1285 = vmatpush.msra.mxu0 %v521
    %1286 = vmatpush.msra.mxu0 %v519
    %1287 = vmatpush.msra.mxu0 %v517
    %1288 = vmatpush.msra.mxu0 %v515
    %1289 = vmatpush.msra.mxu0 %v513
    %1290 = vmatpush.msra.mxu0 %v511
    %1291 = vmatpush.msra.mxu0 %v509
    %1292 = vmatpush.msra.mxu0 %v507
    %1293 = vmatpush.msra.mxu0 %v505
    %1294 = vmatpush.msra.mxu0 %v503
    %1295 = vmatmul.f32.gmra.mxu0 %v1089
    %v1296 = vpop.f32.mrf.mxu0
    %v1297 = vadd.f32 0.0, %v1296
    %1298 = vmatmul.f32.gmra.mxu0 %v1091
    %v1299 = vpop.f32.mrf.mxu0
    %v1300 = vadd.f32 0.0, %v1299
    %1301 = vmatmul.f32.gmra.mxu0 %v1093
    %v1302 = vpop.f32.mrf.mxu0
    %v1303 = vadd.f32 0.0, %v1302
    %1304 = vmatmul.f32.gmra.mxu0 %v1095
    %v1305 = vpop.f32.mrf.mxu0
    %v1306 = vadd.f32 0.0, %v1305
    %1307 = vdwg.mxu0
    %1308 = vmatpush.msra.mxu0 %v565
    %1309 = vmatpush.msra.mxu0 %v563
    %1310 = vmatpush.msra.mxu0 %v561
    %1311 = vmatpush.msra.mxu0 %v559
    %1312 = vmatpush.msra.mxu0 %v557
    %1313 = vmatpush.msra.mxu0 %v555
    %1314 = vmatpush.msra.mxu0 %v553
    %1315 = vmatpush.msra.mxu0 %v551
    %1316 = vmatpush.msra.mxu0 %v549
    %1317 = vmatpush.msra.mxu0 %v547
    %1318 = vmatpush.msra.mxu0 %v545
    %1319 = vmatpush.msra.mxu0 %v543
    %1320 = vmatpush.msra.mxu0 %v541
    %1321 = vmatpush.msra.mxu0 %v539
    %1322 = vmatpush.msra.mxu0 %v537
    %1323 = vmatpush.msra.mxu0 %v535
    %1324 = vmatmul.f32.gmra.mxu0 %v1090
    %v1325 = vpop.f32.mrf.mxu0
    %v1326 = vadd.f32 %v1297, %v1325
    %1327 = vmatmul.f32.gmra.mxu0 %v1092
    %v1328 = vpop.f32.mrf.mxu0
    %v1329 = vadd.f32 %v1300, %v1328
    %1330 = vmatmul.f32.gmra.mxu0 %v1094
    %v1331 = vpop.f32.mrf.mxu0
    %v1332 = vadd.f32 %v1303, %v1331
    %1333 = vmatmul.f32.gmra.mxu0 %v1096
    %v1334 = vpop.f32.mrf.mxu0
    %v1335 = vadd.f32 %v1306, %v1334
    %1336 = vdwg.mxu0
    %1337 = vmatpush.msra.mxu0 %v596
    %1338 = vmatpush.msra.mxu0 %v594
    %1339 = vmatpush.msra.mxu0 %v592
    %1340 = vmatpush.msra.mxu0 %v590
    %1341 = vmatpush.msra.mxu0 %v588
    %1342 = vmatpush.msra.mxu0 %v586
    %1343 = vmatpush.msra.mxu0 %v584
    %1344 = vmatpush.msra.mxu0 %v582
    %1345 = vmatpush.msra.mxu0 %v580
    %1346 = vmatpush.msra.mxu0 %v578
    %1347 = vmatpush.msra.mxu0 %v576
    %1348 = vmatpush.msra.mxu0 %v574
    %1349 = vmatpush.msra.mxu0 %v572
    %1350 = vmatpush.msra.mxu0 %v570
    %1351 = vmatpush.msra.mxu0 %v568
    %1352 = vmatpush.msra.mxu0 %v566
    %1353 = vmatmul.f32.gmra.mxu0 %v1097
    %v1354 = vpop.f32.mrf.mxu0
    %v1355 = vadd.f32 0.0, %v1354
    %1356 = vmatmul.f32.gmra.mxu0 %v1099
    %v1357 = vpop.f32.mrf.mxu0
    %v1358 = vadd.f32 0.0, %v1357
    %1359 = vmatmul.f32.gmra.mxu0 %v1101
    %v1360 = vpop.f32.mrf.mxu0
    %v1361 = vadd.f32 0.0, %v1360
    %1362 = vmatmul.f32.gmra.mxu0 %v1103
    %v1363 = vpop.f32.mrf.mxu0
    %v1364 = vadd.f32 0.0, %v1363
    %1365 = vdwg.mxu0
    %1366 = vmatpush.msra.mxu0 %v628
    %1367 = vmatpush.msra.mxu0 %v626
    %1368 = vmatpush.msra.mxu0 %v624
    %1369 = vmatpush.msra.mxu0 %v622
    %1370 = vmatpush.msra.mxu0 %v620
    %1371 = vmatpush.msra.mxu0 %v618
    %1372 = vmatpush.msra.mxu0 %v616
    %1373 = vmatpush.msra.mxu0 %v614
    %1374 = vmatpush.msra.mxu0 %v612
    %1375 = vmatpush.msra.mxu0 %v610
    %1376 = vmatpush.msra.mxu0 %v608
    %1377 = vmatpush.msra.mxu0 %v606
    %1378 = vmatpush.msra.mxu0 %v604
    %1379 = vmatpush.msra.mxu0 %v602
    %1380 = vmatpush.msra.mxu0 %v600
    %1381 = vmatpush.msra.mxu0 %v598
    %1382 = vmatmul.f32.gmra.mxu0 %v1098
    %v1383 = vpop.f32.mrf.mxu0
    %v1384 = vadd.f32 %v1355, %v1383
    %1385 = vmatmul.f32.gmra.mxu0 %v1100
    %v1386 = vpop.f32.mrf.mxu0
    %v1387 = vadd.f32 %v1358, %v1386
    %1388 = vmatmul.f32.gmra.mxu0 %v1102
    %v1389 = vpop.f32.mrf.mxu0
    %v1390 = vadd.f32 %v1361, %v1389
    %1391 = vmatmul.f32.gmra.mxu0 %v1104
    %v1392 = vpop.f32.mrf.mxu0
    %v1393 = vadd.f32 %v1364, %v1392
    %1394 = vdwg.mxu0
    %1395 = vmatpush.msra.mxu0 %v597
    %1396 = vmatpush.msra.mxu0 %v595
    %1397 = vmatpush.msra.mxu0 %v593
    %1398 = vmatpush.msra.mxu0 %v591
    %1399 = vmatpush.msra.mxu0 %v589
    %1400 = vmatpush.msra.mxu0 %v587
    %1401 = vmatpush.msra.mxu0 %v585
    %1402 = vmatpush.msra.mxu0 %v583
    %1403 = vmatpush.msra.mxu0 %v581
    %1404 = vmatpush.msra.mxu0 %v579
    %1405 = vmatpush.msra.mxu0 %v577
    %1406 = vmatpush.msra.mxu0 %v575
    %1407 = vmatpush.msra.mxu0 %v573
    %1408 = vmatpush.msra.mxu0 %v571
    %1409 = vmatpush.msra.mxu0 %v569
    %1410 = vmatpush.msra.mxu0 %v567
    %1411 = vmatmul.f32.gmra.mxu0 %v1097
    %v1412 = vpop.f32.mrf.mxu0
    %v1413 = vadd.f32 0.0, %v1412
    %1414 = vmatmul.f32.gmra.mxu0 %v1099
    %v1415 = vpop.f32.mrf.mxu0
    %v1416 = vadd.f32 0.0, %v1415
    %1417 = vmatmul.f32.gmra.mxu0 %v1101
    %v1418 = vpop.f32.mrf.mxu0
    %v1419 = vadd.f32 0.0, %v1418
    %1420 = vmatmul.f32.gmra.mxu0 %v1103
    %v1421 = vpop.f32.mrf.mxu0
    %v1422 = vadd.f32 0.0, %v1421
    %1423 = vdwg.mxu0
    %1424 = vmatpush.msra.mxu0 %v629
    %1425 = vmatpush.msra.mxu0 %v627
    %1426 = vmatpush.msra.mxu0 %v625
    %1427 = vmatpush.msra.mxu0 %v623
    %1428 = vmatpush.msra.mxu0 %v621
    %1429 = vmatpush.msra.mxu0 %v619
    %1430 = vmatpush.msra.mxu0 %v617
    %1431 = vmatpush.msra.mxu0 %v615
    %1432 = vmatpush.msra.mxu0 %v613
    %1433 = vmatpush.msra.mxu0 %v611
    %1434 = vmatpush.msra.mxu0 %v609
    %1435 = vmatpush.msra.mxu0 %v607
    %1436 = vmatpush.msra.mxu0 %v605
    %1437 = vmatpush.msra.mxu0 %v603
    %1438 = vmatpush.msra.mxu0 %v601
    %1439 = vmatpush.msra.mxu0 %v599
    %1440 = vmatmul.f32.gmra.mxu0 %v1098
    %v1441 = vpop.f32.mrf.mxu0
    %v1442 = vadd.f32 %v1413, %v1441
    %1443 = vmatmul.f32.gmra.mxu0 %v1100
    %v1444 = vpop.f32.mrf.mxu0
    %v1445 = vadd.f32 %v1416, %v1444
    %1446 = vmatmul.f32.gmra.mxu0 %v1102
    %v1447 = vpop.f32.mrf.mxu0
    %v1448 = vadd.f32 %v1419, %v1447
    %1449 = vmatmul.f32.gmra.mxu0 %v1104
    %v1450 = vpop.f32.mrf.mxu0
    %v1451 = vadd.f32 %v1422, %v1450
    %1452 = vdwg.mxu0
    %v1453 = vsub.f32 %v1152, %v1268
    %v1454 = vsub.f32 %v1210, %v1326
    %v1455 = vsub.f32 %v1155, %v1271
    %v1456 = vsub.f32 %v1213, %v1329
    %v1457 = vsub.f32 %v1158, %v1274
    %v1458 = vsub.f32 %v1216, %v1332
    %v1459 = vsub.f32 %v1161, %v1277
    %v1460 = vsub.f32 %v1219, %v1335
    %v1461 = vsub.f32 %v1384, %v1152
    %v1462 = vsub.f32 %v1442, %v1210
    %v1463 = vsub.f32 %v1387, %v1155
    %v1464 = vsub.f32 %v1445, %v1213
    %v1465 = vsub.f32 %v1390, %v1158
    %v1466 = vsub.f32 %v1448, %v1216
    %v1467 = vsub.f32 %v1393, %v1161
    %v1468 = vsub.f32 %v1451, %v1219
    %v1469 = vsub.f32 %v1461, %v1268
    %v1470 = vsub.f32 %v1462, %v1326
    %v1471 = vsub.f32 %v1463, %v1271
    %v1472 = vsub.f32 %v1464, %v1329
    %v1473 = vsub.f32 %v1465, %v1274
    %v1474 = vsub.f32 %v1466, %v1332
    %v1475 = vsub.f32 %v1467, %v1277
    %v1476 = vsub.f32 %v1468, %v1335
    %v1477 = vmul.f32 %v1453, %v838
    %v1478 = vmul.f32 %v1454, %v839
    %v1479 = vmul.f32 %v1455, %v840
    %v1480 = vmul.f32 %v1456, %v841
    %v1481 = vmul.f32 %v1457, %v842
    %v1482 = vmul.f32 %v1458, %v843
    %v1483 = vmul.f32 %v1459, %v844
    %v1484 = vmul.f32 %v1460, %v845
    %v1485 = vmul.f32 %v1469, %v846
    %v1486 = vmul.f32 %v1470, %v847
    %v1487 = vmul.f32 %v1471, %v848
    %v1488 = vmul.f32 %v1472, %v849
    %v1489 = vmul.f32 %v1473, %v850
    %v1490 = vmul.f32 %v1474, %v851
    %v1491 = vmul.f32 %v1475, %v852
    %v1492 = vmul.f32 %v1476, %v853
    %v1493 = vsub.f32 %v1477, %v1485
    %v1494 = vsub.f32 %v1478, %v1486
    %v1495 = vsub.f32 %v1479, %v1487
    %v1496 = vsub.f32 %v1480, %v1488
    %v1497 = vsub.f32 %v1481, %v1489
    %v1498 = vsub.f32 %v1482, %v1490
    %v1499 = vsub.f32 %v1483, %v1491
    %v1500 = vsub.f32 %v1484, %v1492
    %v1501 = vmul.f32 %v1453, %v846
    %v1502 = vmul.f32 %v1454, %v847
    %v1503 = vmul.f32 %v1455, %v848
    %v1504 = vmul.f32 %v1456, %v849
    %v1505 = vmul.f32 %v1457, %v850
    %v1506 = vmul.f32 %v1458, %v851
    %v1507 = vmul.f32 %v1459, %v852
    %v1508 = vmul.f32 %v1460, %v853
    %v1509 = vmul.f32 %v1469, %v838
    %v1510 = vmul.f32 %v1470, %v839
    %v1511 = vmul.f32 %v1471, %v840
    %v1512 = vmul.f32 %v1472, %v841
    %v1513 = vmul.f32 %v1473, %v842
    %v1514 = vmul.f32 %v1474, %v843
    %v1515 = vmul.f32 %v1475, %v844
    %v1516 = vmul.f32 %v1476, %v845
    %v1517 = vadd.f32 %v1501, %v1509
    %v1518 = vadd.f32 %v1502, %v1510
    %v1519 = vadd.f32 %v1503, %v1511
    %v1520 = vadd.f32 %v1504, %v1512
    %v1521 = vadd.f32 %v1505, %v1513
    %v1522 = vadd.f32 %v1506, %v1514
    %v1523 = vadd.f32 %v1507, %v1515
    %v1524 = vadd.f32 %v1508, %v1516
    %v1525 = vadd.f32 %v1493, %v1517
    %v1526 = vadd.f32 %v1494, %v1518
    %v1527 = vadd.f32 %v1495, %v1519
    %v1528 = vadd.f32 %v1496, %v1520
    %v1529 = vadd.f32 %v1497, %v1521
    %v1530 = vadd.f32 %v1498, %v1522
    %v1531 = vadd.f32 %v1499, %v1523
    %v1532 = vadd.f32 %v1500, %v1524
    %v1534 = vsel %vm862, %v426, 0
    %v1537 = vsel %vm862, %v427, 0
    %v1540 = vsel %vm862, %v428, 0
    %v1543 = vsel %vm862, %v429, 0
    %1545 = vmatpush.msra.mxu0 0.0
    %1546 = vmatpush.msra.mxu0 0.0
    %1547 = vmatpush.msra.mxu0 0.0
    %1548 = vmatpush.msra.mxu0 0.0
    %1549 = vmatpush.msra.mxu0 0.0
    %1550 = vmatpush.msra.mxu0 0.0
    %1551 = vmatpush.msra.mxu0 0.0
    %1552 = vmatpush.msra.mxu0 0.0
    %1553 = vmatpush.msra.mxu0 0.0
    %1554 = vmatpush.msra.mxu0 0.0
    %1555 = vmatpush.msra.mxu0 0.0
    %1556 = vmatpush.msra.mxu0 0.0
    %1557 = vmatpush.msra.mxu0 %v1499
    %1558 = vmatpush.msra.mxu0 %v1497
    %1559 = vmatpush.msra.mxu0 %v1495
    %1560 = vmatpush.msra.mxu0 %v1493
    %1561 = vmatmul.f32.gmra.mxu0 %v1534
    %v1562 = vpop.f32.mrf.mxu0
    %v1563 = vadd.f32 0.0, %v1562
    %1564 = vmatmul.f32.gmra.mxu0 %v1537
    %v1565 = vpop.f32.mrf.mxu0
    %v1566 = vadd.f32 0.0, %v1565
    %1567 = vmatmul.f32.gmra.mxu0 %v1540
    %v1568 = vpop.f32.mrf.mxu0
    %v1569 = vadd.f32 0.0, %v1568
    %1570 = vmatmul.f32.gmra.mxu0 %v1543
    %v1571 = vpop.f32.mrf.mxu0
    %v1572 = vadd.f32 0.0, %v1571
    %1573 = vdwg.mxu0
    %1574 = vmatpush.msra.mxu0 0.0
    %1575 = vmatpush.msra.mxu0 0.0
    %1576 = vmatpush.msra.mxu0 0.0
    %1577 = vmatpush.msra.mxu0 0.0
    %1578 = vmatpush.msra.mxu0 0.0
    %1579 = vmatpush.msra.mxu0 0.0
    %1580 = vmatpush.msra.mxu0 0.0
    %1581 = vmatpush.msra.mxu0 0.0
    %1582 = vmatpush.msra.mxu0 0.0
    %1583 = vmatpush.msra.mxu0 0.0
    %1584 = vmatpush.msra.mxu0 0.0
    %1585 = vmatpush.msra.mxu0 0.0
    %1586 = vmatpush.msra.mxu0 %v1500
    %1587 = vmatpush.msra.mxu0 %v1498
    %1588 = vmatpush.msra.mxu0 %v1496
    %1589 = vmatpush.msra.mxu0 %v1494
    %1590 = vmatmul.f32.gmra.mxu0 %v1534
    %v1591 = vpop.f32.mrf.mxu0
    %v1592 = vadd.f32 0.0, %v1591
    %1593 = vmatmul.f32.gmra.mxu0 %v1537
    %v1594 = vpop.f32.mrf.mxu0
    %v1595 = vadd.f32 0.0, %v1594
    %1596 = vmatmul.f32.gmra.mxu0 %v1540
    %v1597 = vpop.f32.mrf.mxu0
    %v1598 = vadd.f32 0.0, %v1597
    %1599 = vmatmul.f32.gmra.mxu0 %v1543
    %v1600 = vpop.f32.mrf.mxu0
    %v1601 = vadd.f32 0.0, %v1600
    %1602 = vdwg.mxu0
    %v1604 = vsel %vm862, %v430, 0
    %v1607 = vsel %vm862, %v431, 0
    %v1610 = vsel %vm862, %v432, 0
    %v1613 = vsel %vm862, %v433, 0
    %1615 = vmatpush.msra.mxu0 0.0
    %1616 = vmatpush.msra.mxu0 0.0
    %1617 = vmatpush.msra.mxu0 0.0
    %1618 = vmatpush.msra.mxu0 0.0
    %1619 = vmatpush.msra.mxu0 0.0
    %1620 = vmatpush.msra.mxu0 0.0
    %1621 = vmatpush.msra.mxu0 0.0
    %1622 = vmatpush.msra.mxu0 0.0
    %1623 = vmatpush.msra.mxu0 0.0
    %1624 = vmatpush.msra.mxu0 0.0
    %1625 = vmatpush.msra.mxu0 0.0
    %1626 = vmatpush.msra.mxu0 0.0
    %1627 = vmatpush.msra.mxu0 %v1523
    %1628 = vmatpush.msra.mxu0 %v1521
    %1629 = vmatpush.msra.mxu0 %v1519
    %1630 = vmatpush.msra.mxu0 %v1517
    %1631 = vmatmul.f32.gmra.mxu0 %v1604
    %v1632 = vpop.f32.mrf.mxu0
    %v1633 = vadd.f32 0.0, %v1632
    %1634 = vmatmul.f32.gmra.mxu0 %v1607
    %v1635 = vpop.f32.mrf.mxu0
    %v1636 = vadd.f32 0.0, %v1635
    %1637 = vmatmul.f32.gmra.mxu0 %v1610
    %v1638 = vpop.f32.mrf.mxu0
    %v1639 = vadd.f32 0.0, %v1638
    %1640 = vmatmul.f32.gmra.mxu0 %v1613
    %v1641 = vpop.f32.mrf.mxu0
    %v1642 = vadd.f32 0.0, %v1641
    %1643 = vdwg.mxu0
    %1644 = vmatpush.msra.mxu0 0.0
    %1645 = vmatpush.msra.mxu0 0.0
    %1646 = vmatpush.msra.mxu0 0.0
    %1647 = vmatpush.msra.mxu0 0.0
    %1648 = vmatpush.msra.mxu0 0.0
    %1649 = vmatpush.msra.mxu0 0.0
    %1650 = vmatpush.msra.mxu0 0.0
    %1651 = vmatpush.msra.mxu0 0.0
    %1652 = vmatpush.msra.mxu0 0.0
    %1653 = vmatpush.msra.mxu0 0.0
    %1654 = vmatpush.msra.mxu0 0.0
    %1655 = vmatpush.msra.mxu0 0.0
    %1656 = vmatpush.msra.mxu0 %v1524
    %1657 = vmatpush.msra.mxu0 %v1522
    %1658 = vmatpush.msra.mxu0 %v1520
    %1659 = vmatpush.msra.mxu0 %v1518
    %1660 = vmatmul.f32.gmra.mxu0 %v1604
    %v1661 = vpop.f32.mrf.mxu0
    %v1662 = vadd.f32 0.0, %v1661
    %1663 = vmatmul.f32.gmra.mxu0 %v1607
    %v1664 = vpop.f32.mrf.mxu0
    %v1665 = vadd.f32 0.0, %v1664
    %1666 = vmatmul.f32.gmra.mxu0 %v1610
    %v1667 = vpop.f32.mrf.mxu0
    %v1668 = vadd.f32 0.0, %v1667
    %1669 = vmatmul.f32.gmra.mxu0 %v1613
    %v1670 = vpop.f32.mrf.mxu0
    %v1671 = vadd.f32 0.0, %v1670
    %1672 = vdwg.mxu0
    %v1674 = vsel %vm862, %v434, 0
    %v1677 = vsel %vm862, %v435, 0
    %v1680 = vsel %vm862, %v436, 0
    %v1683 = vsel %vm862, %v437, 0
    %1685 = vmatpush.msra.mxu0 0.0
    %1686 = vmatpush.msra.mxu0 0.0
    %1687 = vmatpush.msra.mxu0 0.0
    %1688 = vmatpush.msra.mxu0 0.0
    %1689 = vmatpush.msra.mxu0 0.0
    %1690 = vmatpush.msra.mxu0 0.0
    %1691 = vmatpush.msra.mxu0 0.0
    %1692 = vmatpush.msra.mxu0 0.0
    %1693 = vmatpush.msra.mxu0 0.0
    %1694 = vmatpush.msra.mxu0 0.0
    %1695 = vmatpush.msra.mxu0 0.0
    %1696 = vmatpush.msra.mxu0 0.0
    %1697 = vmatpush.msra.mxu0 %v1531
    %1698 = vmatpush.msra.mxu0 %v1529
    %1699 = vmatpush.msra.mxu0 %v1527
    %1700 = vmatpush.msra.mxu0 %v1525
    %1701 = vmatmul.f32.gmra.mxu0 %v1674
    %v1702 = vpop.f32.mrf.mxu0
    %v1703 = vadd.f32 0.0, %v1702
    %1704 = vmatmul.f32.gmra.mxu0 %v1677
    %v1705 = vpop.f32.mrf.mxu0
    %v1706 = vadd.f32 0.0, %v1705
    %1707 = vmatmul.f32.gmra.mxu0 %v1680
    %v1708 = vpop.f32.mrf.mxu0
    %v1709 = vadd.f32 0.0, %v1708
    %1710 = vmatmul.f32.gmra.mxu0 %v1683
    %v1711 = vpop.f32.mrf.mxu0
    %v1712 = vadd.f32 0.0, %v1711
    %1713 = vdwg.mxu0
    %1714 = vmatpush.msra.mxu0 0.0
    %1715 = vmatpush.msra.mxu0 0.0
    %1716 = vmatpush.msra.mxu0 0.0
    %1717 = vmatpush.msra.mxu0 0.0
    %1718 = vmatpush.msra.mxu0 0.0
    %1719 = vmatpush.msra.mxu0 0.0
    %1720 = vmatpush.msra.mxu0 0.0
    %1721 = vmatpush.msra.mxu0 0.0
    %1722 = vmatpush.msra.mxu0 0.0
    %1723 = vmatpush.msra.mxu0 0.0
    %1724 = vmatpush.msra.mxu0 0.0
    %1725 = vmatpush.msra.mxu0 0.0
    %1726 = vmatpush.msra.mxu0 %v1532
    %1727 = vmatpush.msra.mxu0 %v1530
    %1728 = vmatpush.msra.mxu0 %v1528
    %1729 = vmatpush.msra.mxu0 %v1526
    %1730 = vmatmul.f32.gmra.mxu0 %v1674
    %v1731 = vpop.f32.mrf.mxu0
    %v1732 = vadd.f32 0.0, %v1731
    %1733 = vmatmul.f32.gmra.mxu0 %v1677
    %v1734 = vpop.f32.mrf.mxu0
    %v1735 = vadd.f32 0.0, %v1734
    %1736 = vmatmul.f32.gmra.mxu0 %v1680
    %v1737 = vpop.f32.mrf.mxu0
    %v1738 = vadd.f32 0.0, %v1737
    %1739 = vmatmul.f32.gmra.mxu0 %v1683
    %v1740 = vpop.f32.mrf.mxu0
    %v1741 = vadd.f32 0.0, %v1740
    %1742 = vdwg.mxu0
    %v1743 = vsub.f32 %v1563, %v1633
    %v1744 = vsub.f32 %v1592, %v1662
    %v1745 = vsub.f32 %v1566, %v1636
    %v1746 = vsub.f32 %v1595, %v1665
    %v1747 = vsub.f32 %v1569, %v1639
    %v1748 = vsub.f32 %v1598, %v1668
    %v1749 = vsub.f32 %v1572, %v1642
    %v1750 = vsub.f32 %v1601, %v1671
    %v1751 = vsub.f32 %v1703, %v1563
    %v1752 = vsub.f32 %v1732, %v1592
    %v1753 = vsub.f32 %v1706, %v1566
    %v1754 = vsub.f32 %v1735, %v1595
    %v1755 = vsub.f32 %v1709, %v1569
    %v1756 = vsub.f32 %v1738, %v1598
    %v1757 = vsub.f32 %v1712, %v1572
    %v1758 = vsub.f32 %v1741, %v1601
    %v1759 = vsub.f32 %v1751, %v1633
    %v1760 = vsub.f32 %v1752, %v1662
    %v1761 = vsub.f32 %v1753, %v1636
    %v1762 = vsub.f32 %v1754, %v1665
    %v1763 = vsub.f32 %v1755, %v1639
    %v1764 = vsub.f32 %v1756, %v1668
    %v1765 = vsub.f32 %v1757, %v1642
    %v1766 = vsub.f32 %v1758, %v1671
    %v1767 = vadd.f32 %v1743, %v1759
    %v1768 = vadd.f32 %v1744, %v1760
    %v1769 = vadd.f32 %v1745, %v1761
    %v1770 = vadd.f32 %v1746, %v1762
    %v1771 = vadd.f32 %v1747, %v1763
    %v1772 = vadd.f32 %v1748, %v1764
    %v1773 = vadd.f32 %v1749, %v1765
    %v1774 = vadd.f32 %v1750, %v1766
    %1775 = vmatpush.msra.mxu0 %v660
    %1776 = vmatpush.msra.mxu0 %v658
    %1777 = vmatpush.msra.mxu0 %v656
    %1778 = vmatpush.msra.mxu0 %v654
    %1779 = vmatpush.msra.mxu0 %v652
    %1780 = vmatpush.msra.mxu0 %v650
    %1781 = vmatpush.msra.mxu0 %v648
    %1782 = vmatpush.msra.mxu0 %v646
    %1783 = vmatpush.msra.mxu0 %v644
    %1784 = vmatpush.msra.mxu0 %v642
    %1785 = vmatpush.msra.mxu0 %v640
    %1786 = vmatpush.msra.mxu0 %v638
    %1787 = vmatpush.msra.mxu0 %v636
    %1788 = vmatpush.msra.mxu0 %v634
    %1789 = vmatpush.msra.mxu0 %v632
    %1790 = vmatpush.msra.mxu0 %v630
    %1791 = vmatmul.f32.gmra.mxu0 %v1743
    %v1792 = vpop.f32.mrf.mxu0
    %v1793 = vadd.f32 0.0, %v1792
    %1794 = vmatmul.f32.gmra.mxu0 %v1745
    %v1795 = vpop.f32.mrf.mxu0
    %v1796 = vadd.f32 0.0, %v1795
    %1797 = vmatmul.f32.gmra.mxu0 %v1747
    %v1798 = vpop.f32.mrf.mxu0
    %v1799 = vadd.f32 0.0, %v1798
    %1800 = vmatmul.f32.gmra.mxu0 %v1749
    %v1801 = vpop.f32.mrf.mxu0
    %v1802 = vadd.f32 0.0, %v1801
    %1803 = vdwg.mxu0
    %1804 = vmatpush.msra.mxu0 %v692
    %1805 = vmatpush.msra.mxu0 %v690
    %1806 = vmatpush.msra.mxu0 %v688
    %1807 = vmatpush.msra.mxu0 %v686
    %1808 = vmatpush.msra.mxu0 %v684
    %1809 = vmatpush.msra.mxu0 %v682
    %1810 = vmatpush.msra.mxu0 %v680
    %1811 = vmatpush.msra.mxu0 %v678
    %1812 = vmatpush.msra.mxu0 %v676
    %1813 = vmatpush.msra.mxu0 %v674
    %1814 = vmatpush.msra.mxu0 %v672
    %1815 = vmatpush.msra.mxu0 %v670
    %1816 = vmatpush.msra.mxu0 %v668
    %1817 = vmatpush.msra.mxu0 %v666
    %1818 = vmatpush.msra.mxu0 %v664
    %1819 = vmatpush.msra.mxu0 %v662
    %1820 = vmatmul.f32.gmra.mxu0 %v1744
    %v1821 = vpop.f32.mrf.mxu0
    %v1822 = vadd.f32 %v1793, %v1821
    %1823 = vmatmul.f32.gmra.mxu0 %v1746
    %v1824 = vpop.f32.mrf.mxu0
    %v1825 = vadd.f32 %v1796, %v1824
    %1826 = vmatmul.f32.gmra.mxu0 %v1748
    %v1827 = vpop.f32.mrf.mxu0
    %v1828 = vadd.f32 %v1799, %v1827
    %1829 = vmatmul.f32.gmra.mxu0 %v1750
    %v1830 = vpop.f32.mrf.mxu0
    %v1831 = vadd.f32 %v1802, %v1830
    %1832 = vdwg.mxu0
    %1833 = vmatpush.msra.mxu0 %v661
    %1834 = vmatpush.msra.mxu0 %v659
    %1835 = vmatpush.msra.mxu0 %v657
    %1836 = vmatpush.msra.mxu0 %v655
    %1837 = vmatpush.msra.mxu0 %v653
    %1838 = vmatpush.msra.mxu0 %v651
    %1839 = vmatpush.msra.mxu0 %v649
    %1840 = vmatpush.msra.mxu0 %v647
    %1841 = vmatpush.msra.mxu0 %v645
    %1842 = vmatpush.msra.mxu0 %v643
    %1843 = vmatpush.msra.mxu0 %v641
    %1844 = vmatpush.msra.mxu0 %v639
    %1845 = vmatpush.msra.mxu0 %v637
    %1846 = vmatpush.msra.mxu0 %v635
    %1847 = vmatpush.msra.mxu0 %v633
    %1848 = vmatpush.msra.mxu0 %v631
    %1849 = vmatmul.f32.gmra.mxu0 %v1743
    %v1850 = vpop.f32.mrf.mxu0
    %v1851 = vadd.f32 0.0, %v1850
    %1852 = vmatmul.f32.gmra.mxu0 %v1745
    %v1853 = vpop.f32.mrf.mxu0
    %v1854 = vadd.f32 0.0, %v1853
    %1855 = vmatmul.f32.gmra.mxu0 %v1747
    %v1856 = vpop.f32.mrf.mxu0
    %v1857 = vadd.f32 0.0, %v1856
    %1858 = vmatmul.f32.gmra.mxu0 %v1749
    %v1859 = vpop.f32.mrf.mxu0
    %v1860 = vadd.f32 0.0, %v1859
    %1861 = vdwg.mxu0
    %1862 = vmatpush.msra.mxu0 %v693
    %1863 = vmatpush.msra.mxu0 %v691
    %1864 = vmatpush.msra.mxu0 %v689
    %1865 = vmatpush.msra.mxu0 %v687
    %1866 = vmatpush.msra.mxu0 %v685
    %1867 = vmatpush.msra.mxu0 %v683
    %1868 = vmatpush.msra.mxu0 %v681
    %1869 = vmatpush.msra.mxu0 %v679
    %1870 = vmatpush.msra.mxu0 %v677
    %1871 = vmatpush.msra.mxu0 %v675
    %1872 = vmatpush.msra.mxu0 %v673
    %1873 = vmatpush.msra.mxu0 %v671
    %1874 = vmatpush.msra.mxu0 %v669
    %1875 = vmatpush.msra.mxu0 %v667
    %1876 = vmatpush.msra.mxu0 %v665
    %1877 = vmatpush.msra.mxu0 %v663
    %1878 = vmatmul.f32.gmra.mxu0 %v1744
    %v1879 = vpop.f32.mrf.mxu0
    %v1880 = vadd.f32 %v1851, %v1879
    %1881 = vmatmul.f32.gmra.mxu0 %v1746
    %v1882 = vpop.f32.mrf.mxu0
    %v1883 = vadd.f32 %v1854, %v1882
    %1884 = vmatmul.f32.gmra.mxu0 %v1748
    %v1885 = vpop.f32.mrf.mxu0
    %v1886 = vadd.f32 %v1857, %v1885
    %1887 = vmatmul.f32.gmra.mxu0 %v1750
    %v1888 = vpop.f32.mrf.mxu0
    %v1889 = vadd.f32 %v1860, %v1888
    %1890 = vdwg.mxu0
    %1891 = vmatpush.msra.mxu0 %v724
    %1892 = vmatpush.msra.mxu0 %v722
    %1893 = vmatpush.msra.mxu0 %v720
    %1894 = vmatpush.msra.mxu0 %v718
    %1895 = vmatpush.msra.mxu0 %v716
    %1896 = vmatpush.msra.mxu0 %v714
    %1897 = vmatpush.msra.mxu0 %v712
    %1898 = vmatpush.msra.mxu0 %v710
    %1899 = vmatpush.msra.mxu0 %v708
    %1900 = vmatpush.msra.mxu0 %v706
    %1901 = vmatpush.msra.mxu0 %v704
    %1902 = vmatpush.msra.mxu0 %v702
    %1903 = vmatpush.msra.mxu0 %v700
    %1904 = vmatpush.msra.mxu0 %v698
    %1905 = vmatpush.msra.mxu0 %v696
    %1906 = vmatpush.msra.mxu0 %v694
    %1907 = vmatmul.f32.gmra.mxu0 %v1759
    %v1908 = vpop.f32.mrf.mxu0
    %v1909 = vadd.f32 0.0, %v1908
    %1910 = vmatmul.f32.gmra.mxu0 %v1761
    %v1911 = vpop.f32.mrf.mxu0
    %v1912 = vadd.f32 0.0, %v1911
    %1913 = vmatmul.f32.gmra.mxu0 %v1763
    %v1914 = vpop.f32.mrf.mxu0
    %v1915 = vadd.f32 0.0, %v1914
    %1916 = vmatmul.f32.gmra.mxu0 %v1765
    %v1917 = vpop.f32.mrf.mxu0
    %v1918 = vadd.f32 0.0, %v1917
    %1919 = vdwg.mxu0
    %1920 = vmatpush.msra.mxu0 %v756
    %1921 = vmatpush.msra.mxu0 %v754
    %1922 = vmatpush.msra.mxu0 %v752
    %1923 = vmatpush.msra.mxu0 %v750
    %1924 = vmatpush.msra.mxu0 %v748
    %1925 = vmatpush.msra.mxu0 %v746
    %1926 = vmatpush.msra.mxu0 %v744
    %1927 = vmatpush.msra.mxu0 %v742
    %1928 = vmatpush.msra.mxu0 %v740
    %1929 = vmatpush.msra.mxu0 %v738
    %1930 = vmatpush.msra.mxu0 %v736
    %1931 = vmatpush.msra.mxu0 %v734
    %1932 = vmatpush.msra.mxu0 %v732
    %1933 = vmatpush.msra.mxu0 %v730
    %1934 = vmatpush.msra.mxu0 %v728
    %1935 = vmatpush.msra.mxu0 %v726
    %1936 = vmatmul.f32.gmra.mxu0 %v1760
    %v1937 = vpop.f32.mrf.mxu0
    %v1938 = vadd.f32 %v1909, %v1937
    %1939 = vmatmul.f32.gmra.mxu0 %v1762
    %v1940 = vpop.f32.mrf.mxu0
    %v1941 = vadd.f32 %v1912, %v1940
    %1942 = vmatmul.f32.gmra.mxu0 %v1764
    %v1943 = vpop.f32.mrf.mxu0
    %v1944 = vadd.f32 %v1915, %v1943
    %1945 = vmatmul.f32.gmra.mxu0 %v1766
    %v1946 = vpop.f32.mrf.mxu0
    %v1947 = vadd.f32 %v1918, %v1946
    %1948 = vdwg.mxu0
    %1949 = vmatpush.msra.mxu0 %v725
    %1950 = vmatpush.msra.mxu0 %v723
    %1951 = vmatpush.msra.mxu0 %v721
    %1952 = vmatpush.msra.mxu0 %v719
    %1953 = vmatpush.msra.mxu0 %v717
    %1954 = vmatpush.msra.mxu0 %v715
    %1955 = vmatpush.msra.mxu0 %v713
    %1956 = vmatpush.msra.mxu0 %v711
    %1957 = vmatpush.msra.mxu0 %v709
    %1958 = vmatpush.msra.mxu0 %v707
    %1959 = vmatpush.msra.mxu0 %v705
    %1960 = vmatpush.msra.mxu0 %v703
    %1961 = vmatpush.msra.mxu0 %v701
    %1962 = vmatpush.msra.mxu0 %v699
    %1963 = vmatpush.msra.mxu0 %v697
    %1964 = vmatpush.msra.mxu0 %v695
    %1965 = vmatmul.f32.gmra.mxu0 %v1759
    %v1966 = vpop.f32.mrf.mxu0
    %v1967 = vadd.f32 0.0, %v1966
    %1968 = vmatmul.f32.gmra.mxu0 %v1761
    %v1969 = vpop.f32.mrf.mxu0
    %v1970 = vadd.f32 0.0, %v1969
    %1971 = vmatmul.f32.gmra.mxu0 %v1763
    %v1972 = vpop.f32.mrf.mxu0
    %v1973 = vadd.f32 0.0, %v1972
    %1974 = vmatmul.f32.gmra.mxu0 %v1765
    %v1975 = vpop.f32.mrf.mxu0
    %v1976 = vadd.f32 0.0, %v1975
    %1977 = vdwg.mxu0
    %1978 = vmatpush.msra.mxu0 %v757
    %1979 = vmatpush.msra.mxu0 %v755
    %1980 = vmatpush.msra.mxu0 %v753
    %1981 = vmatpush.msra.mxu0 %v751
    %1982 = vmatpush.msra.mxu0 %v749
    %1983 = vmatpush.msra.mxu0 %v747
    %1984 = vmatpush.msra.mxu0 %v745
    %1985 = vmatpush.msra.mxu0 %v743
    %1986 = vmatpush.msra.mxu0 %v741
    %1987 = vmatpush.msra.mxu0 %v739
    %1988 = vmatpush.msra.mxu0 %v737
    %1989 = vmatpush.msra.mxu0 %v735
    %1990 = vmatpush.msra.mxu0 %v733
    %1991 = vmatpush.msra.mxu0 %v731
    %1992 = vmatpush.msra.mxu0 %v729
    %1993 = vmatpush.msra.mxu0 %v727
    %1994 = vmatmul.f32.gmra.mxu0 %v1760
    %v1995 = vpop.f32.mrf.mxu0
    %v1996 = vadd.f32 %v1967, %v1995
    %1997 = vmatmul.f32.gmra.mxu0 %v1762
    %v1998 = vpop.f32.mrf.mxu0
    %v1999 = vadd.f32 %v1970, %v1998
    %2000 = vmatmul.f32.gmra.mxu0 %v1764
    %v2001 = vpop.f32.mrf.mxu0
    %v2002 = vadd.f32 %v1973, %v2001
    %2003 = vmatmul.f32.gmra.mxu0 %v1766
    %v2004 = vpop.f32.mrf.mxu0
    %v2005 = vadd.f32 %v1976, %v2004
    %2006 = vdwg.mxu0
    %2007 = vmatpush.msra.mxu0 %v788
    %2008 = vmatpush.msra.mxu0 %v786
    %2009 = vmatpush.msra.mxu0 %v784
    %2010 = vmatpush.msra.mxu0 %v782
    %2011 = vmatpush.msra.mxu0 %v780
    %2012 = vmatpush.msra.mxu0 %v778
    %2013 = vmatpush.msra.mxu0 %v776
    %2014 = vmatpush.msra.mxu0 %v774
    %2015 = vmatpush.msra.mxu0 %v772
    %2016 = vmatpush.msra.mxu0 %v770
    %2017 = vmatpush.msra.mxu0 %v768
    %2018 = vmatpush.msra.mxu0 %v766
    %2019 = vmatpush.msra.mxu0 %v764
    %2020 = vmatpush.msra.mxu0 %v762
    %2021 = vmatpush.msra.mxu0 %v760
    %2022 = vmatpush.msra.mxu0 %v758
    %2023 = vmatmul.f32.gmra.mxu0 %v1767
    %v2024 = vpop.f32.mrf.mxu0
    %v2025 = vadd.f32 0.0, %v2024
    %2026 = vmatmul.f32.gmra.mxu0 %v1769
    %v2027 = vpop.f32.mrf.mxu0
    %v2028 = vadd.f32 0.0, %v2027
    %2029 = vmatmul.f32.gmra.mxu0 %v1771
    %v2030 = vpop.f32.mrf.mxu0
    %v2031 = vadd.f32 0.0, %v2030
    %2032 = vmatmul.f32.gmra.mxu0 %v1773
    %v2033 = vpop.f32.mrf.mxu0
    %v2034 = vadd.f32 0.0, %v2033
    %2035 = vdwg.mxu0
    %2036 = vmatpush.msra.mxu0 %v820
    %2037 = vmatpush.msra.mxu0 %v818
    %2038 = vmatpush.msra.mxu0 %v816
    %2039 = vmatpush.msra.mxu0 %v814
    %2040 = vmatpush.msra.mxu0 %v812
    %2041 = vmatpush.msra.mxu0 %v810
    %2042 = vmatpush.msra.mxu0 %v808
    %2043 = vmatpush.msra.mxu0 %v806
    %2044 = vmatpush.msra.mxu0 %v804
    %2045 = vmatpush.msra.mxu0 %v802
    %2046 = vmatpush.msra.mxu0 %v800
    %2047 = vmatpush.msra.mxu0 %v798
    %2048 = vmatpush.msra.mxu0 %v796
    %2049 = vmatpush.msra.mxu0 %v794
    %2050 = vmatpush.msra.mxu0 %v792
    %2051 = vmatpush.msra.mxu0 %v790
    %2052 = vmatmul.f32.gmra.mxu0 %v1768
    %v2053 = vpop.f32.mrf.mxu0
    %v2054 = vadd.f32 %v2025, %v2053
    %2055 = vmatmul.f32.gmra.mxu0 %v1770
    %v2056 = vpop.f32.mrf.mxu0
    %v2057 = vadd.f32 %v2028, %v2056
    %2058 = vmatmul.f32.gmra.mxu0 %v1772
    %v2059 = vpop.f32.mrf.mxu0
    %v2060 = vadd.f32 %v2031, %v2059
    %2061 = vmatmul.f32.gmra.mxu0 %v1774
    %v2062 = vpop.f32.mrf.mxu0
    %v2063 = vadd.f32 %v2034, %v2062
    %2064 = vdwg.mxu0
    %2065 = vmatpush.msra.mxu0 %v789
    %2066 = vmatpush.msra.mxu0 %v787
    %2067 = vmatpush.msra.mxu0 %v785
    %2068 = vmatpush.msra.mxu0 %v783
    %2069 = vmatpush.msra.mxu0 %v781
    %2070 = vmatpush.msra.mxu0 %v779
    %2071 = vmatpush.msra.mxu0 %v777
    %2072 = vmatpush.msra.mxu0 %v775
    %2073 = vmatpush.msra.mxu0 %v773
    %2074 = vmatpush.msra.mxu0 %v771
    %2075 = vmatpush.msra.mxu0 %v769
    %2076 = vmatpush.msra.mxu0 %v767
    %2077 = vmatpush.msra.mxu0 %v765
    %2078 = vmatpush.msra.mxu0 %v763
    %2079 = vmatpush.msra.mxu0 %v761
    %2080 = vmatpush.msra.mxu0 %v759
    %2081 = vmatmul.f32.gmra.mxu0 %v1767
    %v2082 = vpop.f32.mrf.mxu0
    %v2083 = vadd.f32 0.0, %v2082
    %2084 = vmatmul.f32.gmra.mxu0 %v1769
    %v2085 = vpop.f32.mrf.mxu0
    %v2086 = vadd.f32 0.0, %v2085
    %2087 = vmatmul.f32.gmra.mxu0 %v1771
    %v2088 = vpop.f32.mrf.mxu0
    %v2089 = vadd.f32 0.0, %v2088
    %2090 = vmatmul.f32.gmra.mxu0 %v1773
    %v2091 = vpop.f32.mrf.mxu0
    %v2092 = vadd.f32 0.0, %v2091
    %2093 = vdwg.mxu0
    %2094 = vmatpush.msra.mxu0 %v821
    %2095 = vmatpush.msra.mxu0 %v819
    %2096 = vmatpush.msra.mxu0 %v817
    %2097 = vmatpush.msra.mxu0 %v815
    %2098 = vmatpush.msra.mxu0 %v813
    %2099 = vmatpush.msra.mxu0 %v811
    %2100 = vmatpush.msra.mxu0 %v809
    %2101 = vmatpush.msra.mxu0 %v807
    %2102 = vmatpush.msra.mxu0 %v805
    %2103 = vmatpush.msra.mxu0 %v803
    %2104 = vmatpush.msra.mxu0 %v801
    %2105 = vmatpush.msra.mxu0 %v799
    %2106 = vmatpush.msra.mxu0 %v797
    %2107 = vmatpush.msra.mxu0 %v795
    %2108 = vmatpush.msra.mxu0 %v793
    %2109 = vmatpush.msra.mxu0 %v791
    %2110 = vmatmul.f32.gmra.mxu0 %v1768
    %v2111 = vpop.f32.mrf.mxu0
    %v2112 = vadd.f32 %v2083, %v2111
    %2113 = vmatmul.f32.gmra.mxu0 %v1770
    %v2114 = vpop.f32.mrf.mxu0
    %v2115 = vadd.f32 %v2086, %v2114
    %2116 = vmatmul.f32.gmra.mxu0 %v1772
    %v2117 = vpop.f32.mrf.mxu0
    %v2118 = vadd.f32 %v2089, %v2117
    %2119 = vmatmul.f32.gmra.mxu0 %v1774
    %v2120 = vpop.f32.mrf.mxu0
    %v2121 = vadd.f32 %v2092, %v2120
    %2122 = vdwg.mxu0
    %v2123 = vsub.f32 %v1822, %v1938
    %v2124 = vsub.f32 %v1880, %v1996
    %v2125 = vsub.f32 %v1825, %v1941
    %v2126 = vsub.f32 %v1883, %v1999
    %v2127 = vsub.f32 %v1828, %v1944
    %v2128 = vsub.f32 %v1886, %v2002
    %v2129 = vsub.f32 %v1831, %v1947
    %v2130 = vsub.f32 %v1889, %v2005
    %v2131 = vsub.f32 %v2054, %v1822
    %v2132 = vsub.f32 %v2112, %v1880
    %v2133 = vsub.f32 %v2057, %v1825
    %v2134 = vsub.f32 %v2115, %v1883
    %v2135 = vsub.f32 %v2060, %v1828
    %v2136 = vsub.f32 %v2118, %v1886
    %v2137 = vsub.f32 %v2063, %v1831
    %v2138 = vsub.f32 %v2121, %v1889
    %v2139 = vsub.f32 %v2131, %v1938
    %v2140 = vsub.f32 %v2132, %v1996
    %v2141 = vsub.f32 %v2133, %v1941
    %v2142 = vsub.f32 %v2134, %v1999
    %v2143 = vsub.f32 %v2135, %v1944
    %v2144 = vsub.f32 %v2136, %v2002
    %v2145 = vsub.f32 %v2137, %v1947
    %v2146 = vsub.f32 %v2138, %v2005
    %v2147 = vld [vmem:[#allocation31] sm:$0xff]
    %v2148 = vld [vmem:[#allocation31 + $0x8] sm:$0xff]
    %v2149 = vld [vmem:[#allocation31 + $0x10] sm:$0xff]
    %v2150 = vld [vmem:[#allocation31 + $0x18] sm:$0xff]
    %v2151 = vld [vmem:[#allocation31 + $0x20] sm:$0xff]
    %v2152 = vld [vmem:[#allocation31 + $0x28] sm:$0xff]
    %v2153 = vld [vmem:[#allocation31 + $0x30] sm:$0xff]
    %v2154 = vld [vmem:[#allocation31 + $0x38] sm:$0xff]
    %v2155 = vld [vmem:[#allocation32] sm:$0xff]
    %v2156 = vld [vmem:[#allocation32 + $0x8] sm:$0xff]
    %v2157 = vld [vmem:[#allocation32 + $0x10] sm:$0xff]
    %v2158 = vld [vmem:[#allocation32 + $0x18] sm:$0xff]
    %v2159 = vld [vmem:[#allocation32 + $0x20] sm:$0xff]
    %v2160 = vld [vmem:[#allocation32 + $0x28] sm:$0xff]
    %v2161 = vld [vmem:[#allocation32 + $0x30] sm:$0xff]
    %v2162 = vld [vmem:[#allocation32 + $0x38] sm:$0xff]
    %v2163 = vmul.f32 %v2123, %v2147
    %v2164 = vmul.f32 %v2124, %v2148
    %v2165 = vmul.f32 %v2125, %v2149
    %v2166 = vmul.f32 %v2126, %v2150
    %v2167 = vmul.f32 %v2127, %v2151
    %v2168 = vmul.f32 %v2128, %v2152
    %v2169 = vmul.f32 %v2129, %v2153
    %v2170 = vmul.f32 %v2130, %v2154
    %v2171 = vmul.f32 %v2139, %v2155
    %v2172 = vmul.f32 %v2140, %v2156
    %v2173 = vmul.f32 %v2141, %v2157
    %v2174 = vmul.f32 %v2142, %v2158
    %v2175 = vmul.f32 %v2143, %v2159
    %v2176 = vmul.f32 %v2144, %v2160
    %v2177 = vmul.f32 %v2145, %v2161
    %v2178 = vmul.f32 %v2146, %v2162
    %v2179 = vsub.f32 %v2163, %v2171
    %v2180 = vsub.f32 %v2164, %v2172
    %v2181 = vsub.f32 %v2165, %v2173
    %v2182 = vsub.f32 %v2166, %v2174
    %v2183 = vsub.f32 %v2167, %v2175
    %v2184 = vsub.f32 %v2168, %v2176
    %v2185 = vsub.f32 %v2169, %v2177
    %v2186 = vsub.f32 %v2170, %v2178
    %v2187 = vmul.f32 %v2123, %v2155
    %v2188 = vmul.f32 %v2124, %v2156
    %v2189 = vmul.f32 %v2125, %v2157
    %v2190 = vmul.f32 %v2126, %v2158
    %v2191 = vmul.f32 %v2127, %v2159
    %v2192 = vmul.f32 %v2128, %v2160
    %v2193 = vmul.f32 %v2129, %v2161
    %v2194 = vmul.f32 %v2130, %v2162
    %v2195 = vmul.f32 %v2139, %v2147
    %v2196 = vmul.f32 %v2140, %v2148
    %v2197 = vmul.f32 %v2141, %v2149
    %v2198 = vmul.f32 %v2142, %v2150
    %v2199 = vmul.f32 %v2143, %v2151
    %v2200 = vmul.f32 %v2144, %v2152
    %v2201 = vmul.f32 %v2145, %v2153
    %v2202 = vmul.f32 %v2146, %v2154
    %v2203 = vadd.f32 %v2187, %v2195
    %v2204 = vadd.f32 %v2188, %v2196
    %v2205 = vadd.f32 %v2189, %v2197
    %v2206 = vadd.f32 %v2190, %v2198
    %v2207 = vadd.f32 %v2191, %v2199
    %v2208 = vadd.f32 %v2192, %v2200
    %v2209 = vadd.f32 %v2193, %v2201
    %v2210 = vadd.f32 %v2194, %v2202
    %v2211 = vld [vmem:[#allocation28] sm:$0xff]
    %v2212 = vld [vmem:[#allocation28 + $0x8] sm:$0xff]
    %v2213 = vld [vmem:[#allocation28 + $0x10] sm:$0xff]
    %v2214 = vld [vmem:[#allocation28 + $0x18] sm:$0xff]
    %v2215 = vld [vmem:[#allocation28 + $0x20] sm:$0xff]
    %v2216 = vld [vmem:[#allocation28 + $0x28] sm:$0xff]
    %v2217 = vld [vmem:[#allocation28 + $0x30] sm:$0xff]
    %v2218 = vld [vmem:[#allocation28 + $0x38] sm:$0xff]
    %v2219 = vld [vmem:[#allocation29] sm:$0xff]
    %v2220 = vld [vmem:[#allocation29 + $0x8] sm:$0xff]
    %v2221 = vld [vmem:[#allocation29 + $0x10] sm:$0xff]
    %v2222 = vld [vmem:[#allocation29 + $0x18] sm:$0xff]
    %v2223 = vld [vmem:[#allocation29 + $0x20] sm:$0xff]
    %v2224 = vld [vmem:[#allocation29 + $0x28] sm:$0xff]
    %v2225 = vld [vmem:[#allocation29 + $0x30] sm:$0xff]
    %v2226 = vld [vmem:[#allocation29 + $0x38] sm:$0xff]
    %v2227 = vadd.f32 %v2179, %v2203
    %v2228 = vadd.f32 %v2180, %v2204
    %v2229 = vadd.f32 %v2181, %v2205
    %v2230 = vadd.f32 %v2182, %v2206
    %v2231 = vadd.f32 %v2183, %v2207
    %v2232 = vadd.f32 %v2184, %v2208
    %v2233 = vadd.f32 %v2185, %v2209
    %v2234 = vadd.f32 %v2186, %v2210
    %2235 = vmatpush.msra.mxu0 0.0
    %2236 = vmatpush.msra.mxu0 0.0
    %2237 = vmatpush.msra.mxu0 0.0
    %2238 = vmatpush.msra.mxu0 0.0
    %2239 = vmatpush.msra.mxu0 0.0
    %2240 = vmatpush.msra.mxu0 0.0
    %2241 = vmatpush.msra.mxu0 0.0
    %2242 = vmatpush.msra.mxu0 0.0
    %2243 = vmatpush.msra.mxu0 0.0
    %2244 = vmatpush.msra.mxu0 0.0
    %2245 = vmatpush.msra.mxu0 0.0
    %2246 = vmatpush.msra.mxu0 0.0
    %2247 = vmatpush.msra.mxu0 %v2185
    %2248 = vmatpush.msra.mxu0 %v2183
    %2249 = vmatpush.msra.mxu0 %v2181
    %2250 = vmatpush.msra.mxu0 %v2179
    %2251 = vmatmul.f32.gmra.mxu0 %v864
    %v2252 = vpop.f32.mrf.mxu0
    %v2253 = vadd.f32 0.0, %v2252
    %2254 = vmatmul.f32.gmra.mxu0 %v867
    %v2255 = vpop.f32.mrf.mxu0
    %v2256 = vadd.f32 0.0, %v2255
    %2257 = vmatmul.f32.gmra.mxu0 %v870
    %v2258 = vpop.f32.mrf.mxu0
    %v2259 = vadd.f32 0.0, %v2258
    %2260 = vmatmul.f32.gmra.mxu0 %v873
    %v2261 = vpop.f32.mrf.mxu0
    %v2262 = vadd.f32 0.0, %v2261
    %2263 = vdwg.mxu0
    %2264 = vmatpush.msra.mxu0 0.0
    %2265 = vmatpush.msra.mxu0 0.0
    %2266 = vmatpush.msra.mxu0 0.0
    %2267 = vmatpush.msra.mxu0 0.0
    %2268 = vmatpush.msra.mxu0 0.0
    %2269 = vmatpush.msra.mxu0 0.0
    %2270 = vmatpush.msra.mxu0 0.0
    %2271 = vmatpush.msra.mxu0 0.0
    %2272 = vmatpush.msra.mxu0 0.0
    %2273 = vmatpush.msra.mxu0 0.0
    %2274 = vmatpush.msra.mxu0 0.0
    %2275 = vmatpush.msra.mxu0 0.0
    %2276 = vmatpush.msra.mxu0 %v2186
    %2277 = vmatpush.msra.mxu0 %v2184
    %2278 = vmatpush.msra.mxu0 %v2182
    %2279 = vmatpush.msra.mxu0 %v2180
    %2280 = vmatmul.f32.gmra.mxu0 %v864
    %v2281 = vpop.f32.mrf.mxu0
    %v2282 = vadd.f32 0.0, %v2281
    %2283 = vmatmul.f32.gmra.mxu0 %v867
    %v2284 = vpop.f32.mrf.mxu0
    %v2285 = vadd.f32 0.0, %v2284
    %2286 = vmatmul.f32.gmra.mxu0 %v870
    %v2287 = vpop.f32.mrf.mxu0
    %v2288 = vadd.f32 0.0, %v2287
    %2289 = vmatmul.f32.gmra.mxu0 %v873
    %v2290 = vpop.f32.mrf.mxu0
    %v2291 = vadd.f32 0.0, %v2290
    %2292 = vdwg.mxu0
    %2293 = vmatpush.msra.mxu0 0.0
    %2294 = vmatpush.msra.mxu0 0.0
    %2295 = vmatpush.msra.mxu0 0.0
    %2296 = vmatpush.msra.mxu0 0.0
    %2297 = vmatpush.msra.mxu0 0.0
    %2298 = vmatpush.msra.mxu0 0.0
    %2299 = vmatpush.msra.mxu0 0.0
    %2300 = vmatpush.msra.mxu0 0.0
    %2301 = vmatpush.msra.mxu0 0.0
    %2302 = vmatpush.msra.mxu0 0.0
    %2303 = vmatpush.msra.mxu0 0.0
    %2304 = vmatpush.msra.mxu0 0.0
    %2305 = vmatpush.msra.mxu0 %v2209
    %2306 = vmatpush.msra.mxu0 %v2207
    %2307 = vmatpush.msra.mxu0 %v2205
    %2308 = vmatpush.msra.mxu0 %v2203
    %2309 = vmatmul.f32.gmra.mxu0 %v934
    %v2310 = vpop.f32.mrf.mxu0
    %v2311 = vadd.f32 0.0, %v2310
    %2312 = vmatmul.f32.gmra.mxu0 %v937
    %v2313 = vpop.f32.mrf.mxu0
    %v2314 = vadd.f32 0.0, %v2313
    %2315 = vmatmul.f32.gmra.mxu0 %v940
    %v2316 = vpop.f32.mrf.mxu0
    %v2317 = vadd.f32 0.0, %v2316
    %2318 = vmatmul.f32.gmra.mxu0 %v943
    %v2319 = vpop.f32.mrf.mxu0
    %v2320 = vadd.f32 0.0, %v2319
    %2321 = vdwg.mxu0
    %2322 = vmatpush.msra.mxu0 0.0
    %2323 = vmatpush.msra.mxu0 0.0
    %2324 = vmatpush.msra.mxu0 0.0
    %2325 = vmatpush.msra.mxu0 0.0
    %2326 = vmatpush.msra.mxu0 0.0
    %2327 = vmatpush.msra.mxu0 0.0
    %2328 = vmatpush.msra.mxu0 0.0
    %2329 = vmatpush.msra.mxu0 0.0
    %2330 = vmatpush.msra.mxu0 0.0
    %2331 = vmatpush.msra.mxu0 0.0
    %2332 = vmatpush.msra.mxu0 0.0
    %2333 = vmatpush.msra.mxu0 0.0
    %2334 = vmatpush.msra.mxu0 %v2210
    %2335 = vmatpush.msra.mxu0 %v2208
    %2336 = vmatpush.msra.mxu0 %v2206
    %2337 = vmatpush.msra.mxu0 %v2204
    %2338 = vmatmul.f32.gmra.mxu0 %v934
    %v2339 = vpop.f32.mrf.mxu0
    %v2340 = vadd.f32 0.0, %v2339
    %2341 = vmatmul.f32.gmra.mxu0 %v937
    %v2342 = vpop.f32.mrf.mxu0
    %v2343 = vadd.f32 0.0, %v2342
    %2344 = vmatmul.f32.gmra.mxu0 %v940
    %v2345 = vpop.f32.mrf.mxu0
    %v2346 = vadd.f32 0.0, %v2345
    %2347 = vmatmul.f32.gmra.mxu0 %v943
    %v2348 = vpop.f32.mrf.mxu0
    %v2349 = vadd.f32 0.0, %v2348
    %2350 = vdwg.mxu0
    %2351 = vmatpush.msra.mxu0 0.0
    %2352 = vmatpush.msra.mxu0 0.0
    %2353 = vmatpush.msra.mxu0 0.0
    %2354 = vmatpush.msra.mxu0 0.0
    %2355 = vmatpush.msra.mxu0 0.0
    %2356 = vmatpush.msra.mxu0 0.0
    %2357 = vmatpush.msra.mxu0 0.0
    %2358 = vmatpush.msra.mxu0 0.0
    %2359 = vmatpush.msra.mxu0 0.0
    %2360 = vmatpush.msra.mxu0 0.0
    %2361 = vmatpush.msra.mxu0 0.0
    %2362 = vmatpush.msra.mxu0 0.0
    %2363 = vmatpush.msra.mxu0 %v2233
    %2364 = vmatpush.msra.mxu0 %v2231
    %2365 = vmatpush.msra.mxu0 %v2229
    %2366 = vmatpush.msra.mxu0 %v2227
    %2367 = vmatmul.f32.gmra.mxu0 %v1004
    %v2368 = vpop.f32.mrf.mxu0
    %v2369 = vadd.f32 0.0, %v2368
    %2370 = vmatmul.f32.gmra.mxu0 %v1007
    %v2371 = vpop.f32.mrf.mxu0
    %v2372 = vadd.f32 0.0, %v2371
    %2373 = vmatmul.f32.gmra.mxu0 %v1010
    %v2374 = vpop.f32.mrf.mxu0
    %v2375 = vadd.f32 0.0, %v2374
    %2376 = vmatmul.f32.gmra.mxu0 %v1013
    %v2377 = vpop.f32.mrf.mxu0
    %v2378 = vadd.f32 0.0, %v2377
    %2379 = vdwg.mxu0
    %2380 = vmatpush.msra.mxu0 0.0
    %2381 = vmatpush.msra.mxu0 0.0
    %2382 = vmatpush.msra.mxu0 0.0
    %2383 = vmatpush.msra.mxu0 0.0
    %2384 = vmatpush.msra.mxu0 0.0
    %2385 = vmatpush.msra.mxu0 0.0
    %2386 = vmatpush.msra.mxu0 0.0
    %2387 = vmatpush.msra.mxu0 0.0
    %2388 = vmatpush.msra.mxu0 0.0
    %2389 = vmatpush.msra.mxu0 0.0
    %2390 = vmatpush.msra.mxu0 0.0
    %2391 = vmatpush.msra.mxu0 0.0
    %2392 = vmatpush.msra.mxu0 %v2234
    %2393 = vmatpush.msra.mxu0 %v2232
    %2394 = vmatpush.msra.mxu0 %v2230
    %2395 = vmatpush.msra.mxu0 %v2228
    %2396 = vmatmul.f32.gmra.mxu0 %v1004
    %v2397 = vpop.f32.mrf.mxu0
    %v2398 = vadd.f32 0.0, %v2397
    %2399 = vmatmul.f32.gmra.mxu0 %v1007
    %v2400 = vpop.f32.mrf.mxu0
    %v2401 = vadd.f32 0.0, %v2400
    %2402 = vmatmul.f32.gmra.mxu0 %v1010
    %v2403 = vpop.f32.mrf.mxu0
    %v2404 = vadd.f32 0.0, %v2403
    %2405 = vmatmul.f32.gmra.mxu0 %v1013
    %v2406 = vpop.f32.mrf.mxu0
    %v2407 = vadd.f32 0.0, %v2406
    %2408 = vdwg.mxu0
    %v2409 = vsub.f32 %v2253, %v2311
    %v2410 = vsub.f32 %v2282, %v2340
    %v2411 = vsub.f32 %v2256, %v2314
    %v2412 = vsub.f32 %v2285, %v2343
    %v2413 = vsub.f32 %v2259, %v2317
    %v2414 = vsub.f32 %v2288, %v2346
    %v2415 = vsub.f32 %v2262, %v2320
    %v2416 = vsub.f32 %v2291, %v2349
    %v2417 = vsub.f32 %v2369, %v2253
    %v2418 = vsub.f32 %v2398, %v2282
    %v2419 = vsub.f32 %v2372, %v2256
    %v2420 = vsub.f32 %v2401, %v2285
    %v2421 = vsub.f32 %v2375, %v2259
    %v2422 = vsub.f32 %v2404, %v2288
    %v2423 = vsub.f32 %v2378, %v2262
    %v2424 = vsub.f32 %v2407, %v2291
    %v2425 = vsub.f32 %v2417, %v2311
    %v2426 = vsub.f32 %v2418, %v2340
    %v2427 = vsub.f32 %v2419, %v2314
    %v2428 = vsub.f32 %v2420, %v2343
    %v2429 = vsub.f32 %v2421, %v2317
    %v2430 = vsub.f32 %v2422, %v2346
    %v2431 = vsub.f32 %v2423, %v2320
    %v2432 = vsub.f32 %v2424, %v2349
    %v2433 = vadd.f32 %v2409, %v2425
    %v2434 = vadd.f32 %v2410, %v2426
    %v2435 = vadd.f32 %v2411, %v2427
    %v2436 = vadd.f32 %v2412, %v2428
    %v2437 = vadd.f32 %v2413, %v2429
    %v2438 = vadd.f32 %v2414, %v2430
    %v2439 = vadd.f32 %v2415, %v2431
    %v2440 = vadd.f32 %v2416, %v2432
    %2441 = vmatpush.msra.mxu0 %v468
    %2442 = vmatpush.msra.mxu0 %v466
    %2443 = vmatpush.msra.mxu0 %v464
    %2444 = vmatpush.msra.mxu0 %v462
    %2445 = vmatpush.msra.mxu0 %v460
    %2446 = vmatpush.msra.mxu0 %v458
    %2447 = vmatpush.msra.mxu0 %v456
    %2448 = vmatpush.msra.mxu0 %v454
    %2449 = vmatpush.msra.mxu0 %v452
    %2450 = vmatpush.msra.mxu0 %v450
    %2451 = vmatpush.msra.mxu0 %v448
    %2452 = vmatpush.msra.mxu0 %v446
    %2453 = vmatpush.msra.mxu0 %v444
    %2454 = vmatpush.msra.mxu0 %v442
    %2455 = vmatpush.msra.mxu0 %v440
    %2456 = vmatpush.msra.mxu0 %v438
    %2457 = vmatmul.f32.gmra.mxu0 %v2409
    %v2458 = vpop.f32.mrf.mxu0
    %v2459 = vadd.f32 0.0, %v2458
    %2460 = vmatmul.f32.gmra.mxu0 %v2411
    %v2461 = vpop.f32.mrf.mxu0
    %v2462 = vadd.f32 0.0, %v2461
    %2463 = vmatmul.f32.gmra.mxu0 %v2413
    %v2464 = vpop.f32.mrf.mxu0
    %v2465 = vadd.f32 0.0, %v2464
    %2466 = vmatmul.f32.gmra.mxu0 %v2415
    %v2467 = vpop.f32.mrf.mxu0
    %v2468 = vadd.f32 0.0, %v2467
    %2469 = vdwg.mxu0
    %2470 = vmatpush.msra.mxu0 %v500
    %2471 = vmatpush.msra.mxu0 %v498
    %2472 = vmatpush.msra.mxu0 %v496
    %2473 = vmatpush.msra.mxu0 %v494
    %2474 = vmatpush.msra.mxu0 %v492
    %2475 = vmatpush.msra.mxu0 %v490
    %2476 = vmatpush.msra.mxu0 %v488
    %2477 = vmatpush.msra.mxu0 %v486
    %2478 = vmatpush.msra.mxu0 %v484
    %2479 = vmatpush.msra.mxu0 %v482
    %2480 = vmatpush.msra.mxu0 %v480
    %2481 = vmatpush.msra.mxu0 %v478
    %2482 = vmatpush.msra.mxu0 %v476
    %2483 = vmatpush.msra.mxu0 %v474
    %2484 = vmatpush.msra.mxu0 %v472
    %2485 = vmatpush.msra.mxu0 %v470
    %2486 = vmatmul.f32.gmra.mxu0 %v2410
    %v2487 = vpop.f32.mrf.mxu0
    %v2488 = vadd.f32 %v2459, %v2487
    %2489 = vmatmul.f32.gmra.mxu0 %v2412
    %v2490 = vpop.f32.mrf.mxu0
    %v2491 = vadd.f32 %v2462, %v2490
    %2492 = vmatmul.f32.gmra.mxu0 %v2414
    %v2493 = vpop.f32.mrf.mxu0
    %v2494 = vadd.f32 %v2465, %v2493
    %2495 = vmatmul.f32.gmra.mxu0 %v2416
    %v2496 = vpop.f32.mrf.mxu0
    %v2497 = vadd.f32 %v2468, %v2496
    %2498 = vdwg.mxu0
    %2499 = vmatpush.msra.mxu0 %v469
    %2500 = vmatpush.msra.mxu0 %v467
    %2501 = vmatpush.msra.mxu0 %v465
    %2502 = vmatpush.msra.mxu0 %v463
    %2503 = vmatpush.msra.mxu0 %v461
    %2504 = vmatpush.msra.mxu0 %v459
    %2505 = vmatpush.msra.mxu0 %v457
    %2506 = vmatpush.msra.mxu0 %v455
    %2507 = vmatpush.msra.mxu0 %v453
    %2508 = vmatpush.msra.mxu0 %v451
    %2509 = vmatpush.msra.mxu0 %v449
    %2510 = vmatpush.msra.mxu0 %v447
    %2511 = vmatpush.msra.mxu0 %v445
    %2512 = vmatpush.msra.mxu0 %v443
    %2513 = vmatpush.msra.mxu0 %v441
    %2514 = vmatpush.msra.mxu0 %v439
    %2515 = vmatmul.f32.gmra.mxu0 %v2409
    %v2516 = vpop.f32.mrf.mxu0
    %v2517 = vadd.f32 0.0, %v2516
    %2518 = vmatmul.f32.gmra.mxu0 %v2411
    %v2519 = vpop.f32.mrf.mxu0
    %v2520 = vadd.f32 0.0, %v2519
    %2521 = vmatmul.f32.gmra.mxu0 %v2413
    %v2522 = vpop.f32.mrf.mxu0
    %v2523 = vadd.f32 0.0, %v2522
    %2524 = vmatmul.f32.gmra.mxu0 %v2415
    %v2525 = vpop.f32.mrf.mxu0
    %v2526 = vadd.f32 0.0, %v2525
    %2527 = vdwg.mxu0
    %2528 = vmatpush.msra.mxu0 %v501
    %2529 = vmatpush.msra.mxu0 %v499
    %2530 = vmatpush.msra.mxu0 %v497
    %2531 = vmatpush.msra.mxu0 %v495
    %2532 = vmatpush.msra.mxu0 %v493
    %2533 = vmatpush.msra.mxu0 %v491
    %2534 = vmatpush.msra.mxu0 %v489
    %2535 = vmatpush.msra.mxu0 %v487
    %2536 = vmatpush.msra.mxu0 %v485
    %2537 = vmatpush.msra.mxu0 %v483
    %2538 = vmatpush.msra.mxu0 %v481
    %2539 = vmatpush.msra.mxu0 %v479
    %2540 = vmatpush.msra.mxu0 %v477
    %2541 = vmatpush.msra.mxu0 %v475
    %2542 = vmatpush.msra.mxu0 %v473
    %2543 = vmatpush.msra.mxu0 %v471
    %2544 = vmatmul.f32.gmra.mxu0 %v2410
    %v2545 = vpop.f32.mrf.mxu0
    %v2546 = vadd.f32 %v2517, %v2545
    %2547 = vmatmul.f32.gmra.mxu0 %v2412
    %v2548 = vpop.f32.mrf.mxu0
    %v2549 = vadd.f32 %v2520, %v2548
    %2550 = vmatmul.f32.gmra.mxu0 %v2414
    %v2551 = vpop.f32.mrf.mxu0
    %v2552 = vadd.f32 %v2523, %v2551
    %2553 = vmatmul.f32.gmra.mxu0 %v2416
    %v2554 = vpop.f32.mrf.mxu0
    %v2555 = vadd.f32 %v2526, %v2554
    %2556 = vdwg.mxu0
    %2557 = vmatpush.msra.mxu0 %v532
    %2558 = vmatpush.msra.mxu0 %v530
    %2559 = vmatpush.msra.mxu0 %v528
    %2560 = vmatpush.msra.mxu0 %v526
    %2561 = vmatpush.msra.mxu0 %v524
    %2562 = vmatpush.msra.mxu0 %v522
    %2563 = vmatpush.msra.mxu0 %v520
    %2564 = vmatpush.msra.mxu0 %v518
    %2565 = vmatpush.msra.mxu0 %v516
    %2566 = vmatpush.msra.mxu0 %v514
    %2567 = vmatpush.msra.mxu0 %v512
    %2568 = vmatpush.msra.mxu0 %v510
    %2569 = vmatpush.msra.mxu0 %v508
    %2570 = vmatpush.msra.mxu0 %v506
    %2571 = vmatpush.msra.mxu0 %v504
    %2572 = vmatpush.msra.mxu0 %v502
    %2573 = vmatmul.f32.gmra.mxu0 %v2425
    %v2574 = vpop.f32.mrf.mxu0
    %v2575 = vadd.f32 0.0, %v2574
    %2576 = vmatmul.f32.gmra.mxu0 %v2427
    %v2577 = vpop.f32.mrf.mxu0
    %v2578 = vadd.f32 0.0, %v2577
    %2579 = vmatmul.f32.gmra.mxu0 %v2429
    %v2580 = vpop.f32.mrf.mxu0
    %v2581 = vadd.f32 0.0, %v2580
    %2582 = vmatmul.f32.gmra.mxu0 %v2431
    %v2583 = vpop.f32.mrf.mxu0
    %v2584 = vadd.f32 0.0, %v2583
    %2585 = vdwg.mxu0
    %2586 = vmatpush.msra.mxu0 %v564
    %2587 = vmatpush.msra.mxu0 %v562
    %2588 = vmatpush.msra.mxu0 %v560
    %2589 = vmatpush.msra.mxu0 %v558
    %2590 = vmatpush.msra.mxu0 %v556
    %2591 = vmatpush.msra.mxu0 %v554
    %2592 = vmatpush.msra.mxu0 %v552
    %2593 = vmatpush.msra.mxu0 %v550
    %2594 = vmatpush.msra.mxu0 %v548
    %2595 = vmatpush.msra.mxu0 %v546
    %2596 = vmatpush.msra.mxu0 %v544
    %2597 = vmatpush.msra.mxu0 %v542
    %2598 = vmatpush.msra.mxu0 %v540
    %2599 = vmatpush.msra.mxu0 %v538
    %2600 = vmatpush.msra.mxu0 %v536
    %2601 = vmatpush.msra.mxu0 %v534
    %2602 = vmatmul.f32.gmra.mxu0 %v2426
    %v2603 = vpop.f32.mrf.mxu0
    %v2604 = vadd.f32 %v2575, %v2603
    %2605 = vmatmul.f32.gmra.mxu0 %v2428
    %v2606 = vpop.f32.mrf.mxu0
    %v2607 = vadd.f32 %v2578, %v2606
    %2608 = vmatmul.f32.gmra.mxu0 %v2430
    %v2609 = vpop.f32.mrf.mxu0
    %v2610 = vadd.f32 %v2581, %v2609
    %2611 = vmatmul.f32.gmra.mxu0 %v2432
    %v2612 = vpop.f32.mrf.mxu0
    %v2613 = vadd.f32 %v2584, %v2612
    %2614 = vdwg.mxu0
    %2615 = vmatpush.msra.mxu0 %v533
    %2616 = vmatpush.msra.mxu0 %v531
    %2617 = vmatpush.msra.mxu0 %v529
    %2618 = vmatpush.msra.mxu0 %v527
    %2619 = vmatpush.msra.mxu0 %v525
    %2620 = vmatpush.msra.mxu0 %v523
    %2621 = vmatpush.msra.mxu0 %v521
    %2622 = vmatpush.msra.mxu0 %v519
    %2623 = vmatpush.msra.mxu0 %v517
    %2624 = vmatpush.msra.mxu0 %v515
    %2625 = vmatpush.msra.mxu0 %v513
    %2626 = vmatpush.msra.mxu0 %v511
    %2627 = vmatpush.msra.mxu0 %v509
    %2628 = vmatpush.msra.mxu0 %v507
    %2629 = vmatpush.msra.mxu0 %v505
    %2630 = vmatpush.msra.mxu0 %v503
    %2631 = vmatmul.f32.gmra.mxu0 %v2425
    %v2632 = vpop.f32.mrf.mxu0
    %v2633 = vadd.f32 0.0, %v2632
    %2634 = vmatmul.f32.gmra.mxu0 %v2427
    %v2635 = vpop.f32.mrf.mxu0
    %v2636 = vadd.f32 0.0, %v2635
    %2637 = vmatmul.f32.gmra.mxu0 %v2429
    %v2638 = vpop.f32.mrf.mxu0
    %v2639 = vadd.f32 0.0, %v2638
    %2640 = vmatmul.f32.gmra.mxu0 %v2431
    %v2641 = vpop.f32.mrf.mxu0
    %v2642 = vadd.f32 0.0, %v2641
    %2643 = vdwg.mxu0
    %2644 = vmatpush.msra.mxu0 %v565
    %2645 = vmatpush.msra.mxu0 %v563
    %2646 = vmatpush.msra.mxu0 %v561
    %2647 = vmatpush.msra.mxu0 %v559
    %2648 = vmatpush.msra.mxu0 %v557
    %2649 = vmatpush.msra.mxu0 %v555
    %2650 = vmatpush.msra.mxu0 %v553
    %2651 = vmatpush.msra.mxu0 %v551
    %2652 = vmatpush.msra.mxu0 %v549
    %2653 = vmatpush.msra.mxu0 %v547
    %2654 = vmatpush.msra.mxu0 %v545
    %2655 = vmatpush.msra.mxu0 %v543
    %2656 = vmatpush.msra.mxu0 %v541
    %2657 = vmatpush.msra.mxu0 %v539
    %2658 = vmatpush.msra.mxu0 %v537
    %2659 = vmatpush.msra.mxu0 %v535
    %2660 = vmatmul.f32.gmra.mxu0 %v2426
    %v2661 = vpop.f32.mrf.mxu0
    %v2662 = vadd.f32 %v2633, %v2661
    %2663 = vmatmul.f32.gmra.mxu0 %v2428
    %v2664 = vpop.f32.mrf.mxu0
    %v2665 = vadd.f32 %v2636, %v2664
    %2666 = vmatmul.f32.gmra.mxu0 %v2430
    %v2667 = vpop.f32.mrf.mxu0
    %v2668 = vadd.f32 %v2639, %v2667
    %2669 = vmatmul.f32.gmra.mxu0 %v2432
    %v2670 = vpop.f32.mrf.mxu0
    %v2671 = vadd.f32 %v2642, %v2670
    %2672 = vdwg.mxu0
    %2673 = vmatpush.msra.mxu0 %v596
    %2674 = vmatpush.msra.mxu0 %v594
    %2675 = vmatpush.msra.mxu0 %v592
    %2676 = vmatpush.msra.mxu0 %v590
    %2677 = vmatpush.msra.mxu0 %v588
    %2678 = vmatpush.msra.mxu0 %v586
    %2679 = vmatpush.msra.mxu0 %v584
    %2680 = vmatpush.msra.mxu0 %v582
    %2681 = vmatpush.msra.mxu0 %v580
    %2682 = vmatpush.msra.mxu0 %v578
    %2683 = vmatpush.msra.mxu0 %v576
    %2684 = vmatpush.msra.mxu0 %v574
    %2685 = vmatpush.msra.mxu0 %v572
    %2686 = vmatpush.msra.mxu0 %v570
    %2687 = vmatpush.msra.mxu0 %v568
    %2688 = vmatpush.msra.mxu0 %v566
    %2689 = vmatmul.f32.gmra.mxu0 %v2433
    %v2690 = vpop.f32.mrf.mxu0
    %v2691 = vadd.f32 0.0, %v2690
    %2692 = vmatmul.f32.gmra.mxu0 %v2435
    %v2693 = vpop.f32.mrf.mxu0
    %v2694 = vadd.f32 0.0, %v2693
    %2695 = vmatmul.f32.gmra.mxu0 %v2437
    %v2696 = vpop.f32.mrf.mxu0
    %v2697 = vadd.f32 0.0, %v2696
    %2698 = vmatmul.f32.gmra.mxu0 %v2439
    %v2699 = vpop.f32.mrf.mxu0
    %v2700 = vadd.f32 0.0, %v2699
    %2701 = vdwg.mxu0
    %2702 = vmatpush.msra.mxu0 %v628
    %2703 = vmatpush.msra.mxu0 %v626
    %2704 = vmatpush.msra.mxu0 %v624
    %2705 = vmatpush.msra.mxu0 %v622
    %2706 = vmatpush.msra.mxu0 %v620
    %2707 = vmatpush.msra.mxu0 %v618
    %2708 = vmatpush.msra.mxu0 %v616
    %2709 = vmatpush.msra.mxu0 %v614
    %2710 = vmatpush.msra.mxu0 %v612
    %2711 = vmatpush.msra.mxu0 %v610
    %2712 = vmatpush.msra.mxu0 %v608
    %2713 = vmatpush.msra.mxu0 %v606
    %2714 = vmatpush.msra.mxu0 %v604
    %2715 = vmatpush.msra.mxu0 %v602
    %2716 = vmatpush.msra.mxu0 %v600
    %2717 = vmatpush.msra.mxu0 %v598
    %2718 = vmatmul.f32.gmra.mxu0 %v2434
    %v2719 = vpop.f32.mrf.mxu0
    %v2720 = vadd.f32 %v2691, %v2719
    %2721 = vmatmul.f32.gmra.mxu0 %v2436
    %v2722 = vpop.f32.mrf.mxu0
    %v2723 = vadd.f32 %v2694, %v2722
    %2724 = vmatmul.f32.gmra.mxu0 %v2438
    %v2725 = vpop.f32.mrf.mxu0
    %v2726 = vadd.f32 %v2697, %v2725
    %2727 = vmatmul.f32.gmra.mxu0 %v2440
    %v2728 = vpop.f32.mrf.mxu0
    %v2729 = vadd.f32 %v2700, %v2728
    %2730 = vdwg.mxu0
    %2731 = vmatpush.msra.mxu0 %v597
    %2732 = vmatpush.msra.mxu0 %v595
    %2733 = vmatpush.msra.mxu0 %v593
    %2734 = vmatpush.msra.mxu0 %v591
    %2735 = vmatpush.msra.mxu0 %v589
    %2736 = vmatpush.msra.mxu0 %v587
    %2737 = vmatpush.msra.mxu0 %v585
    %2738 = vmatpush.msra.mxu0 %v583
    %2739 = vmatpush.msra.mxu0 %v581
    %2740 = vmatpush.msra.mxu0 %v579
    %2741 = vmatpush.msra.mxu0 %v577
    %2742 = vmatpush.msra.mxu0 %v575
    %2743 = vmatpush.msra.mxu0 %v573
    %2744 = vmatpush.msra.mxu0 %v571
    %2745 = vmatpush.msra.mxu0 %v569
    %2746 = vmatpush.msra.mxu0 %v567
    %2747 = vmatmul.f32.gmra.mxu0 %v2433
    %v2748 = vpop.f32.mrf.mxu0
    %v2749 = vadd.f32 0.0, %v2748
    %2750 = vmatmul.f32.gmra.mxu0 %v2435
    %v2751 = vpop.f32.mrf.mxu0
    %v2752 = vadd.f32 0.0, %v2751
    %2753 = vmatmul.f32.gmra.mxu0 %v2437
    %v2754 = vpop.f32.mrf.mxu0
    %v2755 = vadd.f32 0.0, %v2754
    %2756 = vmatmul.f32.gmra.mxu0 %v2439
    %v2757 = vpop.f32.mrf.mxu0
    %v2758 = vadd.f32 0.0, %v2757
    %2759 = vdwg.mxu0
    %2760 = vmatpush.msra.mxu0 %v629
    %2761 = vmatpush.msra.mxu0 %v627
    %2762 = vmatpush.msra.mxu0 %v625
    %2763 = vmatpush.msra.mxu0 %v623
    %2764 = vmatpush.msra.mxu0 %v621
    %2765 = vmatpush.msra.mxu0 %v619
    %2766 = vmatpush.msra.mxu0 %v617
    %2767 = vmatpush.msra.mxu0 %v615
    %2768 = vmatpush.msra.mxu0 %v613
    %2769 = vmatpush.msra.mxu0 %v611
    %2770 = vmatpush.msra.mxu0 %v609
    %2771 = vmatpush.msra.mxu0 %v607
    %2772 = vmatpush.msra.mxu0 %v605
    %2773 = vmatpush.msra.mxu0 %v603
    %2774 = vmatpush.msra.mxu0 %v601
    %2775 = vmatpush.msra.mxu0 %v599
    %2776 = vmatmul.f32.gmra.mxu0 %v2434
    %v2777 = vpop.f32.mrf.mxu0
    %v2778 = vadd.f32 %v2749, %v2777
    %2779 = vmatmul.f32.gmra.mxu0 %v2436
    %v2780 = vpop.f32.mrf.mxu0
    %v2781 = vadd.f32 %v2752, %v2780
    %2782 = vmatmul.f32.gmra.mxu0 %v2438
    %v2783 = vpop.f32.mrf.mxu0
    %v2784 = vadd.f32 %v2755, %v2783
    %2785 = vmatmul.f32.gmra.mxu0 %v2440
    %v2786 = vpop.f32.mrf.mxu0
    %v2787 = vadd.f32 %v2758, %v2786
    %2788 = vdwg.mxu0
    %v2789 = vsub.f32 %v2488, %v2604
    %v2790 = vsub.f32 %v2546, %v2662
    %v2791 = vsub.f32 %v2491, %v2607
    %v2792 = vsub.f32 %v2549, %v2665
    %v2793 = vsub.f32 %v2494, %v2610
    %v2794 = vsub.f32 %v2552, %v2668
    %v2795 = vsub.f32 %v2497, %v2613
    %v2796 = vsub.f32 %v2555, %v2671
    %v2797 = vsub.f32 %v2720, %v2488
    %v2798 = vsub.f32 %v2778, %v2546
    %v2799 = vsub.f32 %v2723, %v2491
    %v2800 = vsub.f32 %v2781, %v2549
    %v2801 = vsub.f32 %v2726, %v2494
    %v2802 = vsub.f32 %v2784, %v2552
    %v2803 = vsub.f32 %v2729, %v2497
    %v2804 = vsub.f32 %v2787, %v2555
    %v2805 = vsub.f32 %v2797, %v2604
    %v2806 = vsub.f32 %v2798, %v2662
    %v2807 = vsub.f32 %v2799, %v2607
    %v2808 = vsub.f32 %v2800, %v2665
    %v2809 = vsub.f32 %v2801, %v2610
    %v2810 = vsub.f32 %v2802, %v2668
    %v2811 = vsub.f32 %v2803, %v2613
    %v2812 = vsub.f32 %v2804, %v2671
    %v2813 = vmul.f32 %v2789, %v2211
    %v2814 = vmul.f32 %v2790, %v2212
    %v2815 = vmul.f32 %v2791, %v2213
    %v2816 = vmul.f32 %v2792, %v2214
    %v2817 = vmul.f32 %v2793, %v2215
    %v2818 = vmul.f32 %v2794, %v2216
    %v2819 = vmul.f32 %v2795, %v2217
    %v2820 = vmul.f32 %v2796, %v2218
    %v2821 = vmul.f32 %v2805, %v2219
    %v2822 = vmul.f32 %v2806, %v2220
    %v2823 = vmul.f32 %v2807, %v2221
    %v2824 = vmul.f32 %v2808, %v2222
    %v2825 = vmul.f32 %v2809, %v2223
    %v2826 = vmul.f32 %v2810, %v2224
    %v2827 = vmul.f32 %v2811, %v2225
    %v2828 = vmul.f32 %v2812, %v2226
    %v2829 = vsub.f32 %v2813, %v2821
    %v2830 = vsub.f32 %v2814, %v2822
    %v2831 = vsub.f32 %v2815, %v2823
    %v2832 = vsub.f32 %v2816, %v2824
    %v2833 = vsub.f32 %v2817, %v2825
    %v2834 = vsub.f32 %v2818, %v2826
    %v2835 = vsub.f32 %v2819, %v2827
    %v2836 = vsub.f32 %v2820, %v2828
    %v2837 = vmul.f32 %v2789, %v2219
    %v2838 = vmul.f32 %v2790, %v2220
    %v2839 = vmul.f32 %v2791, %v2221
    %v2840 = vmul.f32 %v2792, %v2222
    %v2841 = vmul.f32 %v2793, %v2223
    %v2842 = vmul.f32 %v2794, %v2224
    %v2843 = vmul.f32 %v2795, %v2225
    %v2844 = vmul.f32 %v2796, %v2226
    %v2845 = vmul.f32 %v2805, %v2211
    %v2846 = vmul.f32 %v2806, %v2212
    %v2847 = vmul.f32 %v2807, %v2213
    %v2848 = vmul.f32 %v2808, %v2214
    %v2849 = vmul.f32 %v2809, %v2215
    %v2850 = vmul.f32 %v2810, %v2216
    %v2851 = vmul.f32 %v2811, %v2217
    %v2852 = vmul.f32 %v2812, %v2218
    %v2853 = vadd.f32 %v2837, %v2845
    %v2854 = vadd.f32 %v2838, %v2846
    %v2855 = vadd.f32 %v2839, %v2847
    %v2856 = vadd.f32 %v2840, %v2848
    %v2857 = vadd.f32 %v2841, %v2849
    %v2858 = vadd.f32 %v2842, %v2850
    %v2859 = vadd.f32 %v2843, %v2851
    %v2860 = vadd.f32 %v2844, %v2852
    %v2861 = vadd.f32 %v2829, %v2853
    %v2862 = vadd.f32 %v2830, %v2854
    %v2863 = vadd.f32 %v2831, %v2855
    %v2864 = vadd.f32 %v2832, %v2856
    %v2865 = vadd.f32 %v2833, %v2857
    %v2866 = vadd.f32 %v2834, %v2858
    %v2867 = vadd.f32 %v2835, %v2859
    %v2868 = vadd.f32 %v2836, %v2860
    %2869 = vmatpush.msra.mxu0 0.0
    %2870 = vmatpush.msra.mxu0 0.0
    %2871 = vmatpush.msra.mxu0 0.0
    %2872 = vmatpush.msra.mxu0 0.0
    %2873 = vmatpush.msra.mxu0 0.0
    %2874 = vmatpush.msra.mxu0 0.0
    %2875 = vmatpush.msra.mxu0 0.0
    %2876 = vmatpush.msra.mxu0 0.0
    %2877 = vmatpush.msra.mxu0 0.0
    %2878 = vmatpush.msra.mxu0 0.0
    %2879 = vmatpush.msra.mxu0 0.0
    %2880 = vmatpush.msra.mxu0 0.0
    %2881 = vmatpush.msra.mxu0 %v2835
    %2882 = vmatpush.msra.mxu0 %v2833
    %2883 = vmatpush.msra.mxu0 %v2831
    %2884 = vmatpush.msra.mxu0 %v2829
    %2885 = vmatmul.f32.gmra.mxu0 %v1534
    %v2886 = vpop.f32.mrf.mxu0
    %v2887 = vadd.f32 0.0, %v2886
    %2888 = vmatmul.f32.gmra.mxu0 %v1537
    %v2889 = vpop.f32.mrf.mxu0
    %v2890 = vadd.f32 0.0, %v2889
    %2891 = vmatmul.f32.gmra.mxu0 %v1540
    %v2892 = vpop.f32.mrf.mxu0
    %v2893 = vadd.f32 0.0, %v2892
    %2894 = vmatmul.f32.gmra.mxu0 %v1543
    %v2895 = vpop.f32.mrf.mxu0
    %v2896 = vadd.f32 0.0, %v2895
    %2897 = vdwg.mxu0
    %2898 = vmatpush.msra.mxu0 0.0
    %2899 = vmatpush.msra.mxu0 0.0
    %2900 = vmatpush.msra.mxu0 0.0
    %2901 = vmatpush.msra.mxu0 0.0
    %2902 = vmatpush.msra.mxu0 0.0
    %2903 = vmatpush.msra.mxu0 0.0
    %2904 = vmatpush.msra.mxu0 0.0
    %2905 = vmatpush.msra.mxu0 0.0
    %2906 = vmatpush.msra.mxu0 0.0
    %2907 = vmatpush.msra.mxu0 0.0
    %2908 = vmatpush.msra.mxu0 0.0
    %2909 = vmatpush.msra.mxu0 0.0
    %2910 = vmatpush.msra.mxu0 %v2836
    %2911 = vmatpush.msra.mxu0 %v2834
    %2912 = vmatpush.msra.mxu0 %v2832
    %2913 = vmatpush.msra.mxu0 %v2830
    %2914 = vmatmul.f32.gmra.mxu0 %v1534
    %v2915 = vpop.f32.mrf.mxu0
    %v2916 = vadd.f32 0.0, %v2915
    %2917 = vmatmul.f32.gmra.mxu0 %v1537
    %v2918 = vpop.f32.mrf.mxu0
    %v2919 = vadd.f32 0.0, %v2918
    %2920 = vmatmul.f32.gmra.mxu0 %v1540
    %v2921 = vpop.f32.mrf.mxu0
    %v2922 = vadd.f32 0.0, %v2921
    %2923 = vmatmul.f32.gmra.mxu0 %v1543
    %v2924 = vpop.f32.mrf.mxu0
    %v2925 = vadd.f32 0.0, %v2924
    %2926 = vdwg.mxu0
    %2927 = vmatpush.msra.mxu0 0.0
    %2928 = vmatpush.msra.mxu0 0.0
    %2929 = vmatpush.msra.mxu0 0.0
    %2930 = vmatpush.msra.mxu0 0.0
    %2931 = vmatpush.msra.mxu0 0.0
    %2932 = vmatpush.msra.mxu0 0.0
    %2933 = vmatpush.msra.mxu0 0.0
    %2934 = vmatpush.msra.mxu0 0.0
    %2935 = vmatpush.msra.mxu0 0.0
    %2936 = vmatpush.msra.mxu0 0.0
    %2937 = vmatpush.msra.mxu0 0.0
    %2938 = vmatpush.msra.mxu0 0.0
    %2939 = vmatpush.msra.mxu0 %v2859
    %2940 = vmatpush.msra.mxu0 %v2857
    %2941 = vmatpush.msra.mxu0 %v2855
    %2942 = vmatpush.msra.mxu0 %v2853
    %2943 = vmatmul.f32.gmra.mxu0 %v1604
    %v2944 = vpop.f32.mrf.mxu0
    %v2945 = vadd.f32 0.0, %v2944
    %2946 = vmatmul.f32.gmra.mxu0 %v1607
    %v2947 = vpop.f32.mrf.mxu0
    %v2948 = vadd.f32 0.0, %v2947
    %2949 = vmatmul.f32.gmra.mxu0 %v1610
    %v2950 = vpop.f32.mrf.mxu0
    %v2951 = vadd.f32 0.0, %v2950
    %2952 = vmatmul.f32.gmra.mxu0 %v1613
    %v2953 = vpop.f32.mrf.mxu0
    %v2954 = vadd.f32 0.0, %v2953
    %2955 = vdwg.mxu0
    %2956 = vmatpush.msra.mxu0 0.0
    %2957 = vmatpush.msra.mxu0 0.0
    %2958 = vmatpush.msra.mxu0 0.0
    %2959 = vmatpush.msra.mxu0 0.0
    %2960 = vmatpush.msra.mxu0 0.0
    %2961 = vmatpush.msra.mxu0 0.0
    %2962 = vmatpush.msra.mxu0 0.0
    %2963 = vmatpush.msra.mxu0 0.0
    %2964 = vmatpush.msra.mxu0 0.0
    %2965 = vmatpush.msra.mxu0 0.0
    %2966 = vmatpush.msra.mxu0 0.0
    %2967 = vmatpush.msra.mxu0 0.0
    %2968 = vmatpush.msra.mxu0 %v2860
    %2969 = vmatpush.msra.mxu0 %v2858
    %2970 = vmatpush.msra.mxu0 %v2856
    %2971 = vmatpush.msra.mxu0 %v2854
    %2972 = vmatmul.f32.gmra.mxu0 %v1604
    %v2973 = vpop.f32.mrf.mxu0
    %v2974 = vadd.f32 0.0, %v2973
    %2975 = vmatmul.f32.gmra.mxu0 %v1607
    %v2976 = vpop.f32.mrf.mxu0
    %v2977 = vadd.f32 0.0, %v2976
    %2978 = vmatmul.f32.gmra.mxu0 %v1610
    %v2979 = vpop.f32.mrf.mxu0
    %v2980 = vadd.f32 0.0, %v2979
    %2981 = vmatmul.f32.gmra.mxu0 %v1613
    %v2982 = vpop.f32.mrf.mxu0
    %v2983 = vadd.f32 0.0, %v2982
    %2984 = vdwg.mxu0
    %2985 = vmatpush.msra.mxu0 0.0
    %2986 = vmatpush.msra.mxu0 0.0
    %2987 = vmatpush.msra.mxu0 0.0
    %2988 = vmatpush.msra.mxu0 0.0
    %2989 = vmatpush.msra.mxu0 0.0
    %2990 = vmatpush.msra.mxu0 0.0
    %2991 = vmatpush.msra.mxu0 0.0
    %2992 = vmatpush.msra.mxu0 0.0
    %2993 = vmatpush.msra.mxu0 0.0
    %2994 = vmatpush.msra.mxu0 0.0
    %2995 = vmatpush.msra.mxu0 0.0
    %2996 = vmatpush.msra.mxu0 0.0
    %2997 = vmatpush.msra.mxu0 %v2867
    %2998 = vmatpush.msra.mxu0 %v2865
    %2999 = vmatpush.msra.mxu0 %v2863
    %3000 = vmatpush.msra.mxu0 %v2861
    %3001 = vmatmul.f32.gmra.mxu0 %v1674
    %v3002 = vpop.f32.mrf.mxu0
    %v3003 = vadd.f32 0.0, %v3002
    %3004 = vmatmul.f32.gmra.mxu0 %v1677
    %v3005 = vpop.f32.mrf.mxu0
    %v3006 = vadd.f32 0.0, %v3005
    %3007 = vmatmul.f32.gmra.mxu0 %v1680
    %v3008 = vpop.f32.mrf.mxu0
    %v3009 = vadd.f32 0.0, %v3008
    %3010 = vmatmul.f32.gmra.mxu0 %v1683
    %v3011 = vpop.f32.mrf.mxu0
    %v3012 = vadd.f32 0.0, %v3011
    %3013 = vdwg.mxu0
    %3014 = vmatpush.msra.mxu0 0.0
    %3015 = vmatpush.msra.mxu0 0.0
    %3016 = vmatpush.msra.mxu0 0.0
    %3017 = vmatpush.msra.mxu0 0.0
    %3018 = vmatpush.msra.mxu0 0.0
    %3019 = vmatpush.msra.mxu0 0.0
    %3020 = vmatpush.msra.mxu0 0.0
    %3021 = vmatpush.msra.mxu0 0.0
    %3022 = vmatpush.msra.mxu0 0.0
    %3023 = vmatpush.msra.mxu0 0.0
    %3024 = vmatpush.msra.mxu0 0.0
    %3025 = vmatpush.msra.mxu0 0.0
    %3026 = vmatpush.msra.mxu0 %v2868
    %3027 = vmatpush.msra.mxu0 %v2866
    %3028 = vmatpush.msra.mxu0 %v2864
    %3029 = vmatpush.msra.mxu0 %v2862
    %3030 = vmatmul.f32.gmra.mxu0 %v1674
    %v3031 = vpop.f32.mrf.mxu0
    %v3032 = vadd.f32 0.0, %v3031
    %3033 = vmatmul.f32.gmra.mxu0 %v1677
    %v3034 = vpop.f32.mrf.mxu0
    %v3035 = vadd.f32 0.0, %v3034
    %3036 = vmatmul.f32.gmra.mxu0 %v1680
    %v3037 = vpop.f32.mrf.mxu0
    %v3038 = vadd.f32 0.0, %v3037
    %3039 = vmatmul.f32.gmra.mxu0 %v1683
    %v3040 = vpop.f32.mrf.mxu0
    %v3041 = vadd.f32 0.0, %v3040
    %3042 = vdwg.mxu0
    %v3043 = vsub.f32 %v2887, %v2945
    %v3044 = vsub.f32 %v2916, %v2974
    %v3045 = vsub.f32 %v2890, %v2948
    %v3046 = vsub.f32 %v2919, %v2977
    %v3047 = vsub.f32 %v2893, %v2951
    %v3048 = vsub.f32 %v2922, %v2980
    %v3049 = vsub.f32 %v2896, %v2954
    %v3050 = vsub.f32 %v2925, %v2983
    %v3051 = vsub.f32 %v3003, %v2887
    %v3052 = vsub.f32 %v3032, %v2916
    %v3053 = vsub.f32 %v3006, %v2890
    %v3054 = vsub.f32 %v3035, %v2919
    %v3055 = vsub.f32 %v3009, %v2893
    %v3056 = vsub.f32 %v3038, %v2922
    %v3057 = vsub.f32 %v3012, %v2896
    %v3058 = vsub.f32 %v3041, %v2925
    %v3059 = vsub.f32 %v3051, %v2945
    %v3060 = vsub.f32 %v3052, %v2974
    %v3061 = vsub.f32 %v3053, %v2948
    %v3062 = vsub.f32 %v3054, %v2977
    %v3063 = vsub.f32 %v3055, %v2951
    %v3064 = vsub.f32 %v3056, %v2980
    %v3065 = vsub.f32 %v3057, %v2954
    %v3066 = vsub.f32 %v3058, %v2983
    %v3067 = vadd.f32 %v3043, %v3059
    %v3068 = vadd.f32 %v3044, %v3060
    %v3069 = vadd.f32 %v3045, %v3061
    %v3070 = vadd.f32 %v3046, %v3062
    %v3071 = vadd.f32 %v3047, %v3063
    %v3072 = vadd.f32 %v3048, %v3064
    %v3073 = vadd.f32 %v3049, %v3065
    %v3074 = vadd.f32 %v3050, %v3066
    %3075 = vmatpush.msra.mxu0 %v660
    %3076 = vmatpush.msra.mxu0 %v658
    %3077 = vmatpush.msra.mxu0 %v656
    %3078 = vmatpush.msra.mxu0 %v654
    %3079 = vmatpush.msra.mxu0 %v652
    %3080 = vmatpush.msra.mxu0 %v650
    %3081 = vmatpush.msra.mxu0 %v648
    %3082 = vmatpush.msra.mxu0 %v646
    %3083 = vmatpush.msra.mxu0 %v644
    %3084 = vmatpush.msra.mxu0 %v642
    %3085 = vmatpush.msra.mxu0 %v640
    %3086 = vmatpush.msra.mxu0 %v638
    %3087 = vmatpush.msra.mxu0 %v636
    %3088 = vmatpush.msra.mxu0 %v634
    %3089 = vmatpush.msra.mxu0 %v632
    %3090 = vmatpush.msra.mxu0 %v630
    %3091 = vmatmul.f32.gmra.mxu0 %v3043
    %v3092 = vpop.f32.mrf.mxu0
    %v3093 = vadd.f32 0.0, %v3092
    %3094 = vmatmul.f32.gmra.mxu0 %v3045
    %v3095 = vpop.f32.mrf.mxu0
    %v3096 = vadd.f32 0.0, %v3095
    %3097 = vmatmul.f32.gmra.mxu0 %v3047
    %v3098 = vpop.f32.mrf.mxu0
    %v3099 = vadd.f32 0.0, %v3098
    %3100 = vmatmul.f32.gmra.mxu0 %v3049
    %v3101 = vpop.f32.mrf.mxu0
    %v3102 = vadd.f32 0.0, %v3101
    %3103 = vdwg.mxu0
    %3104 = vmatpush.msra.mxu0 %v692
    %3105 = vmatpush.msra.mxu0 %v690
    %3106 = vmatpush.msra.mxu0 %v688
    %3107 = vmatpush.msra.mxu0 %v686
    %3108 = vmatpush.msra.mxu0 %v684
    %3109 = vmatpush.msra.mxu0 %v682
    %3110 = vmatpush.msra.mxu0 %v680
    %3111 = vmatpush.msra.mxu0 %v678
    %3112 = vmatpush.msra.mxu0 %v676
    %3113 = vmatpush.msra.mxu0 %v674
    %3114 = vmatpush.msra.mxu0 %v672
    %3115 = vmatpush.msra.mxu0 %v670
    %3116 = vmatpush.msra.mxu0 %v668
    %3117 = vmatpush.msra.mxu0 %v666
    %3118 = vmatpush.msra.mxu0 %v664
    %3119 = vmatpush.msra.mxu0 %v662
    %3120 = vmatmul.f32.gmra.mxu0 %v3044
    %v3121 = vpop.f32.mrf.mxu0
    %v3122 = vadd.f32 %v3093, %v3121
    %3123 = vmatmul.f32.gmra.mxu0 %v3046
    %v3124 = vpop.f32.mrf.mxu0
    %v3125 = vadd.f32 %v3096, %v3124
    %3126 = vmatmul.f32.gmra.mxu0 %v3048
    %v3127 = vpop.f32.mrf.mxu0
    %v3128 = vadd.f32 %v3099, %v3127
    %3129 = vmatmul.f32.gmra.mxu0 %v3050
    %v3130 = vpop.f32.mrf.mxu0
    %v3131 = vadd.f32 %v3102, %v3130
    %3132 = vdwg.mxu0
    %3133 = vmatpush.msra.mxu0 %v661
    %3134 = vmatpush.msra.mxu0 %v659
    %3135 = vmatpush.msra.mxu0 %v657
    %3136 = vmatpush.msra.mxu0 %v655
    %3137 = vmatpush.msra.mxu0 %v653
    %3138 = vmatpush.msra.mxu0 %v651
    %3139 = vmatpush.msra.mxu0 %v649
    %3140 = vmatpush.msra.mxu0 %v647
    %3141 = vmatpush.msra.mxu0 %v645
    %3142 = vmatpush.msra.mxu0 %v643
    %3143 = vmatpush.msra.mxu0 %v641
    %3144 = vmatpush.msra.mxu0 %v639
    %3145 = vmatpush.msra.mxu0 %v637
    %3146 = vmatpush.msra.mxu0 %v635
    %3147 = vmatpush.msra.mxu0 %v633
    %3148 = vmatpush.msra.mxu0 %v631
    %3149 = vmatmul.f32.gmra.mxu0 %v3043
    %v3150 = vpop.f32.mrf.mxu0
    %v3151 = vadd.f32 0.0, %v3150
    %3152 = vmatmul.f32.gmra.mxu0 %v3045
    %v3153 = vpop.f32.mrf.mxu0
    %v3154 = vadd.f32 0.0, %v3153
    %3155 = vmatmul.f32.gmra.mxu0 %v3047
    %v3156 = vpop.f32.mrf.mxu0
    %v3157 = vadd.f32 0.0, %v3156
    %3158 = vmatmul.f32.gmra.mxu0 %v3049
    %v3159 = vpop.f32.mrf.mxu0
    %v3160 = vadd.f32 0.0, %v3159
    %3161 = vdwg.mxu0
    %3162 = vmatpush.msra.mxu0 %v693
    %3163 = vmatpush.msra.mxu0 %v691
    %3164 = vmatpush.msra.mxu0 %v689
    %3165 = vmatpush.msra.mxu0 %v687
    %3166 = vmatpush.msra.mxu0 %v685
    %3167 = vmatpush.msra.mxu0 %v683
    %3168 = vmatpush.msra.mxu0 %v681
    %3169 = vmatpush.msra.mxu0 %v679
    %3170 = vmatpush.msra.mxu0 %v677
    %3171 = vmatpush.msra.mxu0 %v675
    %3172 = vmatpush.msra.mxu0 %v673
    %3173 = vmatpush.msra.mxu0 %v671
    %3174 = vmatpush.msra.mxu0 %v669
    %3175 = vmatpush.msra.mxu0 %v667
    %3176 = vmatpush.msra.mxu0 %v665
    %3177 = vmatpush.msra.mxu0 %v663
    %3178 = vmatmul.f32.gmra.mxu0 %v3044
    %v3179 = vpop.f32.mrf.mxu0
    %v3180 = vadd.f32 %v3151, %v3179
    %3181 = vmatmul.f32.gmra.mxu0 %v3046
    %v3182 = vpop.f32.mrf.mxu0
    %v3183 = vadd.f32 %v3154, %v3182
    %3184 = vmatmul.f32.gmra.mxu0 %v3048
    %v3185 = vpop.f32.mrf.mxu0
    %v3186 = vadd.f32 %v3157, %v3185
    %3187 = vmatmul.f32.gmra.mxu0 %v3050
    %v3188 = vpop.f32.mrf.mxu0
    %v3189 = vadd.f32 %v3160, %v3188
    %3190 = vdwg.mxu0
    %3191 = vmatpush.msra.mxu0 %v724
    %3192 = vmatpush.msra.mxu0 %v722
    %3193 = vmatpush.msra.mxu0 %v720
    %3194 = vmatpush.msra.mxu0 %v718
    %3195 = vmatpush.msra.mxu0 %v716
    %3196 = vmatpush.msra.mxu0 %v714
    %3197 = vmatpush.msra.mxu0 %v712
    %3198 = vmatpush.msra.mxu0 %v710
    %3199 = vmatpush.msra.mxu0 %v708
    %3200 = vmatpush.msra.mxu0 %v706
    %3201 = vmatpush.msra.mxu0 %v704
    %3202 = vmatpush.msra.mxu0 %v702
    %3203 = vmatpush.msra.mxu0 %v700
    %3204 = vmatpush.msra.mxu0 %v698
    %3205 = vmatpush.msra.mxu0 %v696
    %3206 = vmatpush.msra.mxu0 %v694
    %3207 = vmatmul.f32.gmra.mxu0 %v3059
    %v3208 = vpop.f32.mrf.mxu0
    %v3209 = vadd.f32 0.0, %v3208
    %3210 = vmatmul.f32.gmra.mxu0 %v3061
    %v3211 = vpop.f32.mrf.mxu0
    %v3212 = vadd.f32 0.0, %v3211
    %3213 = vmatmul.f32.gmra.mxu0 %v3063
    %v3214 = vpop.f32.mrf.mxu0
    %v3215 = vadd.f32 0.0, %v3214
    %3216 = vmatmul.f32.gmra.mxu0 %v3065
    %v3217 = vpop.f32.mrf.mxu0
    %v3218 = vadd.f32 0.0, %v3217
    %3219 = vdwg.mxu0
    %3220 = vmatpush.msra.mxu0 %v756
    %3221 = vmatpush.msra.mxu0 %v754
    %3222 = vmatpush.msra.mxu0 %v752
    %3223 = vmatpush.msra.mxu0 %v750
    %3224 = vmatpush.msra.mxu0 %v748
    %3225 = vmatpush.msra.mxu0 %v746
    %3226 = vmatpush.msra.mxu0 %v744
    %3227 = vmatpush.msra.mxu0 %v742
    %3228 = vmatpush.msra.mxu0 %v740
    %3229 = vmatpush.msra.mxu0 %v738
    %3230 = vmatpush.msra.mxu0 %v736
    %3231 = vmatpush.msra.mxu0 %v734
    %3232 = vmatpush.msra.mxu0 %v732
    %3233 = vmatpush.msra.mxu0 %v730
    %3234 = vmatpush.msra.mxu0 %v728
    %3235 = vmatpush.msra.mxu0 %v726
    %3236 = vmatmul.f32.gmra.mxu0 %v3060
    %v3237 = vpop.f32.mrf.mxu0
    %v3238 = vadd.f32 %v3209, %v3237
    %3239 = vmatmul.f32.gmra.mxu0 %v3062
    %v3240 = vpop.f32.mrf.mxu0
    %v3241 = vadd.f32 %v3212, %v3240
    %3242 = vmatmul.f32.gmra.mxu0 %v3064
    %v3243 = vpop.f32.mrf.mxu0
    %v3244 = vadd.f32 %v3215, %v3243
    %3245 = vmatmul.f32.gmra.mxu0 %v3066
    %v3246 = vpop.f32.mrf.mxu0
    %v3247 = vadd.f32 %v3218, %v3246
    %3248 = vdwg.mxu0
    %3249 = vmatpush.msra.mxu0 %v725
    %3250 = vmatpush.msra.mxu0 %v723
    %3251 = vmatpush.msra.mxu0 %v721
    %3252 = vmatpush.msra.mxu0 %v719
    %3253 = vmatpush.msra.mxu0 %v717
    %3254 = vmatpush.msra.mxu0 %v715
    %3255 = vmatpush.msra.mxu0 %v713
    %3256 = vmatpush.msra.mxu0 %v711
    %3257 = vmatpush.msra.mxu0 %v709
    %3258 = vmatpush.msra.mxu0 %v707
    %3259 = vmatpush.msra.mxu0 %v705
    %3260 = vmatpush.msra.mxu0 %v703
    %3261 = vmatpush.msra.mxu0 %v701
    %3262 = vmatpush.msra.mxu0 %v699
    %3263 = vmatpush.msra.mxu0 %v697
    %3264 = vmatpush.msra.mxu0 %v695
    %3265 = vmatmul.f32.gmra.mxu0 %v3059
    %v3266 = vpop.f32.mrf.mxu0
    %v3267 = vadd.f32 0.0, %v3266
    %3268 = vmatmul.f32.gmra.mxu0 %v3061
    %v3269 = vpop.f32.mrf.mxu0
    %v3270 = vadd.f32 0.0, %v3269
    %3271 = vmatmul.f32.gmra.mxu0 %v3063
    %v3272 = vpop.f32.mrf.mxu0
    %v3273 = vadd.f32 0.0, %v3272
    %3274 = vmatmul.f32.gmra.mxu0 %v3065
    %v3275 = vpop.f32.mrf.mxu0
    %v3276 = vadd.f32 0.0, %v3275
    %3277 = vdwg.mxu0
    %3278 = vmatpush.msra.mxu0 %v757
    %3279 = vmatpush.msra.mxu0 %v755
    %3280 = vmatpush.msra.mxu0 %v753
    %3281 = vmatpush.msra.mxu0 %v751
    %3282 = vmatpush.msra.mxu0 %v749
    %3283 = vmatpush.msra.mxu0 %v747
    %3284 = vmatpush.msra.mxu0 %v745
    %3285 = vmatpush.msra.mxu0 %v743
    %3286 = vmatpush.msra.mxu0 %v741
    %3287 = vmatpush.msra.mxu0 %v739
    %3288 = vmatpush.msra.mxu0 %v737
    %3289 = vmatpush.msra.mxu0 %v735
    %3290 = vmatpush.msra.mxu0 %v733
    %3291 = vmatpush.msra.mxu0 %v731
    %3292 = vmatpush.msra.mxu0 %v729
    %3293 = vmatpush.msra.mxu0 %v727
    %3294 = vmatmul.f32.gmra.mxu0 %v3060
    %v3295 = vpop.f32.mrf.mxu0
    %v3296 = vadd.f32 %v3267, %v3295
    %3297 = vmatmul.f32.gmra.mxu0 %v3062
    %v3298 = vpop.f32.mrf.mxu0
    %v3299 = vadd.f32 %v3270, %v3298
    %3300 = vmatmul.f32.gmra.mxu0 %v3064
    %v3301 = vpop.f32.mrf.mxu0
    %v3302 = vadd.f32 %v3273, %v3301
    %3303 = vmatmul.f32.gmra.mxu0 %v3066
    %v3304 = vpop.f32.mrf.mxu0
    %v3305 = vadd.f32 %v3276, %v3304
    %3306 = vdwg.mxu0
    %3307 = vmatpush.msra.mxu0 %v788
    %3308 = vmatpush.msra.mxu0 %v786
    %3309 = vmatpush.msra.mxu0 %v784
    %3310 = vmatpush.msra.mxu0 %v782
    %3311 = vmatpush.msra.mxu0 %v780
    %3312 = vmatpush.msra.mxu0 %v778
    %3313 = vmatpush.msra.mxu0 %v776
    %3314 = vmatpush.msra.mxu0 %v774
    %3315 = vmatpush.msra.mxu0 %v772
    %3316 = vmatpush.msra.mxu0 %v770
    %3317 = vmatpush.msra.mxu0 %v768
    %3318 = vmatpush.msra.mxu0 %v766
    %3319 = vmatpush.msra.mxu0 %v764
    %3320 = vmatpush.msra.mxu0 %v762
    %3321 = vmatpush.msra.mxu0 %v760
    %3322 = vmatpush.msra.mxu0 %v758
    %3323 = vmatmul.f32.gmra.mxu0 %v3067
    %v3324 = vpop.f32.mrf.mxu0
    %v3325 = vadd.f32 0.0, %v3324
    %3326 = vmatmul.f32.gmra.mxu0 %v3069
    %v3327 = vpop.f32.mrf.mxu0
    %v3328 = vadd.f32 0.0, %v3327
    %3329 = vmatmul.f32.gmra.mxu0 %v3071
    %v3330 = vpop.f32.mrf.mxu0
    %v3331 = vadd.f32 0.0, %v3330
    %3332 = vmatmul.f32.gmra.mxu0 %v3073
    %v3333 = vpop.f32.mrf.mxu0
    %v3334 = vadd.f32 0.0, %v3333
    %3335 = vdwg.mxu0
    %3336 = vmatpush.msra.mxu0 %v820
    %3337 = vmatpush.msra.mxu0 %v818
    %3338 = vmatpush.msra.mxu0 %v816
    %3339 = vmatpush.msra.mxu0 %v814
    %3340 = vmatpush.msra.mxu0 %v812
    %3341 = vmatpush.msra.mxu0 %v810
    %3342 = vmatpush.msra.mxu0 %v808
    %3343 = vmatpush.msra.mxu0 %v806
    %3344 = vmatpush.msra.mxu0 %v804
    %3345 = vmatpush.msra.mxu0 %v802
    %3346 = vmatpush.msra.mxu0 %v800
    %3347 = vmatpush.msra.mxu0 %v798
    %3348 = vmatpush.msra.mxu0 %v796
    %3349 = vmatpush.msra.mxu0 %v794
    %3350 = vmatpush.msra.mxu0 %v792
    %3351 = vmatpush.msra.mxu0 %v790
    %3352 = vmatmul.f32.gmra.mxu0 %v3068
    %v3353 = vpop.f32.mrf.mxu0
    %v3354 = vadd.f32 %v3325, %v3353
    %3355 = vmatmul.f32.gmra.mxu0 %v3070
    %v3356 = vpop.f32.mrf.mxu0
    %v3357 = vadd.f32 %v3328, %v3356
    %3358 = vmatmul.f32.gmra.mxu0 %v3072
    %v3359 = vpop.f32.mrf.mxu0
    %v3360 = vadd.f32 %v3331, %v3359
    %3361 = vmatmul.f32.gmra.mxu0 %v3074
    %v3362 = vpop.f32.mrf.mxu0
    %v3363 = vadd.f32 %v3334, %v3362
    %3364 = vdwg.mxu0
    %3365 = vmatpush.msra.mxu0 %v789
    %3366 = vmatpush.msra.mxu0 %v787
    %3367 = vmatpush.msra.mxu0 %v785
    %3368 = vmatpush.msra.mxu0 %v783
    %3369 = vmatpush.msra.mxu0 %v781
    %3370 = vmatpush.msra.mxu0 %v779
    %3371 = vmatpush.msra.mxu0 %v777
    %3372 = vmatpush.msra.mxu0 %v775
    %3373 = vmatpush.msra.mxu0 %v773
    %3374 = vmatpush.msra.mxu0 %v771
    %3375 = vmatpush.msra.mxu0 %v769
    %3376 = vmatpush.msra.mxu0 %v767
    %3377 = vmatpush.msra.mxu0 %v765
    %3378 = vmatpush.msra.mxu0 %v763
    %3379 = vmatpush.msra.mxu0 %v761
    %3380 = vmatpush.msra.mxu0 %v759
    %3381 = vmatmul.f32.gmra.mxu0 %v3067
    %v3382 = vpop.f32.mrf.mxu0
    %v3383 = vadd.f32 0.0, %v3382
    %3384 = vmatmul.f32.gmra.mxu0 %v3069
    %v3385 = vpop.f32.mrf.mxu0
    %v3386 = vadd.f32 0.0, %v3385
    %3387 = vmatmul.f32.gmra.mxu0 %v3071
    %v3388 = vpop.f32.mrf.mxu0
    %v3389 = vadd.f32 0.0, %v3388
    %3390 = vmatmul.f32.gmra.mxu0 %v3073
    %v3391 = vpop.f32.mrf.mxu0
    %v3392 = vadd.f32 0.0, %v3391
    %3393 = vdwg.mxu0
    %3394 = vmatpush.msra.mxu0 %v821
    %3395 = vmatpush.msra.mxu0 %v819
    %3396 = vmatpush.msra.mxu0 %v817
    %3397 = vmatpush.msra.mxu0 %v815
    %3398 = vmatpush.msra.mxu0 %v813
    %3399 = vmatpush.msra.mxu0 %v811
    %3400 = vmatpush.msra.mxu0 %v809
    %3401 = vmatpush.msra.mxu0 %v807
    %3402 = vmatpush.msra.mxu0 %v805
    %3403 = vmatpush.msra.mxu0 %v803
    %3404 = vmatpush.msra.mxu0 %v801
    %3405 = vmatpush.msra.mxu0 %v799
    %3406 = vmatpush.msra.mxu0 %v797
    %3407 = vmatpush.msra.mxu0 %v795
    %3408 = vmatpush.msra.mxu0 %v793
    %3409 = vmatpush.msra.mxu0 %v791
    %3410 = vmatmul.f32.gmra.mxu0 %v3068
    %v3411 = vpop.f32.mrf.mxu0
    %v3412 = vadd.f32 %v3383, %v3411
    %3413 = vmatmul.f32.gmra.mxu0 %v3070
    %v3414 = vpop.f32.mrf.mxu0
    %v3415 = vadd.f32 %v3386, %v3414
    %3416 = vmatmul.f32.gmra.mxu0 %v3072
    %v3417 = vpop.f32.mrf.mxu0
    %v3418 = vadd.f32 %v3389, %v3417
    %3419 = vmatmul.f32.gmra.mxu0 %v3074
    %v3420 = vpop.f32.mrf.mxu0
    %v3421 = vadd.f32 %v3392, %v3420
    %3422 = vdwg.mxu0
    %v3423 = vsub.f32 %v3122, %v3238
    %v3424 = vsub.f32 %v3180, %v3296
    %v3425 = vsub.f32 %v3125, %v3241
    %v3426 = vsub.f32 %v3183, %v3299
    %v3427 = vsub.f32 %v3128, %v3244
    %v3428 = vsub.f32 %v3186, %v3302
    %v3429 = vsub.f32 %v3131, %v3247
    %v3430 = vsub.f32 %v3189, %v3305
    %v3431 = vsub.f32 %v3354, %v3122
    %v3432 = vsub.f32 %v3412, %v3180
    %v3433 = vsub.f32 %v3357, %v3125
    %v3434 = vsub.f32 %v3415, %v3183
    %v3435 = vsub.f32 %v3360, %v3128
    %v3436 = vsub.f32 %v3418, %v3186
    %v3437 = vsub.f32 %v3363, %v3131
    %v3438 = vsub.f32 %v3421, %v3189
    %v3439 = vsub.f32 %v3431, %v3238
    %v3440 = vsub.f32 %v3432, %v3296
    %v3441 = vsub.f32 %v3433, %v3241
    %v3442 = vsub.f32 %v3434, %v3299
    %v3443 = vsub.f32 %v3435, %v3244
    %v3444 = vsub.f32 %v3436, %v3302
    %v3445 = vsub.f32 %v3437, %v3247
    %v3446 = vsub.f32 %v3438, %v3305
    %v3447 = vmul.f32 %v3423, %v3423
    %v3448 = vmul.f32 %v3424, %v3424
    %v3449 = vmul.f32 %v3425, %v3425
    %v3450 = vmul.f32 %v3426, %v3426
    %v3451 = vmul.f32 %v3427, %v3427
    %v3452 = vmul.f32 %v3428, %v3428
    %v3453 = vmul.f32 %v3429, %v3429
    %v3454 = vmul.f32 %v3430, %v3430
    %v3455 = vmul.f32 %v3439, %v3439
    %v3456 = vmul.f32 %v3440, %v3440
    %v3457 = vmul.f32 %v3441, %v3441
    %v3458 = vmul.f32 %v3442, %v3442
    %v3459 = vmul.f32 %v3443, %v3443
    %v3460 = vmul.f32 %v3444, %v3444
    %v3461 = vmul.f32 %v3445, %v3445
    %v3462 = vmul.f32 %v3446, %v3446
    %v3463 = vadd.f32 %v3447, %v3455
    %v3464 = vadd.f32 %v3448, %v3456
    %v3465 = vadd.f32 %v3449, %v3457
    %v3466 = vadd.f32 %v3450, %v3458
    %v3467 = vadd.f32 %v3451, %v3459
    %v3468 = vadd.f32 %v3452, %v3460
    %v3469 = vadd.f32 %v3453, %v3461
    %v3470 = vadd.f32 %v3454, %v3462
    %v3471 = vld [vmem:[#allocation34] sm:$0xff]
    %v3472 = vld [vmem:[#allocation34 + $0x8] sm:$0xff]
    %v3473 = vld [vmem:[#allocation34 + $0x10] sm:$0xff]
    %v3474 = vld [vmem:[#allocation34 + $0x18] sm:$0xff]
    %v3475 = vld [vmem:[#allocation34 + $0x20] sm:$0xff]
    %v3476 = vld [vmem:[#allocation34 + $0x28] sm:$0xff]
    %v3477 = vld [vmem:[#allocation34 + $0x30] sm:$0xff]
    %v3478 = vld [vmem:[#allocation34 + $0x38] sm:$0xff]
    %v3479 = vadd.f32 %v3471, 1.0
    %v3480 = vadd.f32 %v3472, 1.0
    %v3481 = vadd.f32 %v3473, 1.0
    %v3482 = vadd.f32 %v3474, 1.0
    %v3483 = vadd.f32 %v3475, 1.0
    %v3484 = vadd.f32 %v3476, 1.0
    %v3485 = vadd.f32 %v3477, 1.0
    %v3486 = vadd.f32 %v3478, 1.0
    %v3487 = vmul.f32 %v3463, %v3479
    %v3488 = vmul.f32 %v3464, %v3480
    %v3489 = vmul.f32 %v3465, %v3481
    %v3490 = vmul.f32 %v3466, %v3482
    %v3491 = vmul.f32 %v3467, %v3483
    %v3492 = vmul.f32 %v3468, %v3484
    %v3493 = vmul.f32 %v3469, %v3485
    %v3494 = vmul.f32 %v3470, %v3486
    %v3495 = vld [vmem:[#allocation35] sm:$0xff]
    %v3496 = vld [vmem:[#allocation35 + $0x8] sm:$0xff]
    %v3497 = vld [vmem:[#allocation35 + $0x10] sm:$0xff]
    %v3498 = vld [vmem:[#allocation35 + $0x18] sm:$0xff]
    %v3499 = vld [vmem:[#allocation35 + $0x20] sm:$0xff]
    %v3500 = vld [vmem:[#allocation35 + $0x28] sm:$0xff]
    %v3501 = vld [vmem:[#allocation35 + $0x30] sm:$0xff]
    %v3502 = vld [vmem:[#allocation35 + $0x38] sm:$0xff]
    %v3503 = vadd.f32 %v3487, %v3495
    %v3504 = vadd.f32 %v3488, %v3496
    %v3505 = vadd.f32 %v3489, %v3497
    %v3506 = vadd.f32 %v3490, %v3498
    %v3507 = vadd.f32 %v3491, %v3499
    %v3508 = vadd.f32 %v3492, %v3500
    %v3509 = vadd.f32 %v3493, %v3501
    %v3510 = vadd.f32 %v3494, %v3502
    %3511 = vst [vmem:[#allocation37] sm:$0xff] %v3503
    %3512 = vst [vmem:[#allocation37 + $0x8] sm:$0xff] %v3504
    %3513 = vst [vmem:[#allocation37 + $0x10] sm:$0xff] %v3505
    %3514 = vst [vmem:[#allocation37 + $0x18] sm:$0xff] %v3506
    %3515 = vst [vmem:[#allocation37 + $0x20] sm:$0xff] %v3507
    %3516 = vst [vmem:[#allocation37 + $0x28] sm:$0xff] %v3508
    %3517 = vst [vmem:[#allocation37 + $0x30] sm:$0xff] %v3509
    %3518 = vst [vmem:[#allocation37 + $0x38] sm:$0xff] %v3510
    // Predicated region
    $region178: #{tpu_custom_call.1} parent=1 // pred_check
      _
    $region179: #{tpu_custom_call.1} parent=1 // pred_check_branch
      %3520 = sbr.rel (0) target = $region181
    $region180: #{tpu_custom_call.1} parent=1 // pred_region
      %3522 = vsyncadd [#allocation4], 0
      %s3523 = sshll.u32 [#allocation37], 4
      %s3524 = int_to_ptr.vmem [resolvable:$true] %s3523
      %s3525 = sshll.u32 %s22, 4
      %s3526 = int_to_ptr.hbm [resolvable:$true] %s3525
      %3531 = dma.vmem_to_hbm [thread:$0]  %s3524, 1024, %s3526, [#allocation4], 256, 256, 16
    $region181: #{tpu_custom_call.1} parent=1 // pred_fallthru
      _
    // Predicated region
    $region182: #{tpu_custom_call.1} parent=1 // pred_check
      _
    $region183: #{tpu_custom_call.1} parent=1 // pred_check_branch
      %3533 = sbr.rel (0) target = $region185
    $region184: #{tpu_custom_call.1} parent=1 // pred_region
      %3535 = dma.done [#allocation4], 1024
    $region185: #{tpu_custom_call.1} parent=1 // pred_fallthru
      _
    %3536 = vsyncpa [#allocation3], 1
    %3537 = vsyncpa [#allocation6], 1
    %3538 = vsyncpa [#allocation9], 1
    %3539 = vsyncpa [#allocation12], 1
    %3540 = vsyncpa [#allocation15], 1
    %3541 = vsyncpa [#allocation18], 1
    %3542 = vsyncpa [#allocation21], 1
    %3543 = vsyncpa [#allocation24], 1
    %3544 = vsyncpa [#allocation27], 1
    %3545 = vsyncpa [#allocation30], 1
    %3546 = vsyncpa [#allocation33], 1
    %3547 = vsyncpa [#allocation36], 1
    %3548 = vsyncpa [#allocation4], 1

</llo_original>
